<compile_context>
chip_gen: v7x
topology: tpu7x:2x2x1
jax: 0.10.0
libtpu: 0.0.40
codegen_flags: <defaults>
</compile_context>

<pallas_src>
import jax
import jax.numpy as jnp
from jax.experimental import pallas as pl
from jax.experimental.pallas import tpu as pltpu

NEG_SLOPE = 0.01  # nn.LeakyReLU() default negative_slope


def _round_up(x, m):
    return (x + m - 1) // m * m


# ----------------------------------------------------------------------------
# Weight re-layout: PyTorch ConvTranspose2d weight (Cin, Cout, 4, 4) ->
# (16, Cout, Cin) with index t = 4*p + 2*d + e, where p = 2*ph + pw is the
# output phase and (d, e) in {0,1}^2 are the 4 taps that feed that phase.
# The matching window offset into the padded image is (ph+d)*Wp + (pw+e).
# Only the 16 nonzero (phase, tap) blocks are kept (old layout was 2.25x zeros).
# ----------------------------------------------------------------------------
def _build_phase_tap_weights(W):
    mats = []
    for ph in range(2):
        for pw in range(2):
            for d in range(2):
                for e in range(2):
                    kh = 3 - ph - 2 * d
                    kw = 3 - pw - 2 * e
                    mats.append(W[:, :, kh, kw].T)        # (Cout, Cin)
    return jnp.stack(mats, axis=0)                         # (16, Cout, Cin)


def _choose_batch_block(N, per_image_bytes, target_bytes=1 << 20):
    """Images per grid step: a divisor of N, >= 2 grid steps (v7x megacore),
    aiming for ~1 MiB of I/O per step to amortize the ~0.35us step overhead."""
    best = 1
    for nb in range(1, N + 1):
        if N % nb:
            continue
        if N >= 2 and N // nb < 2:
            continue
        if nb * per_image_bytes <= target_bytes:
            best = nb
    return best


# ----------------------------------------------------------------------------
# One decoder layer: ConvTranspose2d(k=4, s=2, p=1) + LeakyReLU, NCHW in / out
# ----------------------------------------------------------------------------
def decoder_layer_forward(x, W, b, *, out_dtype=jnp.float32):
    """x: (N, Cin, H, W); W: (Cin, Cout, 4, 4) PyTorch layout; b: (Cout,)."""
    N, Cin, H, Wd = x.shape
    Cout = W.shape[1]
    R = 4 * Cout                        # 4 phases x Cout output rows
    Wp = Wd + 2                         # width after 1 left / 1 right zero pad
    Lo = H * Wp                         # meaningful output columns per image
    Lo_pad = _round_up(Lo, 128)         # lane-dense output block
    off_max = 2 * Wp + 2                # largest shifted-window offset (D=E=2)
    Lp_raw = (H + 3) * Wp               # zero-padded image, flattened
    Lp = _round_up(max(Lp_raw, off_max + Lo_pad), 128)

    # Zero-pad spatially (1 top, 2 bottom, 1 left/right), flatten, append zeros so
    # every shifted window of length Lo_pad is a static in-bounds slice (VMEM reads
    # are not bounds-checked).  bf16 operands for the MXU.
    xp = jnp.pad(x, ((0, 0), (0, 0), (1, 2), (1, 1))).reshape(N, Cin, Lp_raw)
    xp = jnp.pad(xp, ((0, 0), (0, 0), (0, Lp - Lp_raw))).astype(jnp.bfloat16)
    # TODO(synk): fuse this pad + the phase interleave below into the kernel (keep the
    # phase-row layout across layers, reassembling once at the very end) to remove the
    # remaining per-layer HBM round-trip of the activations.

    Wt = _build_phase_tap_weights(W).astype(jnp.bfloat16)   # (16, Cout, Cin)
    bt = b.reshape(Cout, 1).astype(jnp.float32)             # (Cout, 1)

    out_itemsize = jnp.dtype(out_dtype).itemsize
    per_image = Cin * Lp * 2 + R * Lo_pad * out_itemsize
    NB = _choose_batch_block(N, per_image)

    def kernel(x_ref, w_ref, b_ref, o_ref):
        # x_ref: (NB, Cin, Lp)   bf16 padded images, spatial flattened on lanes
        # w_ref: (16, Cout, Cin) bf16 per-(phase,tap) weights
        # b_ref: (Cout, 1)       f32 bias
        # o_ref: (NB, R, Lo_pad) lane-dense output, rows r = (2ph+pw)*Cout + co
        bias = b_ref[...]
        for bi in range(NB):
            # Hoist the 9 distinct shifted windows; each is reused by up to 4 phases.
            # TODO(synk): windows at nonzero lane offsets still cost cross-lane
            # rotates; pre-shifted input views (or a rows-on-sublanes layout) would
            # leave only 3 distinct lane alignments.
            win = {}
            for D in range(3):
                for E in range(3):
                    off = D * Wp + E
                    win[(D, E)] = x_ref[bi, :, off:off + Lo_pad]   # (Cin, Lo_pad)
            for ph in range(2):
                for pw in range(2):
                    p = 2 * ph + pw
                    acc = None
                    for d in range(2):
                        for e in range(2):
                            part = jnp.dot(w_ref[4 * p + 2 * d + e],
                                           win[(ph + d, pw + e)],
                                           preferred_element_type=jnp.float32)
                            acc = part if acc is None else acc + part
                    acc = acc + bias
                    acc = jnp.where(acc > 0.0, acc, NEG_SLOPE * acc)
                    o_ref[bi, p * Cout:(p + 1) * Cout, :] = acc.astype(o_ref.dtype)

    # VMEM budget from the actual double-buffered tiles (+ weights + margin),
    # capped for the 64 MiB / TensorCore budget on v7x.
    vmem_limit = int(min(48 << 20,
                         max(8 << 20,
                             4 * NB * per_image + 16 * 8 * 128 * 2 + (2 << 20))))

    y = pl.pallas_call(
        kernel,
        out_shape=jax.ShapeDtypeStruct((N, R, Lo_pad), out_dtype),
        grid=(N // NB,),
        in_specs=[pl.BlockSpec((NB, Cin, Lp), lambda n: (n, 0, 0)),
                  pl.BlockSpec((16, Cout, Cin), lambda n: (0, 0, 0)),
                  pl.BlockSpec((Cout, 1), lambda n: (0, 0))],
        out_specs=pl.BlockSpec((NB, R, Lo_pad), lambda n: (n, 0, 0)),
        compiler_params=pltpu.CompilerParams(
            dimension_semantics=("parallel",),      # pipelining + v7x megacore
            vmem_limit_bytes=vmem_limit),
    )(xp, Wt, bt)

    # Phase reassembly (layout-only): rows r = (2ph+pw)*Cout + co, cols m*Wp + l
    # (keep l < W) -> out[n, co, 2m+ph, 2l+pw].  XLA fuses this with the next
    # layer's jnp.pad into a single HBM pass.
    y = y[:, :, :Lo].reshape(N, 2, 2, Cout, H, Wp)[..., :Wd]   # (N,ph,pw,Cout,H,W)
    y = jnp.transpose(y, (0, 3, 4, 1, 5, 2))                   # (N,Cout,H,ph,W,pw)
    return y.reshape(N, Cout, 2 * H, 2 * Wd)


# ----------------------------------------------------------------------------
# decoderBlock forward (NCHW in, NCHW out — matches the PyTorch module)
# ----------------------------------------------------------------------------
@jax.jit
def decoder_block_forward(x_nchw, params):
    x = x_nchw
    n_layers = len(params)
    for i, (W, b) in enumerate(params):
        last = (i == n_layers - 1)
        # Intermediate activations stay bf16 (re-cast for the next MXU anyway);
        # the final layer returns f32 like the PyTorch module.
        x = decoder_layer_forward(
            x, W, b, out_dtype=jnp.float32 if last else jnp.bfloat16)
    return x


# ----------------------------------------------------------------------------
# Pure-JAX reference (lax.conv_general_dilated) for correctness check
# ----------------------------------------------------------------------------
def _convtranspose_ref(x_nchw, W, b):
    w_flip = W[:, :, ::-1, ::-1]                            # spatial flip
    w_oihw = jnp.transpose(w_flip, (1, 0, 2, 3))            # (Cout, Cin, 4, 4)
    y = jax.lax.conv_general_dilated(
        x_nchw, w_oihw, window_strides=(1, 1),
        padding=[(2, 2), (2, 2)], lhs_dilation=(2, 2),
        dimension_numbers=('NCHW', 'OIHW', 'NCHW'))
    y = y + b[None, :, None, None]
    return jnp.where(y > 0, y, NEG_SLOPE * y)


def decoder_block_reference(x_nchw, params):
    x = x_nchw
    for W, b in params:
        x = _convtranspose_ref(x, W, b)
    return x


# ----------------------------------------------------------------------------
if __name__ == "__main__":
    key = jax.random.PRNGKey(0)

    # small shapes: batch=2, num_channel=8, spatial=8x8, num_layer=2
    N, num_channel, H, Wd = 2, 8, 8, 8
    num_layer = 2

    key, kx = jax.random.split(key)
    x = jax.random.normal(kx, (N, num_channel, H, Wd), dtype=jnp.float32)

    # deterministic parameter init (shapes follow nn.ConvTranspose2d(cin, cout, 4, 4))
    params = []
    cin = num_channel
    for _ in range(num_layer):
        cout = cin // 2
        key, kw, kb = jax.random.split(key, 3)
        bound = 1.0 / (cin * 4 * 4) ** 0.5
        W = jax.random.uniform(kw, (cin, cout, 4, 4), jnp.float32, -bound, bound)
        b = jax.random.uniform(kb, (cout,), jnp.float32, -bound, bound)
        params.append((W, b))
        cin = cout

    y = decoder_block_forward(x, params)
    y = jax.block_until_ready(y)

    y_ref = decoder_block_reference(x, params)
    assert y.shape == (N, num_channel // (2 ** num_layer),
                       H * 2 ** num_layer, Wd * 2 ** num_layer), y.shape
    # bf16 MXU operands / bf16 intermediate activations -> looser tolerance
    assert jnp.allclose(y, y_ref, rtol=2e-2, atol=2e-2), \
        float(jnp.max(jnp.abs(y - y_ref)))

    print("KERNEL_OK")
</pallas_src>

<mosaic_0001>
module attributes {stable_mosaic.version = 11 : i64} {
  func.func @kernel(%arg0: i32, %arg1: memref<1x8x256xbf16, #tpu.memory_space<vmem>>, %arg2: memref<16x4x8xbf16, #tpu.memory_space<vmem>>, %arg3: memref<4x1xf32, #tpu.memory_space<vmem>>, %arg4: memref<1x16x128xbf16, #tpu.memory_space<vmem>>) attributes {dimension_semantics = [#tpu.dimension_semantics<parallel>], iteration_bounds = array<i64: 2>, scalar_prefetch = 0 : i64, scratch_operands = 0 : i64, tpu.core_type = #tpu.core_type<tc>, window_params = [{transform_indices = @transform_0, window_bounds = array<i64: 1, 8, 256>}, {pipeline_mode = #tpu.pipeline_mode<synchronous>, transform_indices = @transform_1, window_bounds = array<i64: 16, 4, 8>}, {pipeline_mode = #tpu.pipeline_mode<synchronous>, transform_indices = @transform_2, window_bounds = array<i64: 4, 1>}, {transform_indices = @transform_3, window_bounds = array<i64: 1, 16, 128>}]} {
    %c0 = arith.constant 0 : index
    %c0_0 = arith.constant 0 : index
    %0 = vector.load %arg3[%c0, %c0_0] : memref<4x1xf32, #tpu.memory_space<vmem>>, vector<4x1xf32>
    %c0_1 = arith.constant 0 : index
    %c0_2 = arith.constant 0 : index
    %c0_3 = arith.constant 0 : index
    %1 = vector.load %arg1[%c0_1, %c0_2, %c0_3] : memref<1x8x256xbf16, #tpu.memory_space<vmem>>, vector<1x8x128xbf16>
    %2 = vector.shape_cast %1 : vector<1x8x128xbf16> to vector<8x128xbf16>
    %c0_4 = arith.constant 0 : index
    %c0_5 = arith.constant 0 : index
    %c1 = arith.constant 1 : index
    %3 = vector.load %arg1[%c0_4, %c0_5, %c1] : memref<1x8x256xbf16, #tpu.memory_space<vmem>>, vector<1x8x128xbf16>
    %4 = vector.shape_cast %3 : vector<1x8x128xbf16> to vector<8x128xbf16>
    %c0_6 = arith.constant 0 : index
    %c0_7 = arith.constant 0 : index
    %c2 = arith.constant 2 : index
    %5 = vector.load %arg1[%c0_6, %c0_7, %c2] : memref<1x8x256xbf16, #tpu.memory_space<vmem>>, vector<1x8x128xbf16>
    %6 = vector.shape_cast %5 : vector<1x8x128xbf16> to vector<8x128xbf16>
    %c0_8 = arith.constant 0 : index
    %c0_9 = arith.constant 0 : index
    %c10 = arith.constant 10 : index
    %7 = vector.load %arg1[%c0_8, %c0_9, %c10] : memref<1x8x256xbf16, #tpu.memory_space<vmem>>, vector<1x8x128xbf16>
    %8 = vector.shape_cast %7 : vector<1x8x128xbf16> to vector<8x128xbf16>
    %c0_10 = arith.constant 0 : index
    %c0_11 = arith.constant 0 : index
    %c11 = arith.constant 11 : index
    %9 = vector.load %arg1[%c0_10, %c0_11, %c11] : memref<1x8x256xbf16, #tpu.memory_space<vmem>>, vector<1x8x128xbf16>
    %10 = vector.shape_cast %9 : vector<1x8x128xbf16> to vector<8x128xbf16>
    %c0_12 = arith.constant 0 : index
    %c0_13 = arith.constant 0 : index
    %c12 = arith.constant 12 : index
    %11 = vector.load %arg1[%c0_12, %c0_13, %c12] : memref<1x8x256xbf16, #tpu.memory_space<vmem>>, vector<1x8x128xbf16>
    %12 = vector.shape_cast %11 : vector<1x8x128xbf16> to vector<8x128xbf16>
    %c0_14 = arith.constant 0 : index
    %c0_15 = arith.constant 0 : index
    %c20 = arith.constant 20 : index
    %13 = vector.load %arg1[%c0_14, %c0_15, %c20] : memref<1x8x256xbf16, #tpu.memory_space<vmem>>, vector<1x8x128xbf16>
    %14 = vector.shape_cast %13 : vector<1x8x128xbf16> to vector<8x128xbf16>
    %c0_16 = arith.constant 0 : index
    %c0_17 = arith.constant 0 : index
    %c21 = arith.constant 21 : index
    %15 = vector.load %arg1[%c0_16, %c0_17, %c21] : memref<1x8x256xbf16, #tpu.memory_space<vmem>>, vector<1x8x128xbf16>
    %16 = vector.shape_cast %15 : vector<1x8x128xbf16> to vector<8x128xbf16>
    %c0_18 = arith.constant 0 : index
    %c0_19 = arith.constant 0 : index
    %c22 = arith.constant 22 : index
    %17 = vector.load %arg1[%c0_18, %c0_19, %c22] : memref<1x8x256xbf16, #tpu.memory_space<vmem>>, vector<1x8x128xbf16>
    %18 = vector.shape_cast %17 : vector<1x8x128xbf16> to vector<8x128xbf16>
    %c0_20 = arith.constant 0 : index
    %c0_21 = arith.constant 0 : index
    %c0_22 = arith.constant 0 : index
    %19 = vector.load %arg2[%c0_20, %c0_21, %c0_22] : memref<16x4x8xbf16, #tpu.memory_space<vmem>>, vector<1x4x8xbf16>
    %20 = vector.shape_cast %19 : vector<1x4x8xbf16> to vector<4x8xbf16>
    %cst = arith.constant dense<0.000000e+00> : vector<4x128xf32>
    %21 = tpu.matmul %20, %2, %cst {dimension_numbers = #tpu.dot_dimension_numbers<[1], [0], [0], [1], [0, 0, 1, 1], [], []>} : vector<4x8xbf16>, vector<8x128xbf16>, vector<4x128xf32> -> vector<4x128xf32>
    %c1_23 = arith.constant 1 : index
    %c0_24 = arith.constant 0 : index
    %c0_25 = arith.constant 0 : index
    %22 = vector.load %arg2[%c1_23, %c0_24, %c0_25] : memref<16x4x8xbf16, #tpu.memory_space<vmem>>, vector<1x4x8xbf16>
    %23 = vector.shape_cast %22 : vector<1x4x8xbf16> to vector<4x8xbf16>
    %cst_26 = arith.constant dense<0.000000e+00> : vector<4x128xf32>
    %24 = tpu.matmul %23, %4, %cst_26 {dimension_numbers = #tpu.dot_dimension_numbers<[1], [0], [0], [1], [0, 0, 1, 1], [], []>} : vector<4x8xbf16>, vector<8x128xbf16>, vector<4x128xf32> -> vector<4x128xf32>
    %25 = arith.addf %21, %24 : vector<4x128xf32>
    %c2_27 = arith.constant 2 : index
    %c0_28 = arith.constant 0 : index
    %c0_29 = arith.constant 0 : index
    %26 = vector.load %arg2[%c2_27, %c0_28, %c0_29] : memref<16x4x8xbf16, #tpu.memory_space<vmem>>, vector<1x4x8xbf16>
    %27 = vector.shape_cast %26 : vector<1x4x8xbf16> to vector<4x8xbf16>
    %cst_30 = arith.constant dense<0.000000e+00> : vector<4x128xf32>
    %28 = tpu.matmul %27, %8, %cst_30 {dimension_numbers = #tpu.dot_dimension_numbers<[1], [0], [0], [1], [0, 0, 1, 1], [], []>} : vector<4x8xbf16>, vector<8x128xbf16>, vector<4x128xf32> -> vector<4x128xf32>
    %29 = arith.addf %25, %28 : vector<4x128xf32>
    %c3 = arith.constant 3 : index
    %c0_31 = arith.constant 0 : index
    %c0_32 = arith.constant 0 : index
    %30 = vector.load %arg2[%c3, %c0_31, %c0_32] : memref<16x4x8xbf16, #tpu.memory_space<vmem>>, vector<1x4x8xbf16>
    %31 = vector.shape_cast %30 : vector<1x4x8xbf16> to vector<4x8xbf16>
    %cst_33 = arith.constant dense<0.000000e+00> : vector<4x128xf32>
    %32 = tpu.matmul %31, %10, %cst_33 {dimension_numbers = #tpu.dot_dimension_numbers<[1], [0], [0], [1], [0, 0, 1, 1], [], []>} : vector<4x8xbf16>, vector<8x128xbf16>, vector<4x128xf32> -> vector<4x128xf32>
    %33 = arith.addf %29, %32 : vector<4x128xf32>
    %34 = vector.broadcast %0 : vector<4x1xf32> to vector<4x128xf32>
    %35 = arith.addf %33, %34 : vector<4x128xf32>
    %cst_34 = arith.constant 0.000000e+00 : f32
    %36 = vector.broadcast %cst_34 : f32 to vector<4x128xf32>
    %37 = arith.cmpf ogt, %35, %36 : vector<4x128xf32>
    %cst_35 = arith.constant 0.00999999977 : f32
    %38 = vector.broadcast %cst_35 : f32 to vector<4x128xf32>
    %39 = arith.mulf %38, %35 : vector<4x128xf32>
    %40 = arith.select %37, %35, %39 : vector<4x128xi1>, vector<4x128xf32>
    %41 = arith.truncf %40 : vector<4x128xf32> to vector<4x128xbf16>
    %c0_36 = arith.constant 0 : index
    %c0_37 = arith.constant 0 : index
    %c0_38 = arith.constant 0 : index
    %42 = vector.load %arg4[%c0_36, %c0_37, %c0_38] : memref<1x16x128xbf16, #tpu.memory_space<vmem>>, vector<1x4x128xbf16>
    %43 = vector.shape_cast %42 : vector<1x4x128xbf16> to vector<4x128xbf16>
    %44 = vector.shape_cast %41 : vector<4x128xbf16> to vector<1x4x128xbf16>
    tpu.vector_store %arg4[%c0_36, %c0_37, %c0_38], %44 {strides = array<i32>} : memref<1x16x128xbf16, #tpu.memory_space<vmem>>, vector<1x4x128xbf16>,
    %c4 = arith.constant 4 : index
    %c0_39 = arith.constant 0 : index
    %c0_40 = arith.constant 0 : index
    %45 = vector.load %arg2[%c4, %c0_39, %c0_40] : memref<16x4x8xbf16, #tpu.memory_space<vmem>>, vector<1x4x8xbf16>
    %46 = vector.shape_cast %45 : vector<1x4x8xbf16> to vector<4x8xbf16>
    %cst_41 = arith.constant dense<0.000000e+00> : vector<4x128xf32>
    %47 = tpu.matmul %46, %4, %cst_41 {dimension_numbers = #tpu.dot_dimension_numbers<[1], [0], [0], [1], [0, 0, 1, 1], [], []>} : vector<4x8xbf16>, vector<8x128xbf16>, vector<4x128xf32> -> vector<4x128xf32>
    %c5 = arith.constant 5 : index
    %c0_42 = arith.constant 0 : index
    %c0_43 = arith.constant 0 : index
    %48 = vector.load %arg2[%c5, %c0_42, %c0_43] : memref<16x4x8xbf16, #tpu.memory_space<vmem>>, vector<1x4x8xbf16>
    %49 = vector.shape_cast %48 : vector<1x4x8xbf16> to vector<4x8xbf16>
    %cst_44 = arith.constant dense<0.000000e+00> : vector<4x128xf32>
    %50 = tpu.matmul %49, %6, %cst_44 {dimension_numbers = #tpu.dot_dimension_numbers<[1], [0], [0], [1], [0, 0, 1, 1], [], []>} : vector<4x8xbf16>, vector<8x128xbf16>, vector<4x128xf32> -> vector<4x128xf32>
    %51 = arith.addf %47, %50 : vector<4x128xf32>
    %c6 = arith.constant 6 : index
    %c0_45 = arith.constant 0 : index
    %c0_46 = arith.constant 0 : index
    %52 = vector.load %arg2[%c6, %c0_45, %c0_46] : memref<16x4x8xbf16, #tpu.memory_space<vmem>>, vector<1x4x8xbf16>
    %53 = vector.shape_cast %52 : vector<1x4x8xbf16> to vector<4x8xbf16>
    %cst_47 = arith.constant dense<0.000000e+00> : vector<4x128xf32>
    %54 = tpu.matmul %53, %10, %cst_47 {dimension_numbers = #tpu.dot_dimension_numbers<[1], [0], [0], [1], [0, 0, 1, 1], [], []>} : vector<4x8xbf16>, vector<8x128xbf16>, vector<4x128xf32> -> vector<4x128xf32>
    %55 = arith.addf %51, %54 : vector<4x128xf32>
    %c7 = arith.constant 7 : index
    %c0_48 = arith.constant 0 : index
    %c0_49 = arith.constant 0 : index
    %56 = vector.load %arg2[%c7, %c0_48, %c0_49] : memref<16x4x8xbf16, #tpu.memory_space<vmem>>, vector<1x4x8xbf16>
    %57 = vector.shape_cast %56 : vector<1x4x8xbf16> to vector<4x8xbf16>
    %cst_50 = arith.constant dense<0.000000e+00> : vector<4x128xf32>
    %58 = tpu.matmul %57, %12, %cst_50 {dimension_numbers = #tpu.dot_dimension_numbers<[1], [0], [0], [1], [0, 0, 1, 1], [], []>} : vector<4x8xbf16>, vector<8x128xbf16>, vector<4x128xf32> -> vector<4x128xf32>
    %59 = arith.addf %55, %58 : vector<4x128xf32>
    %60 = vector.broadcast %0 : vector<4x1xf32> to vector<4x128xf32>
    %61 = arith.addf %59, %60 : vector<4x128xf32>
    %cst_51 = arith.constant 0.000000e+00 : f32
    %62 = vector.broadcast %cst_51 : f32 to vector<4x128xf32>
    %63 = arith.cmpf ogt, %61, %62 : vector<4x128xf32>
    %cst_52 = arith.constant 0.00999999977 : f32
    %64 = vector.broadcast %cst_52 : f32 to vector<4x128xf32>
    %65 = arith.mulf %64, %61 : vector<4x128xf32>
    %66 = arith.select %63, %61, %65 : vector<4x128xi1>, vector<4x128xf32>
    %67 = arith.truncf %66 : vector<4x128xf32> to vector<4x128xbf16>
    %c0_53 = arith.constant 0 : index
    %c4_54 = arith.constant 4 : index
    %c0_55 = arith.constant 0 : index
    %68 = vector.load %arg4[%c0_53, %c4_54, %c0_55] : memref<1x16x128xbf16, #tpu.memory_space<vmem>>, vector<1x4x128xbf16>
    %69 = vector.shape_cast %68 : vector<1x4x128xbf16> to vector<4x128xbf16>
    %70 = vector.shape_cast %67 : vector<4x128xbf16> to vector<1x4x128xbf16>
    tpu.vector_store %arg4[%c0_53, %c4_54, %c0_55], %70 {strides = array<i32>} : memref<1x16x128xbf16, #tpu.memory_space<vmem>>, vector<1x4x128xbf16>,
    %c8 = arith.constant 8 : index
    %c0_56 = arith.constant 0 : index
    %c0_57 = arith.constant 0 : index
    %71 = vector.load %arg2[%c8, %c0_56, %c0_57] : memref<16x4x8xbf16, #tpu.memory_space<vmem>>, vector<1x4x8xbf16>
    %72 = vector.shape_cast %71 : vector<1x4x8xbf16> to vector<4x8xbf16>
    %cst_58 = arith.constant dense<0.000000e+00> : vector<4x128xf32>
    %73 = tpu.matmul %72, %8, %cst_58 {dimension_numbers = #tpu.dot_dimension_numbers<[1], [0], [0], [1], [0, 0, 1, 1], [], []>} : vector<4x8xbf16>, vector<8x128xbf16>, vector<4x128xf32> -> vector<4x128xf32>
    %c9 = arith.constant 9 : index
    %c0_59 = arith.constant 0 : index
    %c0_60 = arith.constant 0 : index
    %74 = vector.load %arg2[%c9, %c0_59, %c0_60] : memref<16x4x8xbf16, #tpu.memory_space<vmem>>, vector<1x4x8xbf16>
    %75 = vector.shape_cast %74 : vector<1x4x8xbf16> to vector<4x8xbf16>
    %cst_61 = arith.constant dense<0.000000e+00> : vector<4x128xf32>
    %76 = tpu.matmul %75, %10, %cst_61 {dimension_numbers = #tpu.dot_dimension_numbers<[1], [0], [0], [1], [0, 0, 1, 1], [], []>} : vector<4x8xbf16>, vector<8x128xbf16>, vector<4x128xf32> -> vector<4x128xf32>
    %77 = arith.addf %73, %76 : vector<4x128xf32>
    %c10_62 = arith.constant 10 : index
    %c0_63 = arith.constant 0 : index
    %c0_64 = arith.constant 0 : index
    %78 = vector.load %arg2[%c10_62, %c0_63, %c0_64] : memref<16x4x8xbf16, #tpu.memory_space<vmem>>, vector<1x4x8xbf16>
    %79 = vector.shape_cast %78 : vector<1x4x8xbf16> to vector<4x8xbf16>
    %cst_65 = arith.constant dense<0.000000e+00> : vector<4x128xf32>
    %80 = tpu.matmul %79, %14, %cst_65 {dimension_numbers = #tpu.dot_dimension_numbers<[1], [0], [0], [1], [0, 0, 1, 1], [], []>} : vector<4x8xbf16>, vector<8x128xbf16>, vector<4x128xf32> -> vector<4x128xf32>
    %81 = arith.addf %77, %80 : vector<4x128xf32>
    %c11_66 = arith.constant 11 : index
    %c0_67 = arith.constant 0 : index
    %c0_68 = arith.constant 0 : index
    %82 = vector.load %arg2[%c11_66, %c0_67, %c0_68] : memref<16x4x8xbf16, #tpu.memory_space<vmem>>, vector<1x4x8xbf16>
    %83 = vector.shape_cast %82 : vector<1x4x8xbf16> to vector<4x8xbf16>
    %cst_69 = arith.constant dense<0.000000e+00> : vector<4x128xf32>
    %84 = tpu.matmul %83, %16, %cst_69 {dimension_numbers = #tpu.dot_dimension_numbers<[1], [0], [0], [1], [0, 0, 1, 1], [], []>} : vector<4x8xbf16>, vector<8x128xbf16>, vector<4x128xf32> -> vector<4x128xf32>
    %85 = arith.addf %81, %84 : vector<4x128xf32>
    %86 = vector.broadcast %0 : vector<4x1xf32> to vector<4x128xf32>
    %87 = arith.addf %85, %86 : vector<4x128xf32>
    %cst_70 = arith.constant 0.000000e+00 : f32
    %88 = vector.broadcast %cst_70 : f32 to vector<4x128xf32>
    %89 = arith.cmpf ogt, %87, %88 : vector<4x128xf32>
    %cst_71 = arith.constant 0.00999999977 : f32
    %90 = vector.broadcast %cst_71 : f32 to vector<4x128xf32>
    %91 = arith.mulf %90, %87 : vector<4x128xf32>
    %92 = arith.select %89, %87, %91 : vector<4x128xi1>, vector<4x128xf32>
    %93 = arith.truncf %92 : vector<4x128xf32> to vector<4x128xbf16>
    %c0_72 = arith.constant 0 : index
    %c8_73 = arith.constant 8 : index
    %c0_74 = arith.constant 0 : index
    %94 = vector.load %arg4[%c0_72, %c8_73, %c0_74] : memref<1x16x128xbf16, #tpu.memory_space<vmem>>, vector<1x4x128xbf16>
    %95 = vector.shape_cast %94 : vector<1x4x128xbf16> to vector<4x128xbf16>
    %96 = vector.shape_cast %93 : vector<4x128xbf16> to vector<1x4x128xbf16>
    tpu.vector_store %arg4[%c0_72, %c8_73, %c0_74], %96 {strides = array<i32>} : memref<1x16x128xbf16, #tpu.memory_space<vmem>>, vector<1x4x128xbf16>,
    %c12_75 = arith.constant 12 : index
    %c0_76 = arith.constant 0 : index
    %c0_77 = arith.constant 0 : index
    %97 = vector.load %arg2[%c12_75, %c0_76, %c0_77] : memref<16x4x8xbf16, #tpu.memory_space<vmem>>, vector<1x4x8xbf16>
    %98 = vector.shape_cast %97 : vector<1x4x8xbf16> to vector<4x8xbf16>
    %cst_78 = arith.constant dense<0.000000e+00> : vector<4x128xf32>
    %99 = tpu.matmul %98, %10, %cst_78 {dimension_numbers = #tpu.dot_dimension_numbers<[1], [0], [0], [1], [0, 0, 1, 1], [], []>} : vector<4x8xbf16>, vector<8x128xbf16>, vector<4x128xf32> -> vector<4x128xf32>
    %c13 = arith.constant 13 : index
    %c0_79 = arith.constant 0 : index
    %c0_80 = arith.constant 0 : index
    %100 = vector.load %arg2[%c13, %c0_79, %c0_80] : memref<16x4x8xbf16, #tpu.memory_space<vmem>>, vector<1x4x8xbf16>
    %101 = vector.shape_cast %100 : vector<1x4x8xbf16> to vector<4x8xbf16>
    %cst_81 = arith.constant dense<0.000000e+00> : vector<4x128xf32>
    %102 = tpu.matmul %101, %12, %cst_81 {dimension_numbers = #tpu.dot_dimension_numbers<[1], [0], [0], [1], [0, 0, 1, 1], [], []>} : vector<4x8xbf16>, vector<8x128xbf16>, vector<4x128xf32> -> vector<4x128xf32>
    %103 = arith.addf %99, %102 : vector<4x128xf32>
    %c14 = arith.constant 14 : index
    %c0_82 = arith.constant 0 : index
    %c0_83 = arith.constant 0 : index
    %104 = vector.load %arg2[%c14, %c0_82, %c0_83] : memref<16x4x8xbf16, #tpu.memory_space<vmem>>, vector<1x4x8xbf16>
    %105 = vector.shape_cast %104 : vector<1x4x8xbf16> to vector<4x8xbf16>
    %cst_84 = arith.constant dense<0.000000e+00> : vector<4x128xf32>
    %106 = tpu.matmul %105, %16, %cst_84 {dimension_numbers = #tpu.dot_dimension_numbers<[1], [0], [0], [1], [0, 0, 1, 1], [], []>} : vector<4x8xbf16>, vector<8x128xbf16>, vector<4x128xf32> -> vector<4x128xf32>
    %107 = arith.addf %103, %106 : vector<4x128xf32>
    %c15 = arith.constant 15 : index
    %c0_85 = arith.constant 0 : index
    %c0_86 = arith.constant 0 : index
    %108 = vector.load %arg2[%c15, %c0_85, %c0_86] : memref<16x4x8xbf16, #tpu.memory_space<vmem>>, vector<1x4x8xbf16>
    %109 = vector.shape_cast %108 : vector<1x4x8xbf16> to vector<4x8xbf16>
    %cst_87 = arith.constant dense<0.000000e+00> : vector<4x128xf32>
    %110 = tpu.matmul %109, %18, %cst_87 {dimension_numbers = #tpu.dot_dimension_numbers<[1], [0], [0], [1], [0, 0, 1, 1], [], []>} : vector<4x8xbf16>, vector<8x128xbf16>, vector<4x128xf32> -> vector<4x128xf32>
    %111 = arith.addf %107, %110 : vector<4x128xf32>
    %112 = vector.broadcast %0 : vector<4x1xf32> to vector<4x128xf32>
    %113 = arith.addf %111, %112 : vector<4x128xf32>
    %cst_88 = arith.constant 0.000000e+00 : f32
    %114 = vector.broadcast %cst_88 : f32 to vector<4x128xf32>
    %115 = arith.cmpf ogt, %113, %114 : vector<4x128xf32>
    %cst_89 = arith.constant 0.00999999977 : f32
    %116 = vector.broadcast %cst_89 : f32 to vector<4x128xf32>
    %117 = arith.mulf %116, %113 : vector<4x128xf32>
    %118 = arith.select %115, %113, %117 : vector<4x128xi1>, vector<4x128xf32>
    %119 = arith.truncf %118 : vector<4x128xf32> to vector<4x128xbf16>
    %c0_90 = arith.constant 0 : index
    %c12_91 = arith.constant 12 : index
    %c0_92 = arith.constant 0 : index
    %120 = vector.load %arg4[%c0_90, %c12_91, %c0_92] : memref<1x16x128xbf16, #tpu.memory_space<vmem>>, vector<1x4x128xbf16>
    %121 = vector.shape_cast %120 : vector<1x4x128xbf16> to vector<4x128xbf16>
    %122 = vector.shape_cast %119 : vector<4x128xbf16> to vector<1x4x128xbf16>
    tpu.vector_store %arg4[%c0_90, %c12_91, %c0_92], %122 {strides = array<i32>} : memref<1x16x128xbf16, #tpu.memory_space<vmem>>, vector<1x4x128xbf16>,
    return
  }
  func.func @transform_0(%arg0: i32) -> (i32, i32, i32) {
    %c0_i32 = arith.constant 0 : i32
    %c0_i32_0 = arith.constant 0 : i32
    %c0_i32_1 = arith.constant 0 : i32
    return %arg0, %c0_i32, %c0_i32_0 : i32, i32, i32
  }
  func.func @transform_1(%arg0: i32) -> (i32, i32, i32) {
    %c0_i32 = arith.constant 0 : i32
    %c0_i32_0 = arith.constant 0 : i32
    %c0_i32_1 = arith.constant 0 : i32
    %c0_i32_2 = arith.constant 0 : i32
    return %c0_i32, %c0_i32_0, %c0_i32_1 : i32, i32, i32
  }
  func.func @transform_2(%arg0: i32) -> (i32, i32) {
    %c0_i32 = arith.constant 0 : i32
    %c0_i32_0 = arith.constant 0 : i32
    %c0_i32_1 = arith.constant 0 : i32
    return %c0_i32, %c0_i32_0 : i32, i32
  }
  func.func @transform_3(%arg0: i32) -> (i32, i32, i32) {
    %c0_i32 = arith.constant 0 : i32
    %c0_i32_0 = arith.constant 0 : i32
    %c0_i32_1 = arith.constant 0 : i32
    return %arg0, %c0_i32, %c0_i32_0 : i32, i32, i32
  }
}

module attributes {stable_mosaic.version = 11 : i64} {
  func.func @kernel(%arg0: i32, %arg1: memref<1x4x512xbf16, #tpu.memory_space<vmem>>, %arg2: memref<16x2x4xbf16, #tpu.memory_space<vmem>>, %arg3: memref<2x1xf32, #tpu.memory_space<vmem>>, %arg4: memref<1x8x384xf32, #tpu.memory_space<vmem>>) attributes {dimension_semantics = [#tpu.dimension_semantics<parallel>], iteration_bounds = array<i64: 2>, scalar_prefetch = 0 : i64, scratch_operands = 0 : i64, tpu.core_type = #tpu.core_type<tc>, window_params = [{transform_indices = @transform_0, window_bounds = array<i64: 1, 4, 512>}, {pipeline_mode = #tpu.pipeline_mode<synchronous>, transform_indices = @transform_1, window_bounds = array<i64: 16, 2, 4>}, {pipeline_mode = #tpu.pipeline_mode<synchronous>, transform_indices = @transform_2, window_bounds = array<i64: 2, 1>}, {transform_indices = @transform_3, window_bounds = array<i64: 1, 8, 384>}]} {
    %c0 = arith.constant 0 : index
    %c0_0 = arith.constant 0 : index
    %0 = vector.load %arg3[%c0, %c0_0] : memref<2x1xf32, #tpu.memory_space<vmem>>, vector<2x1xf32>
    %c0_1 = arith.constant 0 : index
    %c0_2 = arith.constant 0 : index
    %c0_3 = arith.constant 0 : index
    %1 = vector.load %arg1[%c0_1, %c0_2, %c0_3] : memref<1x4x512xbf16, #tpu.memory_space<vmem>>, vector<1x4x384xbf16>
    %2 = vector.shape_cast %1 : vector<1x4x384xbf16> to vector<4x384xbf16>
    %c0_4 = arith.constant 0 : index
    %c0_5 = arith.constant 0 : index
    %c1 = arith.constant 1 : index
    %3 = vector.load %arg1[%c0_4, %c0_5, %c1] : memref<1x4x512xbf16, #tpu.memory_space<vmem>>, vector<1x4x384xbf16>
    %4 = vector.shape_cast %3 : vector<1x4x384xbf16> to vector<4x384xbf16>
    %c0_6 = arith.constant 0 : index
    %c0_7 = arith.constant 0 : index
    %c2 = arith.constant 2 : index
    %5 = vector.load %arg1[%c0_6, %c0_7, %c2] : memref<1x4x512xbf16, #tpu.memory_space<vmem>>, vector<1x4x384xbf16>
    %6 = vector.shape_cast %5 : vector<1x4x384xbf16> to vector<4x384xbf16>
    %c0_8 = arith.constant 0 : index
    %c0_9 = arith.constant 0 : index
    %c18 = arith.constant 18 : index
    %7 = vector.load %arg1[%c0_8, %c0_9, %c18] : memref<1x4x512xbf16, #tpu.memory_space<vmem>>, vector<1x4x384xbf16>
    %8 = vector.shape_cast %7 : vector<1x4x384xbf16> to vector<4x384xbf16>
    %c0_10 = arith.constant 0 : index
    %c0_11 = arith.constant 0 : index
    %c19 = arith.constant 19 : index
    %9 = vector.load %arg1[%c0_10, %c0_11, %c19] : memref<1x4x512xbf16, #tpu.memory_space<vmem>>, vector<1x4x384xbf16>
    %10 = vector.shape_cast %9 : vector<1x4x384xbf16> to vector<4x384xbf16>
    %c0_12 = arith.constant 0 : index
    %c0_13 = arith.constant 0 : index
    %c20 = arith.constant 20 : index
    %11 = vector.load %arg1[%c0_12, %c0_13, %c20] : memref<1x4x512xbf16, #tpu.memory_space<vmem>>, vector<1x4x384xbf16>
    %12 = vector.shape_cast %11 : vector<1x4x384xbf16> to vector<4x384xbf16>
    %c0_14 = arith.constant 0 : index
    %c0_15 = arith.constant 0 : index
    %c36 = arith.constant 36 : index
    %13 = vector.load %arg1[%c0_14, %c0_15, %c36] : memref<1x4x512xbf16, #tpu.memory_space<vmem>>, vector<1x4x384xbf16>
    %14 = vector.shape_cast %13 : vector<1x4x384xbf16> to vector<4x384xbf16>
    %c0_16 = arith.constant 0 : index
    %c0_17 = arith.constant 0 : index
    %c37 = arith.constant 37 : index
    %15 = vector.load %arg1[%c0_16, %c0_17, %c37] : memref<1x4x512xbf16, #tpu.memory_space<vmem>>, vector<1x4x384xbf16>
    %16 = vector.shape_cast %15 : vector<1x4x384xbf16> to vector<4x384xbf16>
    %c0_18 = arith.constant 0 : index
    %c0_19 = arith.constant 0 : index
    %c38 = arith.constant 38 : index
    %17 = vector.load %arg1[%c0_18, %c0_19, %c38] : memref<1x4x512xbf16, #tpu.memory_space<vmem>>, vector<1x4x384xbf16>
    %18 = vector.shape_cast %17 : vector<1x4x384xbf16> to vector<4x384xbf16>
    %c0_20 = arith.constant 0 : index
    %c0_21 = arith.constant 0 : index
    %c0_22 = arith.constant 0 : index
    %19 = vector.load %arg2[%c0_20, %c0_21, %c0_22] : memref<16x2x4xbf16, #tpu.memory_space<vmem>>, vector<1x2x4xbf16>
    %20 = vector.shape_cast %19 : vector<1x2x4xbf16> to vector<2x4xbf16>
    %cst = arith.constant dense<0.000000e+00> : vector<2x384xf32>
    %21 = tpu.matmul %20, %2, %cst {dimension_numbers = #tpu.dot_dimension_numbers<[1], [0], [0], [1], [0, 0, 1, 1], [], []>} : vector<2x4xbf16>, vector<4x384xbf16>, vector<2x384xf32> -> vector<2x384xf32>
    %c1_23 = arith.constant 1 : index
    %c0_24 = arith.constant 0 : index
    %c0_25 = arith.constant 0 : index
    %22 = vector.load %arg2[%c1_23, %c0_24, %c0_25] : memref<16x2x4xbf16, #tpu.memory_space<vmem>>, vector<1x2x4xbf16>
    %23 = vector.shape_cast %22 : vector<1x2x4xbf16> to vector<2x4xbf16>
    %cst_26 = arith.constant dense<0.000000e+00> : vector<2x384xf32>
    %24 = tpu.matmul %23, %4, %cst_26 {dimension_numbers = #tpu.dot_dimension_numbers<[1], [0], [0], [1], [0, 0, 1, 1], [], []>} : vector<2x4xbf16>, vector<4x384xbf16>, vector<2x384xf32> -> vector<2x384xf32>
    %25 = arith.addf %21, %24 : vector<2x384xf32>
    %c2_27 = arith.constant 2 : index
    %c0_28 = arith.constant 0 : index
    %c0_29 = arith.constant 0 : index
    %26 = vector.load %arg2[%c2_27, %c0_28, %c0_29] : memref<16x2x4xbf16, #tpu.memory_space<vmem>>, vector<1x2x4xbf16>
    %27 = vector.shape_cast %26 : vector<1x2x4xbf16> to vector<2x4xbf16>
    %cst_30 = arith.constant dense<0.000000e+00> : vector<2x384xf32>
    %28 = tpu.matmul %27, %8, %cst_30 {dimension_numbers = #tpu.dot_dimension_numbers<[1], [0], [0], [1], [0, 0, 1, 1], [], []>} : vector<2x4xbf16>, vector<4x384xbf16>, vector<2x384xf32> -> vector<2x384xf32>
    %29 = arith.addf %25, %28 : vector<2x384xf32>
    %c3 = arith.constant 3 : index
    %c0_31 = arith.constant 0 : index
    %c0_32 = arith.constant 0 : index
    %30 = vector.load %arg2[%c3, %c0_31, %c0_32] : memref<16x2x4xbf16, #tpu.memory_space<vmem>>, vector<1x2x4xbf16>
    %31 = vector.shape_cast %30 : vector<1x2x4xbf16> to vector<2x4xbf16>
    %cst_33 = arith.constant dense<0.000000e+00> : vector<2x384xf32>
    %32 = tpu.matmul %31, %10, %cst_33 {dimension_numbers = #tpu.dot_dimension_numbers<[1], [0], [0], [1], [0, 0, 1, 1], [], []>} : vector<2x4xbf16>, vector<4x384xbf16>, vector<2x384xf32> -> vector<2x384xf32>
    %33 = arith.addf %29, %32 : vector<2x384xf32>
    %34 = vector.broadcast %0 : vector<2x1xf32> to vector<2x384xf32>
    %35 = arith.addf %33, %34 : vector<2x384xf32>
    %cst_34 = arith.constant 0.000000e+00 : f32
    %36 = vector.broadcast %cst_34 : f32 to vector<2x384xf32>
    %37 = arith.cmpf ogt, %35, %36 : vector<2x384xf32>
    %cst_35 = arith.constant 0.00999999977 : f32
    %38 = vector.broadcast %cst_35 : f32 to vector<2x384xf32>
    %39 = arith.mulf %38, %35 : vector<2x384xf32>
    %40 = arith.select %37, %35, %39 : vector<2x384xi1>, vector<2x384xf32>
    %c0_36 = arith.constant 0 : index
    %c0_37 = arith.constant 0 : index
    %c0_38 = arith.constant 0 : index
    %41 = vector.load %arg4[%c0_36, %c0_37, %c0_38] : memref<1x8x384xf32, #tpu.memory_space<vmem>>, vector<1x2x384xf32>
    %42 = vector.shape_cast %41 : vector<1x2x384xf32> to vector<2x384xf32>
    %43 = vector.shape_cast %40 : vector<2x384xf32> to vector<1x2x384xf32>
    tpu.vector_store %arg4[%c0_36, %c0_37, %c0_38], %43 {strides = array<i32>} : memref<1x8x384xf32, #tpu.memory_space<vmem>>, vector<1x2x384xf32>,
    %c4 = arith.constant 4 : index
    %c0_39 = arith.constant 0 : index
    %c0_40 = arith.constant 0 : index
    %44 = vector.load %arg2[%c4, %c0_39, %c0_40] : memref<16x2x4xbf16, #tpu.memory_space<vmem>>, vector<1x2x4xbf16>
    %45 = vector.shape_cast %44 : vector<1x2x4xbf16> to vector<2x4xbf16>
    %cst_41 = arith.constant dense<0.000000e+00> : vector<2x384xf32>
    %46 = tpu.matmul %45, %4, %cst_41 {dimension_numbers = #tpu.dot_dimension_numbers<[1], [0], [0], [1], [0, 0, 1, 1], [], []>} : vector<2x4xbf16>, vector<4x384xbf16>, vector<2x384xf32> -> vector<2x384xf32>
    %c5 = arith.constant 5 : index
    %c0_42 = arith.constant 0 : index
    %c0_43 = arith.constant 0 : index
    %47 = vector.load %arg2[%c5, %c0_42, %c0_43] : memref<16x2x4xbf16, #tpu.memory_space<vmem>>, vector<1x2x4xbf16>
    %48 = vector.shape_cast %47 : vector<1x2x4xbf16> to vector<2x4xbf16>
    %cst_44 = arith.constant dense<0.000000e+00> : vector<2x384xf32>
    %49 = tpu.matmul %48, %6, %cst_44 {dimension_numbers = #tpu.dot_dimension_numbers<[1], [0], [0], [1], [0, 0, 1, 1], [], []>} : vector<2x4xbf16>, vector<4x384xbf16>, vector<2x384xf32> -> vector<2x384xf32>
    %50 = arith.addf %46, %49 : vector<2x384xf32>
    %c6 = arith.constant 6 : index
    %c0_45 = arith.constant 0 : index
    %c0_46 = arith.constant 0 : index
    %51 = vector.load %arg2[%c6, %c0_45, %c0_46] : memref<16x2x4xbf16, #tpu.memory_space<vmem>>, vector<1x2x4xbf16>
    %52 = vector.shape_cast %51 : vector<1x2x4xbf16> to vector<2x4xbf16>
    %cst_47 = arith.constant dense<0.000000e+00> : vector<2x384xf32>
    %53 = tpu.matmul %52, %10, %cst_47 {dimension_numbers = #tpu.dot_dimension_numbers<[1], [0], [0], [1], [0, 0, 1, 1], [], []>} : vector<2x4xbf16>, vector<4x384xbf16>, vector<2x384xf32> -> vector<2x384xf32>
    %54 = arith.addf %50, %53 : vector<2x384xf32>
    %c7 = arith.constant 7 : index
    %c0_48 = arith.constant 0 : index
    %c0_49 = arith.constant 0 : index
    %55 = vector.load %arg2[%c7, %c0_48, %c0_49] : memref<16x2x4xbf16, #tpu.memory_space<vmem>>, vector<1x2x4xbf16>
    %56 = vector.shape_cast %55 : vector<1x2x4xbf16> to vector<2x4xbf16>
    %cst_50 = arith.constant dense<0.000000e+00> : vector<2x384xf32>
    %57 = tpu.matmul %56, %12, %cst_50 {dimension_numbers = #tpu.dot_dimension_numbers<[1], [0], [0], [1], [0, 0, 1, 1], [], []>} : vector<2x4xbf16>, vector<4x384xbf16>, vector<2x384xf32> -> vector<2x384xf32>
    %58 = arith.addf %54, %57 : vector<2x384xf32>
    %59 = vector.broadcast %0 : vector<2x1xf32> to vector<2x384xf32>
    %60 = arith.addf %58, %59 : vector<2x384xf32>
    %cst_51 = arith.constant 0.000000e+00 : f32
    %61 = vector.broadcast %cst_51 : f32 to vector<2x384xf32>
    %62 = arith.cmpf ogt, %60, %61 : vector<2x384xf32>
    %cst_52 = arith.constant 0.00999999977 : f32
    %63 = vector.broadcast %cst_52 : f32 to vector<2x384xf32>
    %64 = arith.mulf %63, %60 : vector<2x384xf32>
    %65 = arith.select %62, %60, %64 : vector<2x384xi1>, vector<2x384xf32>
    %c0_53 = arith.constant 0 : index
    %c2_54 = arith.constant 2 : index
    %c0_55 = arith.constant 0 : index
    %66 = vector.load %arg4[%c0_53, %c2_54, %c0_55] : memref<1x8x384xf32, #tpu.memory_space<vmem>>, vector<1x2x384xf32>
    %67 = vector.shape_cast %66 : vector<1x2x384xf32> to vector<2x384xf32>
    %68 = vector.shape_cast %65 : vector<2x384xf32> to vector<1x2x384xf32>
    tpu.vector_store %arg4[%c0_53, %c2_54, %c0_55], %68 {strides = array<i32>} : memref<1x8x384xf32, #tpu.memory_space<vmem>>, vector<1x2x384xf32>,
    %c8 = arith.constant 8 : index
    %c0_56 = arith.constant 0 : index
    %c0_57 = arith.constant 0 : index
    %69 = vector.load %arg2[%c8, %c0_56, %c0_57] : memref<16x2x4xbf16, #tpu.memory_space<vmem>>, vector<1x2x4xbf16>
    %70 = vector.shape_cast %69 : vector<1x2x4xbf16> to vector<2x4xbf16>
    %cst_58 = arith.constant dense<0.000000e+00> : vector<2x384xf32>
    %71 = tpu.matmul %70, %8, %cst_58 {dimension_numbers = #tpu.dot_dimension_numbers<[1], [0], [0], [1], [0, 0, 1, 1], [], []>} : vector<2x4xbf16>, vector<4x384xbf16>, vector<2x384xf32> -> vector<2x384xf32>
    %c9 = arith.constant 9 : index
    %c0_59 = arith.constant 0 : index
    %c0_60 = arith.constant 0 : index
    %72 = vector.load %arg2[%c9, %c0_59, %c0_60] : memref<16x2x4xbf16, #tpu.memory_space<vmem>>, vector<1x2x4xbf16>
    %73 = vector.shape_cast %72 : vector<1x2x4xbf16> to vector<2x4xbf16>
    %cst_61 = arith.constant dense<0.000000e+00> : vector<2x384xf32>
    %74 = tpu.matmul %73, %10, %cst_61 {dimension_numbers = #tpu.dot_dimension_numbers<[1], [0], [0], [1], [0, 0, 1, 1], [], []>} : vector<2x4xbf16>, vector<4x384xbf16>, vector<2x384xf32> -> vector<2x384xf32>
    %75 = arith.addf %71, %74 : vector<2x384xf32>
    %c10 = arith.constant 10 : index
    %c0_62 = arith.constant 0 : index
    %c0_63 = arith.constant 0 : index
    %76 = vector.load %arg2[%c10, %c0_62, %c0_63] : memref<16x2x4xbf16, #tpu.memory_space<vmem>>, vector<1x2x4xbf16>
    %77 = vector.shape_cast %76 : vector<1x2x4xbf16> to vector<2x4xbf16>
    %cst_64 = arith.constant dense<0.000000e+00> : vector<2x384xf32>
    %78 = tpu.matmul %77, %14, %cst_64 {dimension_numbers = #tpu.dot_dimension_numbers<[1], [0], [0], [1], [0, 0, 1, 1], [], []>} : vector<2x4xbf16>, vector<4x384xbf16>, vector<2x384xf32> -> vector<2x384xf32>
    %79 = arith.addf %75, %78 : vector<2x384xf32>
    %c11 = arith.constant 11 : index
    %c0_65 = arith.constant 0 : index
    %c0_66 = arith.constant 0 : index
    %80 = vector.load %arg2[%c11, %c0_65, %c0_66] : memref<16x2x4xbf16, #tpu.memory_space<vmem>>, vector<1x2x4xbf16>
    %81 = vector.shape_cast %80 : vector<1x2x4xbf16> to vector<2x4xbf16>
    %cst_67 = arith.constant dense<0.000000e+00> : vector<2x384xf32>
    %82 = tpu.matmul %81, %16, %cst_67 {dimension_numbers = #tpu.dot_dimension_numbers<[1], [0], [0], [1], [0, 0, 1, 1], [], []>} : vector<2x4xbf16>, vector<4x384xbf16>, vector<2x384xf32> -> vector<2x384xf32>
    %83 = arith.addf %79, %82 : vector<2x384xf32>
    %84 = vector.broadcast %0 : vector<2x1xf32> to vector<2x384xf32>
    %85 = arith.addf %83, %84 : vector<2x384xf32>
    %cst_68 = arith.constant 0.000000e+00 : f32
    %86 = vector.broadcast %cst_68 : f32 to vector<2x384xf32>
    %87 = arith.cmpf ogt, %85, %86 : vector<2x384xf32>
    %cst_69 = arith.constant 0.00999999977 : f32
    %88 = vector.broadcast %cst_69 : f32 to vector<2x384xf32>
    %89 = arith.mulf %88, %85 : vector<2x384xf32>
    %90 = arith.select %87, %85, %89 : vector<2x384xi1>, vector<2x384xf32>
    %c0_70 = arith.constant 0 : index
    %c4_71 = arith.constant 4 : index
    %c0_72 = arith.constant 0 : index
    %91 = vector.load %arg4[%c0_70, %c4_71, %c0_72] : memref<1x8x384xf32, #tpu.memory_space<vmem>>, vector<1x2x384xf32>
    %92 = vector.shape_cast %91 : vector<1x2x384xf32> to vector<2x384xf32>
    %93 = vector.shape_cast %90 : vector<2x384xf32> to vector<1x2x384xf32>
    tpu.vector_store %arg4[%c0_70, %c4_71, %c0_72], %93 {strides = array<i32>} : memref<1x8x384xf32, #tpu.memory_space<vmem>>, vector<1x2x384xf32>,
    %c12 = arith.constant 12 : index
    %c0_73 = arith.constant 0 : index
    %c0_74 = arith.constant 0 : index
    %94 = vector.load %arg2[%c12, %c0_73, %c0_74] : memref<16x2x4xbf16, #tpu.memory_space<vmem>>, vector<1x2x4xbf16>
    %95 = vector.shape_cast %94 : vector<1x2x4xbf16> to vector<2x4xbf16>
    %cst_75 = arith.constant dense<0.000000e+00> : vector<2x384xf32>
    %96 = tpu.matmul %95, %10, %cst_75 {dimension_numbers = #tpu.dot_dimension_numbers<[1], [0], [0], [1], [0, 0, 1, 1], [], []>} : vector<2x4xbf16>, vector<4x384xbf16>, vector<2x384xf32> -> vector<2x384xf32>
    %c13 = arith.constant 13 : index
    %c0_76 = arith.constant 0 : index
    %c0_77 = arith.constant 0 : index
    %97 = vector.load %arg2[%c13, %c0_76, %c0_77] : memref<16x2x4xbf16, #tpu.memory_space<vmem>>, vector<1x2x4xbf16>
    %98 = vector.shape_cast %97 : vector<1x2x4xbf16> to vector<2x4xbf16>
    %cst_78 = arith.constant dense<0.000000e+00> : vector<2x384xf32>
    %99 = tpu.matmul %98, %12, %cst_78 {dimension_numbers = #tpu.dot_dimension_numbers<[1], [0], [0], [1], [0, 0, 1, 1], [], []>} : vector<2x4xbf16>, vector<4x384xbf16>, vector<2x384xf32> -> vector<2x384xf32>
    %100 = arith.addf %96, %99 : vector<2x384xf32>
    %c14 = arith.constant 14 : index
    %c0_79 = arith.constant 0 : index
    %c0_80 = arith.constant 0 : index
    %101 = vector.load %arg2[%c14, %c0_79, %c0_80] : memref<16x2x4xbf16, #tpu.memory_space<vmem>>, vector<1x2x4xbf16>
    %102 = vector.shape_cast %101 : vector<1x2x4xbf16> to vector<2x4xbf16>
    %cst_81 = arith.constant dense<0.000000e+00> : vector<2x384xf32>
    %103 = tpu.matmul %102, %16, %cst_81 {dimension_numbers = #tpu.dot_dimension_numbers<[1], [0], [0], [1], [0, 0, 1, 1], [], []>} : vector<2x4xbf16>, vector<4x384xbf16>, vector<2x384xf32> -> vector<2x384xf32>
    %104 = arith.addf %100, %103 : vector<2x384xf32>
    %c15 = arith.constant 15 : index
    %c0_82 = arith.constant 0 : index
    %c0_83 = arith.constant 0 : index
    %105 = vector.load %arg2[%c15, %c0_82, %c0_83] : memref<16x2x4xbf16, #tpu.memory_space<vmem>>, vector<1x2x4xbf16>
    %106 = vector.shape_cast %105 : vector<1x2x4xbf16> to vector<2x4xbf16>
    %cst_84 = arith.constant dense<0.000000e+00> : vector<2x384xf32>
    %107 = tpu.matmul %106, %18, %cst_84 {dimension_numbers = #tpu.dot_dimension_numbers<[1], [0], [0], [1], [0, 0, 1, 1], [], []>} : vector<2x4xbf16>, vector<4x384xbf16>, vector<2x384xf32> -> vector<2x384xf32>
    %108 = arith.addf %104, %107 : vector<2x384xf32>
    %109 = vector.broadcast %0 : vector<2x1xf32> to vector<2x384xf32>
    %110 = arith.addf %108, %109 : vector<2x384xf32>
    %cst_85 = arith.constant 0.000000e+00 : f32
    %111 = vector.broadcast %cst_85 : f32 to vector<2x384xf32>
    %112 = arith.cmpf ogt, %110, %111 : vector<2x384xf32>
    %cst_86 = arith.constant 0.00999999977 : f32
    %113 = vector.broadcast %cst_86 : f32 to vector<2x384xf32>
    %114 = arith.mulf %113, %110 : vector<2x384xf32>
    %115 = arith.select %112, %110, %114 : vector<2x384xi1>, vector<2x384xf32>
    %c0_87 = arith.constant 0 : index
    %c6_88 = arith.constant 6 : index
    %c0_89 = arith.constant 0 : index
    %116 = vector.load %arg4[%c0_87, %c6_88, %c0_89] : memref<1x8x384xf32, #tpu.memory_space<vmem>>, vector<1x2x384xf32>
    %117 = vector.shape_cast %116 : vector<1x2x384xf32> to vector<2x384xf32>
    %118 = vector.shape_cast %115 : vector<2x384xf32> to vector<1x2x384xf32>
    tpu.vector_store %arg4[%c0_87, %c6_88, %c0_89], %118 {strides = array<i32>} : memref<1x8x384xf32, #tpu.memory_space<vmem>>, vector<1x2x384xf32>,
    return
  }
  func.func @transform_0(%arg0: i32) -> (i32, i32, i32) {
    %c0_i32 = arith.constant 0 : i32
    %c0_i32_0 = arith.constant 0 : i32
    %c0_i32_1 = arith.constant 0 : i32
    return %arg0, %c0_i32, %c0_i32_0 : i32, i32, i32
  }
  func.func @transform_1(%arg0: i32) -> (i32, i32, i32) {
    %c0_i32 = arith.constant 0 : i32
    %c0_i32_0 = arith.constant 0 : i32
    %c0_i32_1 = arith.constant 0 : i32
    %c0_i32_2 = arith.constant 0 : i32
    return %c0_i32, %c0_i32_0, %c0_i32_1 : i32, i32, i32
  }
  func.func @transform_2(%arg0: i32) -> (i32, i32) {
    %c0_i32 = arith.constant 0 : i32
    %c0_i32_0 = arith.constant 0 : i32
    %c0_i32_1 = arith.constant 0 : i32
    return %c0_i32, %c0_i32_0 : i32, i32
  }
  func.func @transform_3(%arg0: i32) -> (i32, i32, i32) {
    %c0_i32 = arith.constant 0 : i32
    %c0_i32_0 = arith.constant 0 : i32
    %c0_i32_1 = arith.constant 0 : i32
    return %arg0, %c0_i32, %c0_i32_0 : i32, i32, i32
  }
}

</mosaic_0001>

<llo_original>
// kernel: decoder_block_forward.2
$region0: #{decoder_block_forward.2}
  #allocation0 [shape = 'u32[]', space=smem, size = 0x4, offset = 0x4, fixed_abs, tag = 'smem constant byte address 0x4 - core index']
  #allocation1 [shape = 'u32[144,128]{1,0:T(1,128)}', space=vmem, size = 0x12000, scoped, tag = 'internal scratch']
  %s0 = inlined_call_operand.vmem [shape: bf16[2,8,256], index: 0, kind: input, shape index: {}]
  %s1 = inlined_call_operand.vmem [shape: bf16[16,4,8], index: 1, kind: input, shape index: {}]
  %s2 = inlined_call_operand.vmem [shape: f32[4,1], index: 2, kind: input, shape index: {}]
  %s3 = inlined_call_operand.vmem [shape: bf16[2,16,128], index: 3, kind: output, shape index: {}]
  %s4 = sld [smem:[#allocation0]]
  $region45: #{decoder_block_forward.2} parent=0
    _
  %s6 = ssub.s32 1, %s4
  %s7 = scalar_select 0, %s6, %s4
  loop: start=0, step=1, limit=4
  $region2: #{decoder_block_forward.2} parent=0 // loop_pre_header
    _
  $region3: #{decoder_block_forward.2} parent=0 // loop_header
    %s9 = sphi 0, %s13
    %p10 = scmp.ge.s32.totalorder %s9, 4
    %s19 = sphi 0, %s21
    %s22 = sphi 0, %s19
    %s23 = sphi 0, %s22
    %s39 = sphi 0, %s23
    %s43 = sphi 0, %s43
    %s45 = sphi 0, %s43
    %s46 = sphi 0, %s45
    %s60 = sphi 0, %s46
    %s64 = sphi 0, %s64
    %s66 = sphi 0, %s64
    %s67 = sphi 0, %s66
    %s81 = sphi 0, %s67
    %s87 = sphi 0, %s89
    %s90 = sphi 0, %s87
    %s91 = sphi 0, %s90
    %s107 = sphi 0, %s91
  $region4: #{decoder_block_forward.2} parent=0 // loop_header_branch
    %12 = sbr.rel (%p10) target = $region8
  $region5: #{decoder_block_forward.2} parent=0 // loop_body
    %s14 = ssub.s32 %s9, 1
    %s15 = ssub.s32 %s9, 2
    %s16 = sadd.s32 %s9, 1
    %s17 = ssub.s32 %s9, %s16
    %p18 = scmp.eq.s32.totalorder %s17, 0
    %s20 = sadd.s32 %s19, 1
    %s21 = scalar_select %p18, %s19, %s20
    %p24 = pneg %p18
    %p25 = scmp.eq.s32.totalorder %s9, 1
    %p26 = por %p24, %p25
    %p27 = scmp.ne.s32.totalorder %s19, %s22
    %p28 = scmp.eq.s32.totalorder %s9, 0
    %p29 = por %p27, %p28
    %p30 = scmp.ne.s32.totalorder %s19, %s22
    %p31 = scmp.eq.s32.totalorder %s14, 1
    %p32 = por %p30, %p31
    %p33 = scmp.ne.s32.totalorder %s22, %s23
    %p34 = scmp.eq.s32.totalorder %s14, 0
    %p35 = por %p33, %p34
    %p36 = scmp.ne.s32.totalorder %s22, %s23
    %p37 = scmp.eq.s32.totalorder %s15, 1
    %p38 = por %p36, %p37
    %p40 = scmp.ne.s32.totalorder %s23, %s39
    %p41 = scmp.eq.s32.totalorder %s15, 0
    %p42 = por %p40, %p41
    %s44 = sadd.s32 %s43, 1
    %p47 = scmp.eq.s32.totalorder %s9, 1
    %p48 = scmp.ne.s32.totalorder %s43, %s45
    %p49 = scmp.eq.s32.totalorder %s9, 0
    %p50 = por %p48, %p49
    %p51 = scmp.ne.s32.totalorder %s43, %s45
    %p52 = scmp.eq.s32.totalorder %s14, 1
    %p53 = por %p51, %p52
    %p54 = scmp.ne.s32.totalorder %s45, %s46
    %p55 = scmp.eq.s32.totalorder %s14, 0
    %p56 = por %p54, %p55
    %p57 = scmp.ne.s32.totalorder %s45, %s46
    %p58 = scmp.eq.s32.totalorder %s15, 1
    %p59 = por %p57, %p58
    %p61 = scmp.ne.s32.totalorder %s46, %s60
    %p62 = scmp.eq.s32.totalorder %s15, 0
    %p63 = por %p61, %p62
    %s65 = sadd.s32 %s64, 1
    %p68 = scmp.eq.s32.totalorder %s9, 1
    %p69 = scmp.ne.s32.totalorder %s64, %s66
    %p70 = scmp.eq.s32.totalorder %s9, 0
    %p71 = por %p69, %p70
    %p72 = scmp.ne.s32.totalorder %s64, %s66
    %p73 = scmp.eq.s32.totalorder %s14, 1
    %p74 = por %p72, %p73
    %p75 = scmp.ne.s32.totalorder %s66, %s67
    %p76 = scmp.eq.s32.totalorder %s14, 0
    %p77 = por %p75, %p76
    %p78 = scmp.ne.s32.totalorder %s66, %s67
    %p79 = scmp.eq.s32.totalorder %s15, 1
    %p80 = por %p78, %p79
    %p82 = scmp.ne.s32.totalorder %s67, %s81
    %p83 = scmp.eq.s32.totalorder %s15, 0
    %p84 = por %p82, %p83
    %s85 = ssub.s32 %s9, %s16
    %p86 = scmp.eq.s32.totalorder %s85, 0
    %s88 = sadd.s32 %s87, 1
    %s89 = scalar_select %p86, %s87, %s88
    %p92 = pneg %p86
    %p93 = scmp.eq.s32.totalorder %s9, 1
    %p94 = por %p92, %p93
    %p95 = scmp.ne.s32.totalorder %s87, %s90
    %p96 = scmp.eq.s32.totalorder %s9, 0
    %p97 = por %p95, %p96
    %p98 = scmp.ne.s32.totalorder %s87, %s90
    %p99 = scmp.eq.s32.totalorder %s14, 1
    %p100 = por %p98, %p99
    %p101 = scmp.ne.s32.totalorder %s90, %s91
    %p102 = scmp.eq.s32.totalorder %s14, 0
    %p103 = por %p101, %p102
    %p104 = scmp.ne.s32.totalorder %s90, %s91
    %p105 = scmp.eq.s32.totalorder %s15, 1
    %p106 = por %p104, %p105
    %p108 = scmp.ne.s32.totalorder %s91, %s107
    %p109 = scmp.eq.s32.totalorder %s15, 0
    %p110 = por %p108, %p109
    %p111 = scmp.le.s32.totalorder 1, %s9
    %p112 = scmp.lt.s32.totalorder %s9, 3
    %p113 = pnand %p111, %p112
    %p114 = pneg %p113
    // Predicated region
    $region9: #{decoder_block_forward.2} parent=5 // pred_check
      _
    $region10: #{decoder_block_forward.2} parent=5 // pred_check_branch
      %116 = sbr.rel (%p113) target = $region12
    $region11: #{decoder_block_forward.2} parent=5 // pred_region
      %s117 = ssub.s32 %s9, 1
      // Predicated region
      $region13: #{decoder_block_forward.2} parent=11 // pred_check
        %p118 = pneg %p56
      $region14: #{decoder_block_forward.2} parent=11 // pred_check_branch
        %120 = sbr.rel (%p118) target = $region16
      $region15: #{decoder_block_forward.2} parent=11 // pred_region
        _
      $region16: #{decoder_block_forward.2} parent=11 // pred_fallthru
        _
      // Predicated region
      $region17: #{decoder_block_forward.2} parent=11 // pred_check
        %p121 = pneg %p77
      $region18: #{decoder_block_forward.2} parent=11 // pred_check_branch
        %123 = sbr.rel (%p121) target = $region20
      $region19: #{decoder_block_forward.2} parent=11 // pred_region
        _
      $region20: #{decoder_block_forward.2} parent=11 // pred_fallthru
        _
    $region12: #{decoder_block_forward.2} parent=5 // pred_fallthru
      _
    %p124 = scmp.lt.s32.totalorder %s9, 2
    // Predicated region
    $region21: #{decoder_block_forward.2} parent=5 // pred_check
      %p125 = pneg %p124
    $region22: #{decoder_block_forward.2} parent=5 // pred_check_branch
      %127 = sbr.rel (%p125) target = $region24
    $region23: #{decoder_block_forward.2} parent=5 // pred_region
      // Predicated region
      $region25: #{decoder_block_forward.2} parent=23 // pred_check
        %p128 = pneg %p29
      $region26: #{decoder_block_forward.2} parent=23 // pred_check_branch
        %130 = sbr.rel (%p128) target = $region28
      $region27: #{decoder_block_forward.2} parent=23 // pred_region
        %p131 = scmp.lt.s32.totalorder %s9, 1
        %s132 = scalar_select %p131, %s9, 1
        %s133 = smul.addr %s132, 2
        %s134 = smul.addr %s133, 4
        %s135 = scalar_lea.vmem %s0, %s134
      $region28: #{decoder_block_forward.2} parent=23 // pred_fallthru
        _
    $region24: #{decoder_block_forward.2} parent=5 // pred_fallthru
      _
    %p136 = scmp.le.s32.totalorder 1, %s9
    %p137 = scmp.lt.s32.totalorder %s9, 3
    %p138 = pnand %p136, %p137
    %p139 = pneg %p138
    // Predicated region
    $region29: #{decoder_block_forward.2} parent=5 // pred_check
      _
    $region30: #{decoder_block_forward.2} parent=5 // pred_check_branch
      %141 = sbr.rel (%p138) target = $region32
    $region31: #{decoder_block_forward.2} parent=5 // pred_region
      %s142 = ssub.s32 %s9, 1
      %p143 = scmp.lt.s32.totalorder %s14, 1
      %s144 = scalar_select %p143, %s14, 1
      %s145 = smul.addr %s144, 2
      %s146 = smul.addr %s145, 4
      %s147 = scalar_lea.vmem %s0, %s146
      %p148 = pneg %p35
      %p149 = pneg %p32
      %p150 = pneg %p56
      %p151 = pneg %p53
      %p152 = pneg %p77
      %p153 = pneg %p74
      %p154 = pneg %p103
      %p155 = pneg %p100
      %p156 = scmp.lt.s32.totalorder %s14, 1
      %s157 = scalar_select %p156, %s14, 1
      %s158 = smul.addr %s157, 2
      %s159 = smul.addr %s158, 4
      %s160 = scalar_lea.vmem %s3, %s159
      %p161 = scmp.lt.s32.totalorder %s14, 1
      %s162 = scalar_select %p161, %s14, 1
      %s163 = smul.addr %s162, 2
      %s164 = smul.addr %s163, 4
      %s165 = scalar_lea.vmem %s0, %s164
      %p166 = scmp.lt.s32.totalorder %s14, 1
      %s167 = scalar_select %p166, %s14, 1
      %s168 = smul.addr %s167, 2
      %s169 = smul.addr %s168, 4
      %s170 = scalar_lea.vmem %s3, %s169
      %v172 = vld [vmem:[%s2] sm:$0xf]
      %v173 = vld [vmem:[%s165] sm:$0xf]
      %v174 = vld [vmem:[%s165] sm:$0xff]
      %v175 = vld [vmem:[%s1] sm:$0x3]
      %s176 = scalar_lea.vmem %s1, 2
      %v177 = vld [vmem:[%s176] sm:$0x3]
      %v179 = vunpack.c.l.b16 %v174
      %v180 = vunpack.c.h.b16 %v174
      %v181 = vpack.c.b16 %v179, %v179
      %v182 = vpack.c.b16 %v180, %v180
      %183 = vrot.lane.b32.xlu0 %v181, 127
      %v184 = vpop.permute.xlu0 %183
      %185 = vrot.lane.b32.xlu0 %v182, 127
      %v186 = vpop.permute.xlu0 %185
      %vm187 = vcmask 1039360
      %v188 = vsel %vm187, %v184, %v186
      %vm189 = vcmask 64512
      %v191 = vsel %vm189, %v177, 0
      %vm193 = vcmask 1043456
      %v195 = vsel %vm193, %v188, 0
      %197 = vmatprep.subr.bf16.mxu0 0
      %198 = vmatpush1.bf16.msra.mxu0 %v195
      %199 = vmatprep.subr.bf16.mxu0 0
      %200 = vmatpush1.bf16.msra.mxu0 0
      %201 = vmatprep.subr.bf16.mxu0 0
      %202 = vmatpush1.bf16.msra.mxu0 0
      %203 = vmatprep.subr.bf16.mxu0 0
      %204 = vmatpush1.bf16.msra.mxu0 0
      %205 = vmatprep.subr.bf16.mxu0 0
      %206 = vmatpush1.bf16.msra.mxu0 0
      %207 = vmatprep.subr.bf16.mxu0 0
      %208 = vmatpush1.bf16.msra.mxu0 0
      %209 = vmatprep.subr.bf16.mxu0 0
      %210 = vmatpush1.bf16.msra.mxu0 0
      %211 = vmatprep.subr.bf16.mxu0 0
      %212 = vmatpush1.bf16.msra.mxu0 0
      %213 = vmatprep.subr.bf16.mxu0 0
      %214 = vmatpush1.bf16.msra.mxu0 0
      %215 = vmatprep.subr.bf16.mxu0 0
      %216 = vmatpush1.bf16.msra.mxu0 0
      %217 = vmatprep.subr.bf16.mxu0 0
      %218 = vmatpush1.bf16.msra.mxu0 0
      %219 = vmatprep.subr.bf16.mxu0 0
      %220 = vmatpush1.bf16.msra.mxu0 0
      %221 = vmatprep.subr.bf16.mxu0 0
      %222 = vmatpush1.bf16.msra.mxu0 0
      %223 = vmatprep.subr.bf16.mxu0 0
      %224 = vmatpush1.bf16.msra.mxu0 0
      %225 = vmatprep.subr.bf16.mxu0 0
      %226 = vmatpush1.bf16.msra.mxu0 0
      %227 = vmatprep.subr.bf16.mxu0 0
      %228 = vmatpush1.bf16.msra.mxu0 0
      %229 = vmatprep.mubr.bf16.mxu0 0
      %230 = vmatmul.mubr.bf16.gmra.mrb[0].mxu0 %v191
      %v231 = vpop.f32.mrb[0].mxu0
      %v232 = vadd.f32 0.0, %v231
      %v233 = vpop.f32.mrb[0].mxu0
      %v234 = vpop.f32.mrb[0].mxu0
      %v235 = vpop.f32.mrb[0].mxu0
      %236 = vdwg.mxu0
      %v238 = vsel %vm189, %v175, 0
      %v241 = vsel %vm193, %v173, 0
      %243 = vmatprep.subr.bf16.mxu0 0
      %244 = vmatpush1.bf16.msra.mxu0 %v241
      %245 = vmatprep.subr.bf16.mxu0 0
      %246 = vmatpush1.bf16.msra.mxu0 0
      %247 = vmatprep.subr.bf16.mxu0 0
      %248 = vmatpush1.bf16.msra.mxu0 0
      %249 = vmatprep.subr.bf16.mxu0 0
      %250 = vmatpush1.bf16.msra.mxu0 0
      %251 = vmatprep.subr.bf16.mxu0 0
      %252 = vmatpush1.bf16.msra.mxu0 0
      %253 = vmatprep.subr.bf16.mxu0 0
      %254 = vmatpush1.bf16.msra.mxu0 0
      %255 = vmatprep.subr.bf16.mxu0 0
      %256 = vmatpush1.bf16.msra.mxu0 0
      %257 = vmatprep.subr.bf16.mxu0 0
      %258 = vmatpush1.bf16.msra.mxu0 0
      %259 = vmatprep.subr.bf16.mxu0 0
      %260 = vmatpush1.bf16.msra.mxu0 0
      %261 = vmatprep.subr.bf16.mxu0 0
      %262 = vmatpush1.bf16.msra.mxu0 0
      %263 = vmatprep.subr.bf16.mxu0 0
      %264 = vmatpush1.bf16.msra.mxu0 0
      %265 = vmatprep.subr.bf16.mxu0 0
      %266 = vmatpush1.bf16.msra.mxu0 0
      %267 = vmatprep.subr.bf16.mxu0 0
      %268 = vmatpush1.bf16.msra.mxu0 0
      %269 = vmatprep.subr.bf16.mxu0 0
      %270 = vmatpush1.bf16.msra.mxu0 0
      %271 = vmatprep.subr.bf16.mxu0 0
      %272 = vmatpush1.bf16.msra.mxu0 0
      %273 = vmatprep.subr.bf16.mxu0 0
      %274 = vmatpush1.bf16.msra.mxu0 0
      %275 = vmatprep.mubr.bf16.mxu0 0
      %276 = vmatmul.mubr.bf16.gmra.mrb[0].mxu0 %v238
      %v277 = vpop.f32.mrb[0].mxu0
      %v278 = vadd.f32 %v232, %v277
      %v279 = vpop.f32.mrb[0].mxu0
      %v280 = vpop.f32.mrb[0].mxu0
      %v281 = vpop.f32.mrb[0].mxu0
      %282 = vdwg.mxu0
      %s283 = scalar_lea.vmem %s1, 4
      %v284 = vld [vmem:[%s283] sm:$0x3]
      %285 = vrot.lane.b32.xlu0 %v181, 118
      %v286 = vpop.permute.xlu0 %285
      %287 = vrot.lane.b32.xlu0 %v182, 118
      %v288 = vpop.permute.xlu0 %287
      %vm289 = vcmask 965632
      %v290 = vsel %vm289, %v286, %v288
      %v292 = vsel %vm189, %v284, 0
      %v295 = vsel %vm193, %v290, 0
      %297 = vmatprep.subr.bf16.mxu0 0
      %298 = vmatpush1.bf16.msra.mxu0 %v295
      %299 = vmatprep.subr.bf16.mxu0 0
      %300 = vmatpush1.bf16.msra.mxu0 0
      %301 = vmatprep.subr.bf16.mxu0 0
      %302 = vmatpush1.bf16.msra.mxu0 0
      %303 = vmatprep.subr.bf16.mxu0 0
      %304 = vmatpush1.bf16.msra.mxu0 0
      %305 = vmatprep.subr.bf16.mxu0 0
      %306 = vmatpush1.bf16.msra.mxu0 0
      %307 = vmatprep.subr.bf16.mxu0 0
      %308 = vmatpush1.bf16.msra.mxu0 0
      %309 = vmatprep.subr.bf16.mxu0 0
      %310 = vmatpush1.bf16.msra.mxu0 0
      %311 = vmatprep.subr.bf16.mxu0 0
      %312 = vmatpush1.bf16.msra.mxu0 0
      %313 = vmatprep.subr.bf16.mxu0 0
      %314 = vmatpush1.bf16.msra.mxu0 0
      %315 = vmatprep.subr.bf16.mxu0 0
      %316 = vmatpush1.bf16.msra.mxu0 0
      %317 = vmatprep.subr.bf16.mxu0 0
      %318 = vmatpush1.bf16.msra.mxu0 0
      %319 = vmatprep.subr.bf16.mxu0 0
      %320 = vmatpush1.bf16.msra.mxu0 0
      %321 = vmatprep.subr.bf16.mxu0 0
      %322 = vmatpush1.bf16.msra.mxu0 0
      %323 = vmatprep.subr.bf16.mxu0 0
      %324 = vmatpush1.bf16.msra.mxu0 0
      %325 = vmatprep.subr.bf16.mxu0 0
      %326 = vmatpush1.bf16.msra.mxu0 0
      %327 = vmatprep.subr.bf16.mxu0 0
      %328 = vmatpush1.bf16.msra.mxu0 0
      %329 = vmatprep.mubr.bf16.mxu0 0
      %330 = vmatmul.mubr.bf16.gmra.mrb[0].mxu0 %v292
      %v331 = vpop.f32.mrb[0].mxu0
      %v332 = vadd.f32 0.0, %v331
      %v333 = vpop.f32.mrb[0].mxu0
      %v334 = vpop.f32.mrb[0].mxu0
      %v335 = vpop.f32.mrb[0].mxu0
      %336 = vdwg.mxu0
      %v337 = vadd.f32 %v278, %v332
      %s338 = scalar_lea.vmem %s1, 6
      %v339 = vld [vmem:[%s338] sm:$0x3]
      %340 = vrot.lane.b32.xlu0 %v181, 117
      %v341 = vpop.permute.xlu0 %340
      %342 = vrot.lane.b32.xlu0 %v182, 117
      %v343 = vpop.permute.xlu0 %342
      %vm344 = vcmask 957440
      %v345 = vsel %vm344, %v341, %v343
      %v347 = vsel %vm189, %v339, 0
      %v350 = vsel %vm193, %v345, 0
      %352 = vmatprep.subr.bf16.mxu0 0
      %353 = vmatpush1.bf16.msra.mxu0 %v350
      %354 = vmatprep.subr.bf16.mxu0 0
      %355 = vmatpush1.bf16.msra.mxu0 0
      %356 = vmatprep.subr.bf16.mxu0 0
      %357 = vmatpush1.bf16.msra.mxu0 0
      %358 = vmatprep.subr.bf16.mxu0 0
      %359 = vmatpush1.bf16.msra.mxu0 0
      %360 = vmatprep.subr.bf16.mxu0 0
      %361 = vmatpush1.bf16.msra.mxu0 0
      %362 = vmatprep.subr.bf16.mxu0 0
      %363 = vmatpush1.bf16.msra.mxu0 0
      %364 = vmatprep.subr.bf16.mxu0 0
      %365 = vmatpush1.bf16.msra.mxu0 0
      %366 = vmatprep.subr.bf16.mxu0 0
      %367 = vmatpush1.bf16.msra.mxu0 0
      %368 = vmatprep.subr.bf16.mxu0 0
      %369 = vmatpush1.bf16.msra.mxu0 0
      %370 = vmatprep.subr.bf16.mxu0 0
      %371 = vmatpush1.bf16.msra.mxu0 0
      %372 = vmatprep.subr.bf16.mxu0 0
      %373 = vmatpush1.bf16.msra.mxu0 0
      %374 = vmatprep.subr.bf16.mxu0 0
      %375 = vmatpush1.bf16.msra.mxu0 0
      %376 = vmatprep.subr.bf16.mxu0 0
      %377 = vmatpush1.bf16.msra.mxu0 0
      %378 = vmatprep.subr.bf16.mxu0 0
      %379 = vmatpush1.bf16.msra.mxu0 0
      %380 = vmatprep.subr.bf16.mxu0 0
      %381 = vmatpush1.bf16.msra.mxu0 0
      %382 = vmatprep.subr.bf16.mxu0 0
      %383 = vmatpush1.bf16.msra.mxu0 0
      %384 = vmatprep.mubr.bf16.mxu0 0
      %385 = vmatmul.mubr.bf16.gmra.mrb[0].mxu0 %v347
      %v386 = vpop.f32.mrb[0].mxu0
      %v387 = vadd.f32 0.0, %v386
      %v388 = vpop.f32.mrb[0].mxu0
      %v389 = vpop.f32.mrb[0].mxu0
      %v390 = vpop.f32.mrb[0].mxu0
      %391 = vdwg.mxu0
      %v392 = vadd.f32 %v337, %v387
      %394 = vset.pattern.permute.xlu0 0
      %395 = vperm.xlu0 %394, %v172
      %v396 = vpop.permute.xlu0 %395
      %v398 = vadd.f32 %v392, %v396
      %vm399 = vcmp.gt.f32.partialorder %v398, 0.0
      %v400 = vmul.f32 %v398, 0.01
      %v401 = vsel %vm399, %v398, %v400
      %v402 = vpack.c.bf16 %v401, %v401
      %403 = vst [vmem:[%s170] sm:$0x3] %v402
      %s404 = scalar_lea.vmem %s1, 8
      %v405 = vld [vmem:[%s404] sm:$0x3]
      %s406 = scalar_lea.vmem %s1, 10
      %v407 = vld [vmem:[%s406] sm:$0x3]
      %408 = vrot.lane.b32.xlu0 %v181, 126
      %v409 = vpop.permute.xlu0 %408
      %410 = vrot.lane.b32.xlu0 %v182, 126
      %v411 = vpop.permute.xlu0 %410
      %vm412 = vcmask 1031168
      %v413 = vsel %vm412, %v409, %v411
      %v415 = vsel %vm189, %v407, 0
      %v418 = vsel %vm193, %v413, 0
      %420 = vmatprep.subr.bf16.mxu0 0
      %421 = vmatpush1.bf16.msra.mxu0 %v418
      %422 = vmatprep.subr.bf16.mxu0 0
      %423 = vmatpush1.bf16.msra.mxu0 0
      %424 = vmatprep.subr.bf16.mxu0 0
      %425 = vmatpush1.bf16.msra.mxu0 0
      %426 = vmatprep.subr.bf16.mxu0 0
      %427 = vmatpush1.bf16.msra.mxu0 0
      %428 = vmatprep.subr.bf16.mxu0 0
      %429 = vmatpush1.bf16.msra.mxu0 0
      %430 = vmatprep.subr.bf16.mxu0 0
      %431 = vmatpush1.bf16.msra.mxu0 0
      %432 = vmatprep.subr.bf16.mxu0 0
      %433 = vmatpush1.bf16.msra.mxu0 0
      %434 = vmatprep.subr.bf16.mxu0 0
      %435 = vmatpush1.bf16.msra.mxu0 0
      %436 = vmatprep.subr.bf16.mxu0 0
      %437 = vmatpush1.bf16.msra.mxu0 0
      %438 = vmatprep.subr.bf16.mxu0 0
      %439 = vmatpush1.bf16.msra.mxu0 0
      %440 = vmatprep.subr.bf16.mxu0 0
      %441 = vmatpush1.bf16.msra.mxu0 0
      %442 = vmatprep.subr.bf16.mxu0 0
      %443 = vmatpush1.bf16.msra.mxu0 0
      %444 = vmatprep.subr.bf16.mxu0 0
      %445 = vmatpush1.bf16.msra.mxu0 0
      %446 = vmatprep.subr.bf16.mxu0 0
      %447 = vmatpush1.bf16.msra.mxu0 0
      %448 = vmatprep.subr.bf16.mxu0 0
      %449 = vmatpush1.bf16.msra.mxu0 0
      %450 = vmatprep.subr.bf16.mxu0 0
      %451 = vmatpush1.bf16.msra.mxu0 0
      %452 = vmatprep.mubr.bf16.mxu0 0
      %453 = vmatmul.mubr.bf16.gmra.mrb[0].mxu0 %v415
      %v454 = vpop.f32.mrb[0].mxu0
      %v455 = vadd.f32 0.0, %v454
      %v456 = vpop.f32.mrb[0].mxu0
      %v457 = vpop.f32.mrb[0].mxu0
      %v458 = vpop.f32.mrb[0].mxu0
      %459 = vdwg.mxu0
      %v461 = vsel %vm189, %v405, 0
      %463 = vmatprep.subr.bf16.mxu0 0
      %464 = vmatpush1.bf16.msra.mxu0 %v195
      %465 = vmatprep.subr.bf16.mxu0 0
      %466 = vmatpush1.bf16.msra.mxu0 0
      %467 = vmatprep.subr.bf16.mxu0 0
      %468 = vmatpush1.bf16.msra.mxu0 0
      %469 = vmatprep.subr.bf16.mxu0 0
      %470 = vmatpush1.bf16.msra.mxu0 0
      %471 = vmatprep.subr.bf16.mxu0 0
      %472 = vmatpush1.bf16.msra.mxu0 0
      %473 = vmatprep.subr.bf16.mxu0 0
      %474 = vmatpush1.bf16.msra.mxu0 0
      %475 = vmatprep.subr.bf16.mxu0 0
      %476 = vmatpush1.bf16.msra.mxu0 0
      %477 = vmatprep.subr.bf16.mxu0 0
      %478 = vmatpush1.bf16.msra.mxu0 0
      %479 = vmatprep.subr.bf16.mxu0 0
      %480 = vmatpush1.bf16.msra.mxu0 0
      %481 = vmatprep.subr.bf16.mxu0 0
      %482 = vmatpush1.bf16.msra.mxu0 0
      %483 = vmatprep.subr.bf16.mxu0 0
      %484 = vmatpush1.bf16.msra.mxu0 0
      %485 = vmatprep.subr.bf16.mxu0 0
      %486 = vmatpush1.bf16.msra.mxu0 0
      %487 = vmatprep.subr.bf16.mxu0 0
      %488 = vmatpush1.bf16.msra.mxu0 0
      %489 = vmatprep.subr.bf16.mxu0 0
      %490 = vmatpush1.bf16.msra.mxu0 0
      %491 = vmatprep.subr.bf16.mxu0 0
      %492 = vmatpush1.bf16.msra.mxu0 0
      %493 = vmatprep.subr.bf16.mxu0 0
      %494 = vmatpush1.bf16.msra.mxu0 0
      %495 = vmatprep.mubr.bf16.mxu0 0
      %496 = vmatmul.mubr.bf16.gmra.mrb[0].mxu0 %v461
      %v497 = vpop.f32.mrb[0].mxu0
      %v498 = vadd.f32 %v455, %v497
      %v499 = vpop.f32.mrb[0].mxu0
      %v500 = vpop.f32.mrb[0].mxu0
      %v501 = vpop.f32.mrb[0].mxu0
      %502 = vdwg.mxu0
      %s503 = scalar_lea.vmem %s1, 12
      %v504 = vld [vmem:[%s503] sm:$0x3]
      %v506 = vsel %vm189, %v504, 0
      %508 = vmatprep.subr.bf16.mxu0 0
      %509 = vmatpush1.bf16.msra.mxu0 %v350
      %510 = vmatprep.subr.bf16.mxu0 0
      %511 = vmatpush1.bf16.msra.mxu0 0
      %512 = vmatprep.subr.bf16.mxu0 0
      %513 = vmatpush1.bf16.msra.mxu0 0
      %514 = vmatprep.subr.bf16.mxu0 0
      %515 = vmatpush1.bf16.msra.mxu0 0
      %516 = vmatprep.subr.bf16.mxu0 0
      %517 = vmatpush1.bf16.msra.mxu0 0
      %518 = vmatprep.subr.bf16.mxu0 0
      %519 = vmatpush1.bf16.msra.mxu0 0
      %520 = vmatprep.subr.bf16.mxu0 0
      %521 = vmatpush1.bf16.msra.mxu0 0
      %522 = vmatprep.subr.bf16.mxu0 0
      %523 = vmatpush1.bf16.msra.mxu0 0
      %524 = vmatprep.subr.bf16.mxu0 0
      %525 = vmatpush1.bf16.msra.mxu0 0
      %526 = vmatprep.subr.bf16.mxu0 0
      %527 = vmatpush1.bf16.msra.mxu0 0
      %528 = vmatprep.subr.bf16.mxu0 0
      %529 = vmatpush1.bf16.msra.mxu0 0
      %530 = vmatprep.subr.bf16.mxu0 0
      %531 = vmatpush1.bf16.msra.mxu0 0
      %532 = vmatprep.subr.bf16.mxu0 0
      %533 = vmatpush1.bf16.msra.mxu0 0
      %534 = vmatprep.subr.bf16.mxu0 0
      %535 = vmatpush1.bf16.msra.mxu0 0
      %536 = vmatprep.subr.bf16.mxu0 0
      %537 = vmatpush1.bf16.msra.mxu0 0
      %538 = vmatprep.subr.bf16.mxu0 0
      %539 = vmatpush1.bf16.msra.mxu0 0
      %540 = vmatprep.mubr.bf16.mxu0 0
      %541 = vmatmul.mubr.bf16.gmra.mrb[0].mxu0 %v506
      %v542 = vpop.f32.mrb[0].mxu0
      %v543 = vadd.f32 0.0, %v542
      %v544 = vpop.f32.mrb[0].mxu0
      %v545 = vpop.f32.mrb[0].mxu0
      %v546 = vpop.f32.mrb[0].mxu0
      %547 = vdwg.mxu0
      %v548 = vadd.f32 %v498, %v543
      %s549 = scalar_lea.vmem %s1, 14
      %v550 = vld [vmem:[%s549] sm:$0x3]
      %551 = vrot.lane.b32.xlu0 %v181, 116
      %v552 = vpop.permute.xlu0 %551
      %553 = vrot.lane.b32.xlu0 %v182, 116
      %v554 = vpop.permute.xlu0 %553
      %vm555 = vcmask 949248
      %v556 = vsel %vm555, %v552, %v554
      %v558 = vsel %vm189, %v550, 0
      %v561 = vsel %vm193, %v556, 0
      %563 = vmatprep.subr.bf16.mxu0 0
      %564 = vmatpush1.bf16.msra.mxu0 %v561
      %565 = vmatprep.subr.bf16.mxu0 0
      %566 = vmatpush1.bf16.msra.mxu0 0
      %567 = vmatprep.subr.bf16.mxu0 0
      %568 = vmatpush1.bf16.msra.mxu0 0
      %569 = vmatprep.subr.bf16.mxu0 0
      %570 = vmatpush1.bf16.msra.mxu0 0
      %571 = vmatprep.subr.bf16.mxu0 0
      %572 = vmatpush1.bf16.msra.mxu0 0
      %573 = vmatprep.subr.bf16.mxu0 0
      %574 = vmatpush1.bf16.msra.mxu0 0
      %575 = vmatprep.subr.bf16.mxu0 0
      %576 = vmatpush1.bf16.msra.mxu0 0
      %577 = vmatprep.subr.bf16.mxu0 0
      %578 = vmatpush1.bf16.msra.mxu0 0
      %579 = vmatprep.subr.bf16.mxu0 0
      %580 = vmatpush1.bf16.msra.mxu0 0
      %581 = vmatprep.subr.bf16.mxu0 0
      %582 = vmatpush1.bf16.msra.mxu0 0
      %583 = vmatprep.subr.bf16.mxu0 0
      %584 = vmatpush1.bf16.msra.mxu0 0
      %585 = vmatprep.subr.bf16.mxu0 0
      %586 = vmatpush1.bf16.msra.mxu0 0
      %587 = vmatprep.subr.bf16.mxu0 0
      %588 = vmatpush1.bf16.msra.mxu0 0
      %589 = vmatprep.subr.bf16.mxu0 0
      %590 = vmatpush1.bf16.msra.mxu0 0
      %591 = vmatprep.subr.bf16.mxu0 0
      %592 = vmatpush1.bf16.msra.mxu0 0
      %593 = vmatprep.subr.bf16.mxu0 0
      %594 = vmatpush1.bf16.msra.mxu0 0
      %595 = vmatprep.mubr.bf16.mxu0 0
      %596 = vmatmul.mubr.bf16.gmra.mrb[0].mxu0 %v558
      %v597 = vpop.f32.mrb[0].mxu0
      %v598 = vadd.f32 0.0, %v597
      %v599 = vpop.f32.mrb[0].mxu0
      %v600 = vpop.f32.mrb[0].mxu0
      %v601 = vpop.f32.mrb[0].mxu0
      %602 = vdwg.mxu0
      %v603 = vadd.f32 %v548, %v598
      %v604 = vadd.f32 %v603, %v396
      %vm605 = vcmp.gt.f32.partialorder %v604, 0.0
      %v606 = vmul.f32 %v604, 0.01
      %v607 = vsel %vm605, %v604, %v606
      %v608 = vpack.c.bf16 %v607, %v607
      %v610 = vunpack.c.l.b16 %v608
      %v611 = vpack.c.b16 %v610, %v610
      %v612 = vrot.slane %v611, 6
      %614 = vst [vmem:[%s170] sm:$0xc] %v612
      %s615 = scalar_lea.vmem %s1, 16
      %v616 = vld [vmem:[%s615] sm:$0x3]
      %s617 = scalar_lea.vmem %s1, 18
      %v618 = vld [vmem:[%s617] sm:$0x3]
      %v620 = vsel %vm189, %v618, 0
      %622 = vmatprep.subr.bf16.mxu0 0
      %623 = vmatpush1.bf16.msra.mxu0 %v350
      %624 = vmatprep.subr.bf16.mxu0 0
      %625 = vmatpush1.bf16.msra.mxu0 0
      %626 = vmatprep.subr.bf16.mxu0 0
      %627 = vmatpush1.bf16.msra.mxu0 0
      %628 = vmatprep.subr.bf16.mxu0 0
      %629 = vmatpush1.bf16.msra.mxu0 0
      %630 = vmatprep.subr.bf16.mxu0 0
      %631 = vmatpush1.bf16.msra.mxu0 0
      %632 = vmatprep.subr.bf16.mxu0 0
      %633 = vmatpush1.bf16.msra.mxu0 0
      %634 = vmatprep.subr.bf16.mxu0 0
      %635 = vmatpush1.bf16.msra.mxu0 0
      %636 = vmatprep.subr.bf16.mxu0 0
      %637 = vmatpush1.bf16.msra.mxu0 0
      %638 = vmatprep.subr.bf16.mxu0 0
      %639 = vmatpush1.bf16.msra.mxu0 0
      %640 = vmatprep.subr.bf16.mxu0 0
      %641 = vmatpush1.bf16.msra.mxu0 0
      %642 = vmatprep.subr.bf16.mxu0 0
      %643 = vmatpush1.bf16.msra.mxu0 0
      %644 = vmatprep.subr.bf16.mxu0 0
      %645 = vmatpush1.bf16.msra.mxu0 0
      %646 = vmatprep.subr.bf16.mxu0 0
      %647 = vmatpush1.bf16.msra.mxu0 0
      %648 = vmatprep.subr.bf16.mxu0 0
      %649 = vmatpush1.bf16.msra.mxu0 0
      %650 = vmatprep.subr.bf16.mxu0 0
      %651 = vmatpush1.bf16.msra.mxu0 0
      %652 = vmatprep.subr.bf16.mxu0 0
      %653 = vmatpush1.bf16.msra.mxu0 0
      %654 = vmatprep.mubr.bf16.mxu0 0
      %655 = vmatmul.mubr.bf16.gmra.mrb[0].mxu0 %v620
      %v656 = vpop.f32.mrb[0].mxu0
      %v657 = vadd.f32 0.0, %v656
      %v658 = vpop.f32.mrb[0].mxu0
      %v659 = vpop.f32.mrb[0].mxu0
      %v660 = vpop.f32.mrb[0].mxu0
      %661 = vdwg.mxu0
      %v663 = vsel %vm189, %v616, 0
      %665 = vmatprep.subr.bf16.mxu0 0
      %666 = vmatpush1.bf16.msra.mxu0 %v295
      %667 = vmatprep.subr.bf16.mxu0 0
      %668 = vmatpush1.bf16.msra.mxu0 0
      %669 = vmatprep.subr.bf16.mxu0 0
      %670 = vmatpush1.bf16.msra.mxu0 0
      %671 = vmatprep.subr.bf16.mxu0 0
      %672 = vmatpush1.bf16.msra.mxu0 0
      %673 = vmatprep.subr.bf16.mxu0 0
      %674 = vmatpush1.bf16.msra.mxu0 0
      %675 = vmatprep.subr.bf16.mxu0 0
      %676 = vmatpush1.bf16.msra.mxu0 0
      %677 = vmatprep.subr.bf16.mxu0 0
      %678 = vmatpush1.bf16.msra.mxu0 0
      %679 = vmatprep.subr.bf16.mxu0 0
      %680 = vmatpush1.bf16.msra.mxu0 0
      %681 = vmatprep.subr.bf16.mxu0 0
      %682 = vmatpush1.bf16.msra.mxu0 0
      %683 = vmatprep.subr.bf16.mxu0 0
      %684 = vmatpush1.bf16.msra.mxu0 0
      %685 = vmatprep.subr.bf16.mxu0 0
      %686 = vmatpush1.bf16.msra.mxu0 0
      %687 = vmatprep.subr.bf16.mxu0 0
      %688 = vmatpush1.bf16.msra.mxu0 0
      %689 = vmatprep.subr.bf16.mxu0 0
      %690 = vmatpush1.bf16.msra.mxu0 0
      %691 = vmatprep.subr.bf16.mxu0 0
      %692 = vmatpush1.bf16.msra.mxu0 0
      %693 = vmatprep.subr.bf16.mxu0 0
      %694 = vmatpush1.bf16.msra.mxu0 0
      %695 = vmatprep.subr.bf16.mxu0 0
      %696 = vmatpush1.bf16.msra.mxu0 0
      %697 = vmatprep.mubr.bf16.mxu0 0
      %698 = vmatmul.mubr.bf16.gmra.mrb[0].mxu0 %v663
      %v699 = vpop.f32.mrb[0].mxu0
      %v700 = vadd.f32 %v657, %v699
      %v701 = vpop.f32.mrb[0].mxu0
      %v702 = vpop.f32.mrb[0].mxu0
      %v703 = vpop.f32.mrb[0].mxu0
      %704 = vdwg.mxu0
      %s705 = scalar_lea.vmem %s1, 20
      %v706 = vld [vmem:[%s705] sm:$0x3]
      %707 = vrot.lane.b32.xlu0 %v181, 108
      %v708 = vpop.permute.xlu0 %707
      %709 = vrot.lane.b32.xlu0 %v182, 108
      %v710 = vpop.permute.xlu0 %709
      %vm711 = vcmask 883712
      %v712 = vsel %vm711, %v708, %v710
      %v714 = vsel %vm189, %v706, 0
      %v717 = vsel %vm193, %v712, 0
      %719 = vmatprep.subr.bf16.mxu0 0
      %720 = vmatpush1.bf16.msra.mxu0 %v717
      %721 = vmatprep.subr.bf16.mxu0 0
      %722 = vmatpush1.bf16.msra.mxu0 0
      %723 = vmatprep.subr.bf16.mxu0 0
      %724 = vmatpush1.bf16.msra.mxu0 0
      %725 = vmatprep.subr.bf16.mxu0 0
      %726 = vmatpush1.bf16.msra.mxu0 0
      %727 = vmatprep.subr.bf16.mxu0 0
      %728 = vmatpush1.bf16.msra.mxu0 0
      %729 = vmatprep.subr.bf16.mxu0 0
      %730 = vmatpush1.bf16.msra.mxu0 0
      %731 = vmatprep.subr.bf16.mxu0 0
      %732 = vmatpush1.bf16.msra.mxu0 0
      %733 = vmatprep.subr.bf16.mxu0 0
      %734 = vmatpush1.bf16.msra.mxu0 0
      %735 = vmatprep.subr.bf16.mxu0 0
      %736 = vmatpush1.bf16.msra.mxu0 0
      %737 = vmatprep.subr.bf16.mxu0 0
      %738 = vmatpush1.bf16.msra.mxu0 0
      %739 = vmatprep.subr.bf16.mxu0 0
      %740 = vmatpush1.bf16.msra.mxu0 0
      %741 = vmatprep.subr.bf16.mxu0 0
      %742 = vmatpush1.bf16.msra.mxu0 0
      %743 = vmatprep.subr.bf16.mxu0 0
      %744 = vmatpush1.bf16.msra.mxu0 0
      %745 = vmatprep.subr.bf16.mxu0 0
      %746 = vmatpush1.bf16.msra.mxu0 0
      %747 = vmatprep.subr.bf16.mxu0 0
      %748 = vmatpush1.bf16.msra.mxu0 0
      %749 = vmatprep.subr.bf16.mxu0 0
      %750 = vmatpush1.bf16.msra.mxu0 0
      %751 = vmatprep.mubr.bf16.mxu0 0
      %752 = vmatmul.mubr.bf16.gmra.mrb[0].mxu0 %v714
      %v753 = vpop.f32.mrb[0].mxu0
      %v754 = vadd.f32 0.0, %v753
      %v755 = vpop.f32.mrb[0].mxu0
      %v756 = vpop.f32.mrb[0].mxu0
      %v757 = vpop.f32.mrb[0].mxu0
      %758 = vdwg.mxu0
      %v759 = vadd.f32 %v700, %v754
      %s760 = scalar_lea.vmem %s1, 22
      %v761 = vld [vmem:[%s760] sm:$0x3]
      %762 = vrot.lane.b32.xlu0 %v181, 107
      %v763 = vpop.permute.xlu0 %762
      %764 = vrot.lane.b32.xlu0 %v182, 107
      %v765 = vpop.permute.xlu0 %764
      %vm766 = vcmask 875520
      %v767 = vsel %vm766, %v763, %v765
      %v769 = vsel %vm189, %v761, 0
      %v772 = vsel %vm193, %v767, 0
      %774 = vmatprep.subr.bf16.mxu0 0
      %775 = vmatpush1.bf16.msra.mxu0 %v772
      %776 = vmatprep.subr.bf16.mxu0 0
      %777 = vmatpush1.bf16.msra.mxu0 0
      %778 = vmatprep.subr.bf16.mxu0 0
      %779 = vmatpush1.bf16.msra.mxu0 0
      %780 = vmatprep.subr.bf16.mxu0 0
      %781 = vmatpush1.bf16.msra.mxu0 0
      %782 = vmatprep.subr.bf16.mxu0 0
      %783 = vmatpush1.bf16.msra.mxu0 0
      %784 = vmatprep.subr.bf16.mxu0 0
      %785 = vmatpush1.bf16.msra.mxu0 0
      %786 = vmatprep.subr.bf16.mxu0 0
      %787 = vmatpush1.bf16.msra.mxu0 0
      %788 = vmatprep.subr.bf16.mxu0 0
      %789 = vmatpush1.bf16.msra.mxu0 0
      %790 = vmatprep.subr.bf16.mxu0 0
      %791 = vmatpush1.bf16.msra.mxu0 0
      %792 = vmatprep.subr.bf16.mxu0 0
      %793 = vmatpush1.bf16.msra.mxu0 0
      %794 = vmatprep.subr.bf16.mxu0 0
      %795 = vmatpush1.bf16.msra.mxu0 0
      %796 = vmatprep.subr.bf16.mxu0 0
      %797 = vmatpush1.bf16.msra.mxu0 0
      %798 = vmatprep.subr.bf16.mxu0 0
      %799 = vmatpush1.bf16.msra.mxu0 0
      %800 = vmatprep.subr.bf16.mxu0 0
      %801 = vmatpush1.bf16.msra.mxu0 0
      %802 = vmatprep.subr.bf16.mxu0 0
      %803 = vmatpush1.bf16.msra.mxu0 0
      %804 = vmatprep.subr.bf16.mxu0 0
      %805 = vmatpush1.bf16.msra.mxu0 0
      %806 = vmatprep.mubr.bf16.mxu0 0
      %807 = vmatmul.mubr.bf16.gmra.mrb[0].mxu0 %v769
      %v808 = vpop.f32.mrb[0].mxu0
      %v809 = vadd.f32 0.0, %v808
      %v810 = vpop.f32.mrb[0].mxu0
      %v811 = vpop.f32.mrb[0].mxu0
      %v812 = vpop.f32.mrb[0].mxu0
      %813 = vdwg.mxu0
      %v814 = vadd.f32 %v759, %v809
      %v815 = vadd.f32 %v814, %v396
      %vm816 = vcmp.gt.f32.partialorder %v815, 0.0
      %v817 = vmul.f32 %v815, 0.01
      %v818 = vsel %vm816, %v815, %v817
      %v819 = vpack.c.bf16 %v818, %v818
      %820 = vst [vmem:[%s170 + $0x4] sm:$0x3] %v819
      %s821 = scalar_lea.vmem %s1, 24
      %v822 = vld [vmem:[%s821] sm:$0x3]
      %s823 = scalar_lea.vmem %s1, 26
      %v824 = vld [vmem:[%s823] sm:$0x3]
      %v826 = vsel %vm189, %v824, 0
      %828 = vmatprep.subr.bf16.mxu0 0
      %829 = vmatpush1.bf16.msra.mxu0 %v561
      %830 = vmatprep.subr.bf16.mxu0 0
      %831 = vmatpush1.bf16.msra.mxu0 0
      %832 = vmatprep.subr.bf16.mxu0 0
      %833 = vmatpush1.bf16.msra.mxu0 0
      %834 = vmatprep.subr.bf16.mxu0 0
      %835 = vmatpush1.bf16.msra.mxu0 0
      %836 = vmatprep.subr.bf16.mxu0 0
      %837 = vmatpush1.bf16.msra.mxu0 0
      %838 = vmatprep.subr.bf16.mxu0 0
      %839 = vmatpush1.bf16.msra.mxu0 0
      %840 = vmatprep.subr.bf16.mxu0 0
      %841 = vmatpush1.bf16.msra.mxu0 0
      %842 = vmatprep.subr.bf16.mxu0 0
      %843 = vmatpush1.bf16.msra.mxu0 0
      %844 = vmatprep.subr.bf16.mxu0 0
      %845 = vmatpush1.bf16.msra.mxu0 0
      %846 = vmatprep.subr.bf16.mxu0 0
      %847 = vmatpush1.bf16.msra.mxu0 0
      %848 = vmatprep.subr.bf16.mxu0 0
      %849 = vmatpush1.bf16.msra.mxu0 0
      %850 = vmatprep.subr.bf16.mxu0 0
      %851 = vmatpush1.bf16.msra.mxu0 0
      %852 = vmatprep.subr.bf16.mxu0 0
      %853 = vmatpush1.bf16.msra.mxu0 0
      %854 = vmatprep.subr.bf16.mxu0 0
      %855 = vmatpush1.bf16.msra.mxu0 0
      %856 = vmatprep.subr.bf16.mxu0 0
      %857 = vmatpush1.bf16.msra.mxu0 0
      %858 = vmatprep.subr.bf16.mxu0 0
      %859 = vmatpush1.bf16.msra.mxu0 0
      %860 = vmatprep.mubr.bf16.mxu0 0
      %861 = vmatmul.mubr.bf16.gmra.mrb[0].mxu0 %v826
      %v862 = vpop.f32.mrb[0].mxu0
      %v863 = vadd.f32 0.0, %v862
      %v864 = vpop.f32.mrb[0].mxu0
      %v865 = vpop.f32.mrb[0].mxu0
      %v866 = vpop.f32.mrb[0].mxu0
      %867 = vdwg.mxu0
      %v869 = vsel %vm189, %v822, 0
      %871 = vmatprep.subr.bf16.mxu0 0
      %872 = vmatpush1.bf16.msra.mxu0 %v350
      %873 = vmatprep.subr.bf16.mxu0 0
      %874 = vmatpush1.bf16.msra.mxu0 0
      %875 = vmatprep.subr.bf16.mxu0 0
      %876 = vmatpush1.bf16.msra.mxu0 0
      %877 = vmatprep.subr.bf16.mxu0 0
      %878 = vmatpush1.bf16.msra.mxu0 0
      %879 = vmatprep.subr.bf16.mxu0 0
      %880 = vmatpush1.bf16.msra.mxu0 0
      %881 = vmatprep.subr.bf16.mxu0 0
      %882 = vmatpush1.bf16.msra.mxu0 0
      %883 = vmatprep.subr.bf16.mxu0 0
      %884 = vmatpush1.bf16.msra.mxu0 0
      %885 = vmatprep.subr.bf16.mxu0 0
      %886 = vmatpush1.bf16.msra.mxu0 0
      %887 = vmatprep.subr.bf16.mxu0 0
      %888 = vmatpush1.bf16.msra.mxu0 0
      %889 = vmatprep.subr.bf16.mxu0 0
      %890 = vmatpush1.bf16.msra.mxu0 0
      %891 = vmatprep.subr.bf16.mxu0 0
      %892 = vmatpush1.bf16.msra.mxu0 0
      %893 = vmatprep.subr.bf16.mxu0 0
      %894 = vmatpush1.bf16.msra.mxu0 0
      %895 = vmatprep.subr.bf16.mxu0 0
      %896 = vmatpush1.bf16.msra.mxu0 0
      %897 = vmatprep.subr.bf16.mxu0 0
      %898 = vmatpush1.bf16.msra.mxu0 0
      %899 = vmatprep.subr.bf16.mxu0 0
      %900 = vmatpush1.bf16.msra.mxu0 0
      %901 = vmatprep.subr.bf16.mxu0 0
      %902 = vmatpush1.bf16.msra.mxu0 0
      %903 = vmatprep.mubr.bf16.mxu0 0
      %904 = vmatmul.mubr.bf16.gmra.mrb[0].mxu0 %v869
      %v905 = vpop.f32.mrb[0].mxu0
      %v906 = vadd.f32 %v863, %v905
      %v907 = vpop.f32.mrb[0].mxu0
      %v908 = vpop.f32.mrb[0].mxu0
      %v909 = vpop.f32.mrb[0].mxu0
      %910 = vdwg.mxu0
      %s911 = scalar_lea.vmem %s1, 28
      %v912 = vld [vmem:[%s911] sm:$0x3]
      %v914 = vsel %vm189, %v912, 0
      %916 = vmatprep.subr.bf16.mxu0 0
      %917 = vmatpush1.bf16.msra.mxu0 %v772
      %918 = vmatprep.subr.bf16.mxu0 0
      %919 = vmatpush1.bf16.msra.mxu0 0
      %920 = vmatprep.subr.bf16.mxu0 0
      %921 = vmatpush1.bf16.msra.mxu0 0
      %922 = vmatprep.subr.bf16.mxu0 0
      %923 = vmatpush1.bf16.msra.mxu0 0
      %924 = vmatprep.subr.bf16.mxu0 0
      %925 = vmatpush1.bf16.msra.mxu0 0
      %926 = vmatprep.subr.bf16.mxu0 0
      %927 = vmatpush1.bf16.msra.mxu0 0
      %928 = vmatprep.subr.bf16.mxu0 0
      %929 = vmatpush1.bf16.msra.mxu0 0
      %930 = vmatprep.subr.bf16.mxu0 0
      %931 = vmatpush1.bf16.msra.mxu0 0
      %932 = vmatprep.subr.bf16.mxu0 0
      %933 = vmatpush1.bf16.msra.mxu0 0
      %934 = vmatprep.subr.bf16.mxu0 0
      %935 = vmatpush1.bf16.msra.mxu0 0
      %936 = vmatprep.subr.bf16.mxu0 0
      %937 = vmatpush1.bf16.msra.mxu0 0
      %938 = vmatprep.subr.bf16.mxu0 0
      %939 = vmatpush1.bf16.msra.mxu0 0
      %940 = vmatprep.subr.bf16.mxu0 0
      %941 = vmatpush1.bf16.msra.mxu0 0
      %942 = vmatprep.subr.bf16.mxu0 0
      %943 = vmatpush1.bf16.msra.mxu0 0
      %944 = vmatprep.subr.bf16.mxu0 0
      %945 = vmatpush1.bf16.msra.mxu0 0
      %946 = vmatprep.subr.bf16.mxu0 0
      %947 = vmatpush1.bf16.msra.mxu0 0
      %948 = vmatprep.mubr.bf16.mxu0 0
      %949 = vmatmul.mubr.bf16.gmra.mrb[0].mxu0 %v914
      %v950 = vpop.f32.mrb[0].mxu0
      %v951 = vadd.f32 0.0, %v950
      %v952 = vpop.f32.mrb[0].mxu0
      %v953 = vpop.f32.mrb[0].mxu0
      %v954 = vpop.f32.mrb[0].mxu0
      %955 = vdwg.mxu0
      %v956 = vadd.f32 %v906, %v951
      %s957 = scalar_lea.vmem %s1, 30
      %v958 = vld [vmem:[%s957] sm:$0x3]
      %959 = vrot.lane.b32.xlu0 %v181, 106
      %v960 = vpop.permute.xlu0 %959
      %961 = vrot.lane.b32.xlu0 %v182, 106
      %v962 = vpop.permute.xlu0 %961
      %vm963 = vcmask 867328
      %v964 = vsel %vm963, %v960, %v962
      %v966 = vsel %vm189, %v958, 0
      %v969 = vsel %vm193, %v964, 0
      %971 = vmatprep.subr.bf16.mxu0 0
      %972 = vmatpush1.bf16.msra.mxu0 %v969
      %973 = vmatprep.subr.bf16.mxu0 0
      %974 = vmatpush1.bf16.msra.mxu0 0
      %975 = vmatprep.subr.bf16.mxu0 0
      %976 = vmatpush1.bf16.msra.mxu0 0
      %977 = vmatprep.subr.bf16.mxu0 0
      %978 = vmatpush1.bf16.msra.mxu0 0
      %979 = vmatprep.subr.bf16.mxu0 0
      %980 = vmatpush1.bf16.msra.mxu0 0
      %981 = vmatprep.subr.bf16.mxu0 0
      %982 = vmatpush1.bf16.msra.mxu0 0
      %983 = vmatprep.subr.bf16.mxu0 0
      %984 = vmatpush1.bf16.msra.mxu0 0
      %985 = vmatprep.subr.bf16.mxu0 0
      %986 = vmatpush1.bf16.msra.mxu0 0
      %987 = vmatprep.subr.bf16.mxu0 0
      %988 = vmatpush1.bf16.msra.mxu0 0
      %989 = vmatprep.subr.bf16.mxu0 0
      %990 = vmatpush1.bf16.msra.mxu0 0
      %991 = vmatprep.subr.bf16.mxu0 0
      %992 = vmatpush1.bf16.msra.mxu0 0
      %993 = vmatprep.subr.bf16.mxu0 0
      %994 = vmatpush1.bf16.msra.mxu0 0
      %995 = vmatprep.subr.bf16.mxu0 0
      %996 = vmatpush1.bf16.msra.mxu0 0
      %997 = vmatprep.subr.bf16.mxu0 0
      %998 = vmatpush1.bf16.msra.mxu0 0
      %999 = vmatprep.subr.bf16.mxu0 0
      %1000 = vmatpush1.bf16.msra.mxu0 0
      %1001 = vmatprep.subr.bf16.mxu0 0
      %1002 = vmatpush1.bf16.msra.mxu0 0
      %1003 = vmatprep.mubr.bf16.mxu0 0
      %1004 = vmatmul.mubr.bf16.gmra.mrb[0].mxu0 %v966
      %v1005 = vpop.f32.mrb[0].mxu0
      %v1006 = vadd.f32 0.0, %v1005
      %v1007 = vpop.f32.mrb[0].mxu0
      %v1008 = vpop.f32.mrb[0].mxu0
      %v1009 = vpop.f32.mrb[0].mxu0
      %1010 = vdwg.mxu0
      %v1011 = vadd.f32 %v956, %v1006
      %v1012 = vadd.f32 %v1011, %v396
      %vm1013 = vcmp.gt.f32.partialorder %v1012, 0.0
      %v1014 = vmul.f32 %v1012, 0.01
      %v1015 = vsel %vm1013, %v1012, %v1014
      %v1016 = vpack.c.bf16 %v1015, %v1015
      %v1018 = vunpack.c.l.b16 %v1016
      %v1019 = vpack.c.b16 %v1018, %v1018
      %v1020 = vrot.slane %v1019, 6
      %1022 = vst [vmem:[%s170 + $0x4] sm:$0xc] %v1020
      %p1023 = scmp.lt.s32.totalorder %s14, 1
      %s1024 = scalar_select %p1023, %s14, 1
      %s1025 = smul.addr %s1024, 2
      %s1026 = smul.addr %s1025, 4
      %s1027 = scalar_lea.vmem %s3, %s1026
      // Predicated region
      $region33: #{decoder_block_forward.2} parent=31 // pred_check
        %p1028 = pneg %p100
      $region34: #{decoder_block_forward.2} parent=31 // pred_check_branch
        %1030 = sbr.rel (%p1028) target = $region36
      $region35: #{decoder_block_forward.2} parent=31 // pred_region
        _
      $region36: #{decoder_block_forward.2} parent=31 // pred_fallthru
        _
    $region32: #{decoder_block_forward.2} parent=5 // pred_fallthru
      _
    %p1031 = scmp.le.s32.totalorder 2, %s9
    // Predicated region
    $region37: #{decoder_block_forward.2} parent=5 // pred_check
      %p1032 = pneg %p1031
    $region38: #{decoder_block_forward.2} parent=5 // pred_check_branch
      %1034 = sbr.rel (%p1032) target = $region40
    $region39: #{decoder_block_forward.2} parent=5 // pred_region
      %s1035 = ssub.s32 %s9, 2
      // Predicated region
      $region41: #{decoder_block_forward.2} parent=39 // pred_check
        %p1036 = pneg %p106
      $region42: #{decoder_block_forward.2} parent=39 // pred_check_branch
        %1038 = sbr.rel (%p1036) target = $region44
      $region43: #{decoder_block_forward.2} parent=39 // pred_region
        %p1039 = scmp.lt.s32.totalorder %s15, 1
        %s1040 = scalar_select %p1039, %s15, 1
        %s1041 = smul.addr %s1040, 2
        %s1042 = smul.addr %s1041, 4
        %s1043 = scalar_lea.vmem %s3, %s1042
      $region44: #{decoder_block_forward.2} parent=39 // pred_fallthru
        _
    $region40: #{decoder_block_forward.2} parent=5 // pred_fallthru
      _
  $region6: #{decoder_block_forward.2} parent=0 // loop_footer
    %s13 = sadd.s32 1, %s9
  $region7: #{decoder_block_forward.2} parent=0 // loop_footer_branch
    %8 = sbr.rel target = $region3
  $region8: #{decoder_block_forward.2} parent=0 // loop_exit
    _

// kernel: decoder_block_forward.3
$region0: #{decoder_block_forward.3}
  #allocation0 [shape = 'u32[]', space=smem, size = 0x4, offset = 0x4, fixed_abs, tag = 'smem constant byte address 0x4 - core index']
  #allocation1 [shape = 'u32[144,128]{1,0:T(1,128)}', space=vmem, size = 0x12000, scoped, tag = 'internal scratch']
  %s0 = inlined_call_operand.vmem [shape: bf16[2,4,512], index: 0, kind: input, shape index: {}]
  %s1 = inlined_call_operand.vmem [shape: bf16[16,2,4], index: 1, kind: input, shape index: {}]
  %s2 = inlined_call_operand.vmem [shape: f32[2,1], index: 2, kind: input, shape index: {}]
  %s3 = inlined_call_operand.vmem [shape: f32[2,8,384], index: 3, kind: output, shape index: {}]
  %s4 = sld [smem:[#allocation0]]
  $region45: #{decoder_block_forward.3} parent=0
    _
  %s6 = ssub.s32 1, %s4
  %s7 = scalar_select 0, %s6, %s4
  loop: start=0, step=1, limit=4
  $region2: #{decoder_block_forward.3} parent=0 // loop_pre_header
    _
  $region3: #{decoder_block_forward.3} parent=0 // loop_header
    %s9 = sphi 0, %s13
    %p10 = scmp.ge.s32.totalorder %s9, 4
    %s19 = sphi 0, %s21
    %s22 = sphi 0, %s19
    %s23 = sphi 0, %s22
    %s39 = sphi 0, %s23
    %s43 = sphi 0, %s43
    %s45 = sphi 0, %s43
    %s46 = sphi 0, %s45
    %s60 = sphi 0, %s46
    %s64 = sphi 0, %s64
    %s66 = sphi 0, %s64
    %s67 = sphi 0, %s66
    %s81 = sphi 0, %s67
    %s87 = sphi 0, %s89
    %s90 = sphi 0, %s87
    %s91 = sphi 0, %s90
    %s107 = sphi 0, %s91
  $region4: #{decoder_block_forward.3} parent=0 // loop_header_branch
    %12 = sbr.rel (%p10) target = $region8
  $region5: #{decoder_block_forward.3} parent=0 // loop_body
    %s14 = ssub.s32 %s9, 1
    %s15 = ssub.s32 %s9, 2
    %s16 = sadd.s32 %s9, 1
    %s17 = ssub.s32 %s9, %s16
    %p18 = scmp.eq.s32.totalorder %s17, 0
    %s20 = sadd.s32 %s19, 1
    %s21 = scalar_select %p18, %s19, %s20
    %p24 = pneg %p18
    %p25 = scmp.eq.s32.totalorder %s9, 1
    %p26 = por %p24, %p25
    %p27 = scmp.ne.s32.totalorder %s19, %s22
    %p28 = scmp.eq.s32.totalorder %s9, 0
    %p29 = por %p27, %p28
    %p30 = scmp.ne.s32.totalorder %s19, %s22
    %p31 = scmp.eq.s32.totalorder %s14, 1
    %p32 = por %p30, %p31
    %p33 = scmp.ne.s32.totalorder %s22, %s23
    %p34 = scmp.eq.s32.totalorder %s14, 0
    %p35 = por %p33, %p34
    %p36 = scmp.ne.s32.totalorder %s22, %s23
    %p37 = scmp.eq.s32.totalorder %s15, 1
    %p38 = por %p36, %p37
    %p40 = scmp.ne.s32.totalorder %s23, %s39
    %p41 = scmp.eq.s32.totalorder %s15, 0
    %p42 = por %p40, %p41
    %s44 = sadd.s32 %s43, 1
    %p47 = scmp.eq.s32.totalorder %s9, 1
    %p48 = scmp.ne.s32.totalorder %s43, %s45
    %p49 = scmp.eq.s32.totalorder %s9, 0
    %p50 = por %p48, %p49
    %p51 = scmp.ne.s32.totalorder %s43, %s45
    %p52 = scmp.eq.s32.totalorder %s14, 1
    %p53 = por %p51, %p52
    %p54 = scmp.ne.s32.totalorder %s45, %s46
    %p55 = scmp.eq.s32.totalorder %s14, 0
    %p56 = por %p54, %p55
    %p57 = scmp.ne.s32.totalorder %s45, %s46
    %p58 = scmp.eq.s32.totalorder %s15, 1
    %p59 = por %p57, %p58
    %p61 = scmp.ne.s32.totalorder %s46, %s60
    %p62 = scmp.eq.s32.totalorder %s15, 0
    %p63 = por %p61, %p62
    %s65 = sadd.s32 %s64, 1
    %p68 = scmp.eq.s32.totalorder %s9, 1
    %p69 = scmp.ne.s32.totalorder %s64, %s66
    %p70 = scmp.eq.s32.totalorder %s9, 0
    %p71 = por %p69, %p70
    %p72 = scmp.ne.s32.totalorder %s64, %s66
    %p73 = scmp.eq.s32.totalorder %s14, 1
    %p74 = por %p72, %p73
    %p75 = scmp.ne.s32.totalorder %s66, %s67
    %p76 = scmp.eq.s32.totalorder %s14, 0
    %p77 = por %p75, %p76
    %p78 = scmp.ne.s32.totalorder %s66, %s67
    %p79 = scmp.eq.s32.totalorder %s15, 1
    %p80 = por %p78, %p79
    %p82 = scmp.ne.s32.totalorder %s67, %s81
    %p83 = scmp.eq.s32.totalorder %s15, 0
    %p84 = por %p82, %p83
    %s85 = ssub.s32 %s9, %s16
    %p86 = scmp.eq.s32.totalorder %s85, 0
    %s88 = sadd.s32 %s87, 1
    %s89 = scalar_select %p86, %s87, %s88
    %p92 = pneg %p86
    %p93 = scmp.eq.s32.totalorder %s9, 1
    %p94 = por %p92, %p93
    %p95 = scmp.ne.s32.totalorder %s87, %s90
    %p96 = scmp.eq.s32.totalorder %s9, 0
    %p97 = por %p95, %p96
    %p98 = scmp.ne.s32.totalorder %s87, %s90
    %p99 = scmp.eq.s32.totalorder %s14, 1
    %p100 = por %p98, %p99
    %p101 = scmp.ne.s32.totalorder %s90, %s91
    %p102 = scmp.eq.s32.totalorder %s14, 0
    %p103 = por %p101, %p102
    %p104 = scmp.ne.s32.totalorder %s90, %s91
    %p105 = scmp.eq.s32.totalorder %s15, 1
    %p106 = por %p104, %p105
    %p108 = scmp.ne.s32.totalorder %s91, %s107
    %p109 = scmp.eq.s32.totalorder %s15, 0
    %p110 = por %p108, %p109
    %p111 = scmp.le.s32.totalorder 1, %s9
    %p112 = scmp.lt.s32.totalorder %s9, 3
    %p113 = pnand %p111, %p112
    %p114 = pneg %p113
    // Predicated region
    $region9: #{decoder_block_forward.3} parent=5 // pred_check
      _
    $region10: #{decoder_block_forward.3} parent=5 // pred_check_branch
      %116 = sbr.rel (%p113) target = $region12
    $region11: #{decoder_block_forward.3} parent=5 // pred_region
      %s117 = ssub.s32 %s9, 1
      // Predicated region
      $region13: #{decoder_block_forward.3} parent=11 // pred_check
        %p118 = pneg %p56
      $region14: #{decoder_block_forward.3} parent=11 // pred_check_branch
        %120 = sbr.rel (%p118) target = $region16
      $region15: #{decoder_block_forward.3} parent=11 // pred_region
        _
      $region16: #{decoder_block_forward.3} parent=11 // pred_fallthru
        _
      // Predicated region
      $region17: #{decoder_block_forward.3} parent=11 // pred_check
        %p121 = pneg %p77
      $region18: #{decoder_block_forward.3} parent=11 // pred_check_branch
        %123 = sbr.rel (%p121) target = $region20
      $region19: #{decoder_block_forward.3} parent=11 // pred_region
        _
      $region20: #{decoder_block_forward.3} parent=11 // pred_fallthru
        _
    $region12: #{decoder_block_forward.3} parent=5 // pred_fallthru
      _
    %p124 = scmp.lt.s32.totalorder %s9, 2
    // Predicated region
    $region21: #{decoder_block_forward.3} parent=5 // pred_check
      %p125 = pneg %p124
    $region22: #{decoder_block_forward.3} parent=5 // pred_check_branch
      %127 = sbr.rel (%p125) target = $region24
    $region23: #{decoder_block_forward.3} parent=5 // pred_region
      // Predicated region
      $region25: #{decoder_block_forward.3} parent=23 // pred_check
        %p128 = pneg %p29
      $region26: #{decoder_block_forward.3} parent=23 // pred_check_branch
        %130 = sbr.rel (%p128) target = $region28
      $region27: #{decoder_block_forward.3} parent=23 // pred_region
        %p131 = scmp.lt.s32.totalorder %s9, 1
        %s132 = scalar_select %p131, %s9, 1
        %s133 = smul.addr %s132, 4
        %s134 = smul.addr %s133, 2
        %s135 = scalar_lea.vmem %s0, %s134
      $region28: #{decoder_block_forward.3} parent=23 // pred_fallthru
        _
    $region24: #{decoder_block_forward.3} parent=5 // pred_fallthru
      _
    %p136 = scmp.le.s32.totalorder 1, %s9
    %p137 = scmp.lt.s32.totalorder %s9, 3
    %p138 = pnand %p136, %p137
    %p139 = pneg %p138
    // Predicated region
    $region29: #{decoder_block_forward.3} parent=5 // pred_check
      _
    $region30: #{decoder_block_forward.3} parent=5 // pred_check_branch
      %141 = sbr.rel (%p138) target = $region32
    $region31: #{decoder_block_forward.3} parent=5 // pred_region
      %s142 = ssub.s32 %s9, 1
      %p143 = scmp.lt.s32.totalorder %s14, 1
      %s144 = scalar_select %p143, %s14, 1
      %s145 = smul.addr %s144, 4
      %s146 = smul.addr %s145, 2
      %s147 = scalar_lea.vmem %s0, %s146
      %p148 = pneg %p35
      %p149 = pneg %p32
      %p150 = pneg %p56
      %p151 = pneg %p53
      %p152 = pneg %p77
      %p153 = pneg %p74
      %p154 = pneg %p103
      %p155 = pneg %p100
      %p156 = scmp.lt.s32.totalorder %s14, 1
      %s157 = scalar_select %p156, %s14, 1
      %s158 = smul.addr %s157, 3
      %s159 = smul.addr %s158, 8
      %s160 = scalar_lea.vmem %s3, %s159
      %p161 = scmp.lt.s32.totalorder %s14, 1
      %s162 = scalar_select %p161, %s14, 1
      %s163 = smul.addr %s162, 4
      %s164 = smul.addr %s163, 2
      %s165 = scalar_lea.vmem %s0, %s164
      %p166 = scmp.lt.s32.totalorder %s14, 1
      %s167 = scalar_select %p166, %s14, 1
      %s168 = smul.addr %s167, 3
      %s169 = smul.addr %s168, 8
      %s170 = scalar_lea.vmem %s3, %s169
      %v172 = vld [vmem:[%s2] sm:$0x3]
      %v173 = vld [vmem:[%s165] sm:$0x3f]
      %v174 = vld [vmem:[%s165] sm:$0xff]
      %v175 = vld [vmem:[%s1] sm:$0x1]
      %s176 = scalar_lea.vmem %s1, 1
      %v177 = vld [vmem:[%s176] sm:$0x1]
      %v179 = vcombine.high %v174, %v174
      %v181 = vunpack.c.l.s4 1983009808
      %v182 = vunpack.c.0.s8 %v181
      %v183 = vlaneseq
      %v184 = vshrl.u32 %v183, 7
      %v185 = vsub.s32 %v182, %v184
      %v186 = vrot.slane %v174, %v185
      %v188 = vunpack.c.l.s4 1983009808
      %v189 = vunpack.c.0.s8 %v188
      %v190 = vlaneseq
      %v191 = vshrl.u32 %v190, 7
      %v192 = vsub.s32 %v189, %v191
      %v193 = vrot.slane %v179, %v192
      %v194 = vcombine.high %v186, %v186
      %v195 = vcombine.high %v193, %v193
      %196 = vrot.lane.b32.xlu0 %v186, 127
      %v197 = vpop.permute.xlu0 %196
      %198 = vrot.lane.b32.xlu0 %v194, 127
      %v199 = vpop.permute.xlu0 %198
      %200 = vrot.lane.b32.xlu0 %v193, 127
      %v201 = vpop.permute.xlu0 %200
      %202 = vrot.lane.b32.xlu0 %v195, 127
      %v203 = vpop.permute.xlu0 %202
      %vm204 = vcmask 1039360
      %v205 = vsel %vm204, %v197, %v199
      %v206 = vsel %vm204, %v199, %v201
      %v207 = vsel %vm204, %v201, %v203
      %vm208 = vcmask 31744
      %v210 = vsel %vm208, %v177, 0
      %vm212 = vcmask 1041408
      %v214 = vsel %vm212, %v205, 0
      %v217 = vsel %vm212, %v206, 0
      %v220 = vsel %vm212, %v207, 0
      %222 = vmatprep.subr.bf16.mxu0 %v217
      %223 = vmatpush1.bf16.msra.mxu0 %v214
      %224 = vmatprep.subr.bf16.mxu0 0
      %225 = vmatpush1.bf16.msra.mxu0 0
      %226 = vmatprep.subr.bf16.mxu0 0
      %227 = vmatpush1.bf16.msra.mxu0 0
      %228 = vmatprep.subr.bf16.mxu0 0
      %229 = vmatpush1.bf16.msra.mxu0 0
      %230 = vmatprep.subr.bf16.mxu0 0
      %231 = vmatpush1.bf16.msra.mxu0 0
      %232 = vmatprep.subr.bf16.mxu0 0
      %233 = vmatpush1.bf16.msra.mxu0 0
      %234 = vmatprep.subr.bf16.mxu0 0
      %235 = vmatpush1.bf16.msra.mxu0 0
      %236 = vmatprep.subr.bf16.mxu0 0
      %237 = vmatpush1.bf16.msra.mxu0 0
      %238 = vmatprep.subr.bf16.mxu0 0
      %239 = vmatpush1.bf16.msra.mxu0 0
      %240 = vmatprep.subr.bf16.mxu0 0
      %241 = vmatpush1.bf16.msra.mxu0 0
      %242 = vmatprep.subr.bf16.mxu0 0
      %243 = vmatpush1.bf16.msra.mxu0 0
      %244 = vmatprep.subr.bf16.mxu0 0
      %245 = vmatpush1.bf16.msra.mxu0 0
      %246 = vmatprep.subr.bf16.mxu0 0
      %247 = vmatpush1.bf16.msra.mxu0 0
      %248 = vmatprep.subr.bf16.mxu0 0
      %249 = vmatpush1.bf16.msra.mxu0 0
      %250 = vmatprep.subr.bf16.mxu0 0
      %251 = vmatpush1.bf16.msra.mxu0 0
      %252 = vmatprep.subr.bf16.mxu0 0
      %253 = vmatpush1.bf16.msra.mxu0 0
      %254 = vmatprep.mubr.bf16.mxu0 0
      %255 = vmatmul.mubr.bf16.gmra.mrb[0].mxu0 %v210
      %v256 = vpop.f32.mrb[0].mxu0
      %v257 = vadd.f32 0.0, %v256
      %v258 = vpop.f32.mrb[0].mxu0
      %v259 = vadd.f32 0.0, %v258
      %v260 = vpop.f32.mrb[0].mxu0
      %v261 = vpop.f32.mrb[0].mxu0
      %262 = vdwg.mxu0
      %263 = vmatprep.subr.bf16.mxu0 0
      %264 = vmatpush1.bf16.msra.mxu0 %v220
      %265 = vmatprep.subr.bf16.mxu0 0
      %266 = vmatpush1.bf16.msra.mxu0 0
      %267 = vmatprep.subr.bf16.mxu0 0
      %268 = vmatpush1.bf16.msra.mxu0 0
      %269 = vmatprep.subr.bf16.mxu0 0
      %270 = vmatpush1.bf16.msra.mxu0 0
      %271 = vmatprep.subr.bf16.mxu0 0
      %272 = vmatpush1.bf16.msra.mxu0 0
      %273 = vmatprep.subr.bf16.mxu0 0
      %274 = vmatpush1.bf16.msra.mxu0 0
      %275 = vmatprep.subr.bf16.mxu0 0
      %276 = vmatpush1.bf16.msra.mxu0 0
      %277 = vmatprep.subr.bf16.mxu0 0
      %278 = vmatpush1.bf16.msra.mxu0 0
      %279 = vmatprep.subr.bf16.mxu0 0
      %280 = vmatpush1.bf16.msra.mxu0 0
      %281 = vmatprep.subr.bf16.mxu0 0
      %282 = vmatpush1.bf16.msra.mxu0 0
      %283 = vmatprep.subr.bf16.mxu0 0
      %284 = vmatpush1.bf16.msra.mxu0 0
      %285 = vmatprep.subr.bf16.mxu0 0
      %286 = vmatpush1.bf16.msra.mxu0 0
      %287 = vmatprep.subr.bf16.mxu0 0
      %288 = vmatpush1.bf16.msra.mxu0 0
      %289 = vmatprep.subr.bf16.mxu0 0
      %290 = vmatpush1.bf16.msra.mxu0 0
      %291 = vmatprep.subr.bf16.mxu0 0
      %292 = vmatpush1.bf16.msra.mxu0 0
      %293 = vmatprep.subr.bf16.mxu0 0
      %294 = vmatpush1.bf16.msra.mxu0 0
      %295 = vmatprep.mubr.bf16.mxu0 0
      %296 = vmatmul.mubr.bf16.gmra.mrb[0].mxu0 %v210
      %v297 = vpop.f32.mrb[0].mxu0
      %v298 = vadd.f32 0.0, %v297
      %v299 = vpop.f32.mrb[0].mxu0
      %v300 = vpop.f32.mrb[0].mxu0
      %v301 = vpop.f32.mrb[0].mxu0
      %302 = vdwg.mxu0
      %v304 = vcombine.high %v173, %v173
      %v306 = vunpack.c.l.s4 1983009808
      %v307 = vunpack.c.0.s8 %v306
      %v308 = vlaneseq
      %v309 = vshrl.u32 %v308, 7
      %v310 = vsub.s32 %v307, %v309
      %v311 = vrot.slane %v173, %v310
      %v313 = vunpack.c.l.s4 1983009808
      %v314 = vunpack.c.0.s8 %v313
      %v315 = vlaneseq
      %v316 = vshrl.u32 %v315, 7
      %v317 = vsub.s32 %v314, %v316
      %v318 = vrot.slane %v304, %v317
      %v319 = vcombine.high %v311, %v311
      %v321 = vsel %vm208, %v175, 0
      %v324 = vsel %vm212, %v311, 0
      %v327 = vsel %vm212, %v319, 0
      %v330 = vsel %vm212, %v318, 0
      %332 = vmatprep.subr.bf16.mxu0 %v327
      %333 = vmatpush1.bf16.msra.mxu0 %v324
      %334 = vmatprep.subr.bf16.mxu0 0
      %335 = vmatpush1.bf16.msra.mxu0 0
      %336 = vmatprep.subr.bf16.mxu0 0
      %337 = vmatpush1.bf16.msra.mxu0 0
      %338 = vmatprep.subr.bf16.mxu0 0
      %339 = vmatpush1.bf16.msra.mxu0 0
      %340 = vmatprep.subr.bf16.mxu0 0
      %341 = vmatpush1.bf16.msra.mxu0 0
      %342 = vmatprep.subr.bf16.mxu0 0
      %343 = vmatpush1.bf16.msra.mxu0 0
      %344 = vmatprep.subr.bf16.mxu0 0
      %345 = vmatpush1.bf16.msra.mxu0 0
      %346 = vmatprep.subr.bf16.mxu0 0
      %347 = vmatpush1.bf16.msra.mxu0 0
      %348 = vmatprep.subr.bf16.mxu0 0
      %349 = vmatpush1.bf16.msra.mxu0 0
      %350 = vmatprep.subr.bf16.mxu0 0
      %351 = vmatpush1.bf16.msra.mxu0 0
      %352 = vmatprep.subr.bf16.mxu0 0
      %353 = vmatpush1.bf16.msra.mxu0 0
      %354 = vmatprep.subr.bf16.mxu0 0
      %355 = vmatpush1.bf16.msra.mxu0 0
      %356 = vmatprep.subr.bf16.mxu0 0
      %357 = vmatpush1.bf16.msra.mxu0 0
      %358 = vmatprep.subr.bf16.mxu0 0
      %359 = vmatpush1.bf16.msra.mxu0 0
      %360 = vmatprep.subr.bf16.mxu0 0
      %361 = vmatpush1.bf16.msra.mxu0 0
      %362 = vmatprep.subr.bf16.mxu0 0
      %363 = vmatpush1.bf16.msra.mxu0 0
      %364 = vmatprep.mubr.bf16.mxu0 0
      %365 = vmatmul.mubr.bf16.gmra.mrb[0].mxu0 %v321
      %v366 = vpop.f32.mrb[0].mxu0
      %v367 = vadd.f32 %v257, %v366
      %v368 = vpop.f32.mrb[0].mxu0
      %v369 = vadd.f32 %v259, %v368
      %v370 = vpop.f32.mrb[0].mxu0
      %v371 = vpop.f32.mrb[0].mxu0
      %372 = vdwg.mxu0
      %373 = vmatprep.subr.bf16.mxu0 0
      %374 = vmatpush1.bf16.msra.mxu0 %v330
      %375 = vmatprep.subr.bf16.mxu0 0
      %376 = vmatpush1.bf16.msra.mxu0 0
      %377 = vmatprep.subr.bf16.mxu0 0
      %378 = vmatpush1.bf16.msra.mxu0 0
      %379 = vmatprep.subr.bf16.mxu0 0
      %380 = vmatpush1.bf16.msra.mxu0 0
      %381 = vmatprep.subr.bf16.mxu0 0
      %382 = vmatpush1.bf16.msra.mxu0 0
      %383 = vmatprep.subr.bf16.mxu0 0
      %384 = vmatpush1.bf16.msra.mxu0 0
      %385 = vmatprep.subr.bf16.mxu0 0
      %386 = vmatpush1.bf16.msra.mxu0 0
      %387 = vmatprep.subr.bf16.mxu0 0
      %388 = vmatpush1.bf16.msra.mxu0 0
      %389 = vmatprep.subr.bf16.mxu0 0
      %390 = vmatpush1.bf16.msra.mxu0 0
      %391 = vmatprep.subr.bf16.mxu0 0
      %392 = vmatpush1.bf16.msra.mxu0 0
      %393 = vmatprep.subr.bf16.mxu0 0
      %394 = vmatpush1.bf16.msra.mxu0 0
      %395 = vmatprep.subr.bf16.mxu0 0
      %396 = vmatpush1.bf16.msra.mxu0 0
      %397 = vmatprep.subr.bf16.mxu0 0
      %398 = vmatpush1.bf16.msra.mxu0 0
      %399 = vmatprep.subr.bf16.mxu0 0
      %400 = vmatpush1.bf16.msra.mxu0 0
      %401 = vmatprep.subr.bf16.mxu0 0
      %402 = vmatpush1.bf16.msra.mxu0 0
      %403 = vmatprep.subr.bf16.mxu0 0
      %404 = vmatpush1.bf16.msra.mxu0 0
      %405 = vmatprep.mubr.bf16.mxu0 0
      %406 = vmatmul.mubr.bf16.gmra.mrb[0].mxu0 %v321
      %v407 = vpop.f32.mrb[0].mxu0
      %v408 = vadd.f32 %v298, %v407
      %v409 = vpop.f32.mrb[0].mxu0
      %v410 = vpop.f32.mrb[0].mxu0
      %v411 = vpop.f32.mrb[0].mxu0
      %412 = vdwg.mxu0
      %s413 = scalar_lea.vmem %s1, 2
      %v414 = vld [vmem:[%s413] sm:$0x1]
      %415 = vrot.lane.b32.xlu0 %v186, 110
      %v416 = vpop.permute.xlu0 %415
      %417 = vrot.lane.b32.xlu0 %v194, 110
      %v418 = vpop.permute.xlu0 %417
      %419 = vrot.lane.b32.xlu0 %v193, 110
      %v420 = vpop.permute.xlu0 %419
      %421 = vrot.lane.b32.xlu0 %v195, 110
      %v422 = vpop.permute.xlu0 %421
      %vm423 = vcmask 900096
      %v424 = vsel %vm423, %v416, %v418
      %v425 = vsel %vm423, %v418, %v420
      %v426 = vsel %vm423, %v420, %v422
      %v428 = vsel %vm208, %v414, 0
      %v431 = vsel %vm212, %v424, 0
      %v434 = vsel %vm212, %v425, 0
      %v437 = vsel %vm212, %v426, 0
      %439 = vmatprep.subr.bf16.mxu0 %v434
      %440 = vmatpush1.bf16.msra.mxu0 %v431
      %441 = vmatprep.subr.bf16.mxu0 0
      %442 = vmatpush1.bf16.msra.mxu0 0
      %443 = vmatprep.subr.bf16.mxu0 0
      %444 = vmatpush1.bf16.msra.mxu0 0
      %445 = vmatprep.subr.bf16.mxu0 0
      %446 = vmatpush1.bf16.msra.mxu0 0
      %447 = vmatprep.subr.bf16.mxu0 0
      %448 = vmatpush1.bf16.msra.mxu0 0
      %449 = vmatprep.subr.bf16.mxu0 0
      %450 = vmatpush1.bf16.msra.mxu0 0
      %451 = vmatprep.subr.bf16.mxu0 0
      %452 = vmatpush1.bf16.msra.mxu0 0
      %453 = vmatprep.subr.bf16.mxu0 0
      %454 = vmatpush1.bf16.msra.mxu0 0
      %455 = vmatprep.subr.bf16.mxu0 0
      %456 = vmatpush1.bf16.msra.mxu0 0
      %457 = vmatprep.subr.bf16.mxu0 0
      %458 = vmatpush1.bf16.msra.mxu0 0
      %459 = vmatprep.subr.bf16.mxu0 0
      %460 = vmatpush1.bf16.msra.mxu0 0
      %461 = vmatprep.subr.bf16.mxu0 0
      %462 = vmatpush1.bf16.msra.mxu0 0
      %463 = vmatprep.subr.bf16.mxu0 0
      %464 = vmatpush1.bf16.msra.mxu0 0
      %465 = vmatprep.subr.bf16.mxu0 0
      %466 = vmatpush1.bf16.msra.mxu0 0
      %467 = vmatprep.subr.bf16.mxu0 0
      %468 = vmatpush1.bf16.msra.mxu0 0
      %469 = vmatprep.subr.bf16.mxu0 0
      %470 = vmatpush1.bf16.msra.mxu0 0
      %471 = vmatprep.mubr.bf16.mxu0 0
      %472 = vmatmul.mubr.bf16.gmra.mrb[0].mxu0 %v428
      %v473 = vpop.f32.mrb[0].mxu0
      %v474 = vadd.f32 0.0, %v473
      %v475 = vpop.f32.mrb[0].mxu0
      %v476 = vadd.f32 0.0, %v475
      %v477 = vpop.f32.mrb[0].mxu0
      %v478 = vpop.f32.mrb[0].mxu0
      %479 = vdwg.mxu0
      %480 = vmatprep.subr.bf16.mxu0 0
      %481 = vmatpush1.bf16.msra.mxu0 %v437
      %482 = vmatprep.subr.bf16.mxu0 0
      %483 = vmatpush1.bf16.msra.mxu0 0
      %484 = vmatprep.subr.bf16.mxu0 0
      %485 = vmatpush1.bf16.msra.mxu0 0
      %486 = vmatprep.subr.bf16.mxu0 0
      %487 = vmatpush1.bf16.msra.mxu0 0
      %488 = vmatprep.subr.bf16.mxu0 0
      %489 = vmatpush1.bf16.msra.mxu0 0
      %490 = vmatprep.subr.bf16.mxu0 0
      %491 = vmatpush1.bf16.msra.mxu0 0
      %492 = vmatprep.subr.bf16.mxu0 0
      %493 = vmatpush1.bf16.msra.mxu0 0
      %494 = vmatprep.subr.bf16.mxu0 0
      %495 = vmatpush1.bf16.msra.mxu0 0
      %496 = vmatprep.subr.bf16.mxu0 0
      %497 = vmatpush1.bf16.msra.mxu0 0
      %498 = vmatprep.subr.bf16.mxu0 0
      %499 = vmatpush1.bf16.msra.mxu0 0
      %500 = vmatprep.subr.bf16.mxu0 0
      %501 = vmatpush1.bf16.msra.mxu0 0
      %502 = vmatprep.subr.bf16.mxu0 0
      %503 = vmatpush1.bf16.msra.mxu0 0
      %504 = vmatprep.subr.bf16.mxu0 0
      %505 = vmatpush1.bf16.msra.mxu0 0
      %506 = vmatprep.subr.bf16.mxu0 0
      %507 = vmatpush1.bf16.msra.mxu0 0
      %508 = vmatprep.subr.bf16.mxu0 0
      %509 = vmatpush1.bf16.msra.mxu0 0
      %510 = vmatprep.subr.bf16.mxu0 0
      %511 = vmatpush1.bf16.msra.mxu0 0
      %512 = vmatprep.mubr.bf16.mxu0 0
      %513 = vmatmul.mubr.bf16.gmra.mrb[0].mxu0 %v428
      %v514 = vpop.f32.mrb[0].mxu0
      %v515 = vadd.f32 0.0, %v514
      %v516 = vpop.f32.mrb[0].mxu0
      %v517 = vpop.f32.mrb[0].mxu0
      %v518 = vpop.f32.mrb[0].mxu0
      %519 = vdwg.mxu0
      %v520 = vadd.f32 %v367, %v474
      %v521 = vadd.f32 %v369, %v476
      %v522 = vadd.f32 %v408, %v515
      %s523 = scalar_lea.vmem %s1, 3
      %v524 = vld [vmem:[%s523] sm:$0x1]
      %525 = vrot.lane.b32.xlu0 %v186, 109
      %v526 = vpop.permute.xlu0 %525
      %527 = vrot.lane.b32.xlu0 %v194, 109
      %v528 = vpop.permute.xlu0 %527
      %529 = vrot.lane.b32.xlu0 %v193, 109
      %v530 = vpop.permute.xlu0 %529
      %531 = vrot.lane.b32.xlu0 %v195, 109
      %v532 = vpop.permute.xlu0 %531
      %vm533 = vcmask 891904
      %v534 = vsel %vm533, %v526, %v528
      %v535 = vsel %vm533, %v528, %v530
      %v536 = vsel %vm533, %v530, %v532
      %v538 = vsel %vm208, %v524, 0
      %v541 = vsel %vm212, %v534, 0
      %v544 = vsel %vm212, %v535, 0
      %v547 = vsel %vm212, %v536, 0
      %549 = vmatprep.subr.bf16.mxu0 %v544
      %550 = vmatpush1.bf16.msra.mxu0 %v541
      %551 = vmatprep.subr.bf16.mxu0 0
      %552 = vmatpush1.bf16.msra.mxu0 0
      %553 = vmatprep.subr.bf16.mxu0 0
      %554 = vmatpush1.bf16.msra.mxu0 0
      %555 = vmatprep.subr.bf16.mxu0 0
      %556 = vmatpush1.bf16.msra.mxu0 0
      %557 = vmatprep.subr.bf16.mxu0 0
      %558 = vmatpush1.bf16.msra.mxu0 0
      %559 = vmatprep.subr.bf16.mxu0 0
      %560 = vmatpush1.bf16.msra.mxu0 0
      %561 = vmatprep.subr.bf16.mxu0 0
      %562 = vmatpush1.bf16.msra.mxu0 0
      %563 = vmatprep.subr.bf16.mxu0 0
      %564 = vmatpush1.bf16.msra.mxu0 0
      %565 = vmatprep.subr.bf16.mxu0 0
      %566 = vmatpush1.bf16.msra.mxu0 0
      %567 = vmatprep.subr.bf16.mxu0 0
      %568 = vmatpush1.bf16.msra.mxu0 0
      %569 = vmatprep.subr.bf16.mxu0 0
      %570 = vmatpush1.bf16.msra.mxu0 0
      %571 = vmatprep.subr.bf16.mxu0 0
      %572 = vmatpush1.bf16.msra.mxu0 0
      %573 = vmatprep.subr.bf16.mxu0 0
      %574 = vmatpush1.bf16.msra.mxu0 0
      %575 = vmatprep.subr.bf16.mxu0 0
      %576 = vmatpush1.bf16.msra.mxu0 0
      %577 = vmatprep.subr.bf16.mxu0 0
      %578 = vmatpush1.bf16.msra.mxu0 0
      %579 = vmatprep.subr.bf16.mxu0 0
      %580 = vmatpush1.bf16.msra.mxu0 0
      %581 = vmatprep.mubr.bf16.mxu0 0
      %582 = vmatmul.mubr.bf16.gmra.mrb[0].mxu0 %v538
      %v583 = vpop.f32.mrb[0].mxu0
      %v584 = vadd.f32 0.0, %v583
      %v585 = vpop.f32.mrb[0].mxu0
      %v586 = vadd.f32 0.0, %v585
      %v587 = vpop.f32.mrb[0].mxu0
      %v588 = vpop.f32.mrb[0].mxu0
      %589 = vdwg.mxu0
      %590 = vmatprep.subr.bf16.mxu0 0
      %591 = vmatpush1.bf16.msra.mxu0 %v547
      %592 = vmatprep.subr.bf16.mxu0 0
      %593 = vmatpush1.bf16.msra.mxu0 0
      %594 = vmatprep.subr.bf16.mxu0 0
      %595 = vmatpush1.bf16.msra.mxu0 0
      %596 = vmatprep.subr.bf16.mxu0 0
      %597 = vmatpush1.bf16.msra.mxu0 0
      %598 = vmatprep.subr.bf16.mxu0 0
      %599 = vmatpush1.bf16.msra.mxu0 0
      %600 = vmatprep.subr.bf16.mxu0 0
      %601 = vmatpush1.bf16.msra.mxu0 0
      %602 = vmatprep.subr.bf16.mxu0 0
      %603 = vmatpush1.bf16.msra.mxu0 0
      %604 = vmatprep.subr.bf16.mxu0 0
      %605 = vmatpush1.bf16.msra.mxu0 0
      %606 = vmatprep.subr.bf16.mxu0 0
      %607 = vmatpush1.bf16.msra.mxu0 0
      %608 = vmatprep.subr.bf16.mxu0 0
      %609 = vmatpush1.bf16.msra.mxu0 0
      %610 = vmatprep.subr.bf16.mxu0 0
      %611 = vmatpush1.bf16.msra.mxu0 0
      %612 = vmatprep.subr.bf16.mxu0 0
      %613 = vmatpush1.bf16.msra.mxu0 0
      %614 = vmatprep.subr.bf16.mxu0 0
      %615 = vmatpush1.bf16.msra.mxu0 0
      %616 = vmatprep.subr.bf16.mxu0 0
      %617 = vmatpush1.bf16.msra.mxu0 0
      %618 = vmatprep.subr.bf16.mxu0 0
      %619 = vmatpush1.bf16.msra.mxu0 0
      %620 = vmatprep.subr.bf16.mxu0 0
      %621 = vmatpush1.bf16.msra.mxu0 0
      %622 = vmatprep.mubr.bf16.mxu0 0
      %623 = vmatmul.mubr.bf16.gmra.mrb[0].mxu0 %v538
      %v624 = vpop.f32.mrb[0].mxu0
      %v625 = vadd.f32 0.0, %v624
      %v626 = vpop.f32.mrb[0].mxu0
      %v627 = vpop.f32.mrb[0].mxu0
      %v628 = vpop.f32.mrb[0].mxu0
      %629 = vdwg.mxu0
      %v630 = vadd.f32 %v520, %v584
      %v631 = vadd.f32 %v521, %v586
      %v632 = vadd.f32 %v522, %v625
      %634 = vset.pattern.permute.xlu0 0
      %635 = vperm.xlu0 %634, %v172
      %v636 = vpop.permute.xlu0 %635
      %v638 = vadd.f32 %v630, %v636
      %v639 = vadd.f32 %v631, %v636
      %v640 = vadd.f32 %v632, %v636
      %vm641 = vcmp.gt.f32.partialorder %v638, 0.0
      %vm642 = vcmp.gt.f32.partialorder %v639, 0.0
      %vm643 = vcmp.gt.f32.partialorder %v640, 0.0
      %v644 = vmul.f32 %v638, 0.01
      %v645 = vmul.f32 %v639, 0.01
      %v646 = vmul.f32 %v640, 0.01
      %v647 = vsel %vm641, %v638, %v644
      %v648 = vsel %vm642, %v639, %v645
      %v649 = vsel %vm643, %v640, %v646
      %650 = vst [vmem:[%s170] sm:$0x3] %v647
      %651 = vst [vmem:[%s170 + $0x8] sm:$0x3] %v648
      %652 = vst [vmem:[%s170 + $0x10] sm:$0x3] %v649
      %s653 = scalar_lea.vmem %s1, 4
      %v654 = vld [vmem:[%s653] sm:$0x1]
      %s655 = scalar_lea.vmem %s1, 5
      %v656 = vld [vmem:[%s655] sm:$0x1]
      %657 = vrot.lane.b32.xlu0 %v186, 126
      %v658 = vpop.permute.xlu0 %657
      %659 = vrot.lane.b32.xlu0 %v194, 126
      %v660 = vpop.permute.xlu0 %659
      %661 = vrot.lane.b32.xlu0 %v193, 126
      %v662 = vpop.permute.xlu0 %661
      %663 = vrot.lane.b32.xlu0 %v195, 126
      %v664 = vpop.permute.xlu0 %663
      %vm665 = vcmask 1031168
      %v666 = vsel %vm665, %v658, %v660
      %v667 = vsel %vm665, %v660, %v662
      %v668 = vsel %vm665, %v662, %v664
      %v670 = vsel %vm208, %v656, 0
      %v673 = vsel %vm212, %v666, 0
      %v676 = vsel %vm212, %v667, 0
      %v679 = vsel %vm212, %v668, 0
      %681 = vmatprep.subr.bf16.mxu0 %v676
      %682 = vmatpush1.bf16.msra.mxu0 %v673
      %683 = vmatprep.subr.bf16.mxu0 0
      %684 = vmatpush1.bf16.msra.mxu0 0
      %685 = vmatprep.subr.bf16.mxu0 0
      %686 = vmatpush1.bf16.msra.mxu0 0
      %687 = vmatprep.subr.bf16.mxu0 0
      %688 = vmatpush1.bf16.msra.mxu0 0
      %689 = vmatprep.subr.bf16.mxu0 0
      %690 = vmatpush1.bf16.msra.mxu0 0
      %691 = vmatprep.subr.bf16.mxu0 0
      %692 = vmatpush1.bf16.msra.mxu0 0
      %693 = vmatprep.subr.bf16.mxu0 0
      %694 = vmatpush1.bf16.msra.mxu0 0
      %695 = vmatprep.subr.bf16.mxu0 0
      %696 = vmatpush1.bf16.msra.mxu0 0
      %697 = vmatprep.subr.bf16.mxu0 0
      %698 = vmatpush1.bf16.msra.mxu0 0
      %699 = vmatprep.subr.bf16.mxu0 0
      %700 = vmatpush1.bf16.msra.mxu0 0
      %701 = vmatprep.subr.bf16.mxu0 0
      %702 = vmatpush1.bf16.msra.mxu0 0
      %703 = vmatprep.subr.bf16.mxu0 0
      %704 = vmatpush1.bf16.msra.mxu0 0
      %705 = vmatprep.subr.bf16.mxu0 0
      %706 = vmatpush1.bf16.msra.mxu0 0
      %707 = vmatprep.subr.bf16.mxu0 0
      %708 = vmatpush1.bf16.msra.mxu0 0
      %709 = vmatprep.subr.bf16.mxu0 0
      %710 = vmatpush1.bf16.msra.mxu0 0
      %711 = vmatprep.subr.bf16.mxu0 0
      %712 = vmatpush1.bf16.msra.mxu0 0
      %713 = vmatprep.mubr.bf16.mxu0 0
      %714 = vmatmul.mubr.bf16.gmra.mrb[0].mxu0 %v670
      %v715 = vpop.f32.mrb[0].mxu0
      %v716 = vadd.f32 0.0, %v715
      %v717 = vpop.f32.mrb[0].mxu0
      %v718 = vadd.f32 0.0, %v717
      %v719 = vpop.f32.mrb[0].mxu0
      %v720 = vpop.f32.mrb[0].mxu0
      %721 = vdwg.mxu0
      %722 = vmatprep.subr.bf16.mxu0 0
      %723 = vmatpush1.bf16.msra.mxu0 %v679
      %724 = vmatprep.subr.bf16.mxu0 0
      %725 = vmatpush1.bf16.msra.mxu0 0
      %726 = vmatprep.subr.bf16.mxu0 0
      %727 = vmatpush1.bf16.msra.mxu0 0
      %728 = vmatprep.subr.bf16.mxu0 0
      %729 = vmatpush1.bf16.msra.mxu0 0
      %730 = vmatprep.subr.bf16.mxu0 0
      %731 = vmatpush1.bf16.msra.mxu0 0
      %732 = vmatprep.subr.bf16.mxu0 0
      %733 = vmatpush1.bf16.msra.mxu0 0
      %734 = vmatprep.subr.bf16.mxu0 0
      %735 = vmatpush1.bf16.msra.mxu0 0
      %736 = vmatprep.subr.bf16.mxu0 0
      %737 = vmatpush1.bf16.msra.mxu0 0
      %738 = vmatprep.subr.bf16.mxu0 0
      %739 = vmatpush1.bf16.msra.mxu0 0
      %740 = vmatprep.subr.bf16.mxu0 0
      %741 = vmatpush1.bf16.msra.mxu0 0
      %742 = vmatprep.subr.bf16.mxu0 0
      %743 = vmatpush1.bf16.msra.mxu0 0
      %744 = vmatprep.subr.bf16.mxu0 0
      %745 = vmatpush1.bf16.msra.mxu0 0
      %746 = vmatprep.subr.bf16.mxu0 0
      %747 = vmatpush1.bf16.msra.mxu0 0
      %748 = vmatprep.subr.bf16.mxu0 0
      %749 = vmatpush1.bf16.msra.mxu0 0
      %750 = vmatprep.subr.bf16.mxu0 0
      %751 = vmatpush1.bf16.msra.mxu0 0
      %752 = vmatprep.subr.bf16.mxu0 0
      %753 = vmatpush1.bf16.msra.mxu0 0
      %754 = vmatprep.mubr.bf16.mxu0 0
      %755 = vmatmul.mubr.bf16.gmra.mrb[0].mxu0 %v670
      %v756 = vpop.f32.mrb[0].mxu0
      %v757 = vadd.f32 0.0, %v756
      %v758 = vpop.f32.mrb[0].mxu0
      %v759 = vpop.f32.mrb[0].mxu0
      %v760 = vpop.f32.mrb[0].mxu0
      %761 = vdwg.mxu0
      %v763 = vsel %vm208, %v654, 0
      %765 = vmatprep.subr.bf16.mxu0 %v217
      %766 = vmatpush1.bf16.msra.mxu0 %v214
      %767 = vmatprep.subr.bf16.mxu0 0
      %768 = vmatpush1.bf16.msra.mxu0 0
      %769 = vmatprep.subr.bf16.mxu0 0
      %770 = vmatpush1.bf16.msra.mxu0 0
      %771 = vmatprep.subr.bf16.mxu0 0
      %772 = vmatpush1.bf16.msra.mxu0 0
      %773 = vmatprep.subr.bf16.mxu0 0
      %774 = vmatpush1.bf16.msra.mxu0 0
      %775 = vmatprep.subr.bf16.mxu0 0
      %776 = vmatpush1.bf16.msra.mxu0 0
      %777 = vmatprep.subr.bf16.mxu0 0
      %778 = vmatpush1.bf16.msra.mxu0 0
      %779 = vmatprep.subr.bf16.mxu0 0
      %780 = vmatpush1.bf16.msra.mxu0 0
      %781 = vmatprep.subr.bf16.mxu0 0
      %782 = vmatpush1.bf16.msra.mxu0 0
      %783 = vmatprep.subr.bf16.mxu0 0
      %784 = vmatpush1.bf16.msra.mxu0 0
      %785 = vmatprep.subr.bf16.mxu0 0
      %786 = vmatpush1.bf16.msra.mxu0 0
      %787 = vmatprep.subr.bf16.mxu0 0
      %788 = vmatpush1.bf16.msra.mxu0 0
      %789 = vmatprep.subr.bf16.mxu0 0
      %790 = vmatpush1.bf16.msra.mxu0 0
      %791 = vmatprep.subr.bf16.mxu0 0
      %792 = vmatpush1.bf16.msra.mxu0 0
      %793 = vmatprep.subr.bf16.mxu0 0
      %794 = vmatpush1.bf16.msra.mxu0 0
      %795 = vmatprep.subr.bf16.mxu0 0
      %796 = vmatpush1.bf16.msra.mxu0 0
      %797 = vmatprep.mubr.bf16.mxu0 0
      %798 = vmatmul.mubr.bf16.gmra.mrb[0].mxu0 %v763
      %v799 = vpop.f32.mrb[0].mxu0
      %v800 = vadd.f32 %v716, %v799
      %v801 = vpop.f32.mrb[0].mxu0
      %v802 = vadd.f32 %v718, %v801
      %v803 = vpop.f32.mrb[0].mxu0
      %v804 = vpop.f32.mrb[0].mxu0
      %805 = vdwg.mxu0
      %806 = vmatprep.subr.bf16.mxu0 0
      %807 = vmatpush1.bf16.msra.mxu0 %v220
      %808 = vmatprep.subr.bf16.mxu0 0
      %809 = vmatpush1.bf16.msra.mxu0 0
      %810 = vmatprep.subr.bf16.mxu0 0
      %811 = vmatpush1.bf16.msra.mxu0 0
      %812 = vmatprep.subr.bf16.mxu0 0
      %813 = vmatpush1.bf16.msra.mxu0 0
      %814 = vmatprep.subr.bf16.mxu0 0
      %815 = vmatpush1.bf16.msra.mxu0 0
      %816 = vmatprep.subr.bf16.mxu0 0
      %817 = vmatpush1.bf16.msra.mxu0 0
      %818 = vmatprep.subr.bf16.mxu0 0
      %819 = vmatpush1.bf16.msra.mxu0 0
      %820 = vmatprep.subr.bf16.mxu0 0
      %821 = vmatpush1.bf16.msra.mxu0 0
      %822 = vmatprep.subr.bf16.mxu0 0
      %823 = vmatpush1.bf16.msra.mxu0 0
      %824 = vmatprep.subr.bf16.mxu0 0
      %825 = vmatpush1.bf16.msra.mxu0 0
      %826 = vmatprep.subr.bf16.mxu0 0
      %827 = vmatpush1.bf16.msra.mxu0 0
      %828 = vmatprep.subr.bf16.mxu0 0
      %829 = vmatpush1.bf16.msra.mxu0 0
      %830 = vmatprep.subr.bf16.mxu0 0
      %831 = vmatpush1.bf16.msra.mxu0 0
      %832 = vmatprep.subr.bf16.mxu0 0
      %833 = vmatpush1.bf16.msra.mxu0 0
      %834 = vmatprep.subr.bf16.mxu0 0
      %835 = vmatpush1.bf16.msra.mxu0 0
      %836 = vmatprep.subr.bf16.mxu0 0
      %837 = vmatpush1.bf16.msra.mxu0 0
      %838 = vmatprep.mubr.bf16.mxu0 0
      %839 = vmatmul.mubr.bf16.gmra.mrb[0].mxu0 %v763
      %v840 = vpop.f32.mrb[0].mxu0
      %v841 = vadd.f32 %v757, %v840
      %v842 = vpop.f32.mrb[0].mxu0
      %v843 = vpop.f32.mrb[0].mxu0
      %v844 = vpop.f32.mrb[0].mxu0
      %845 = vdwg.mxu0
      %s846 = scalar_lea.vmem %s1, 6
      %v847 = vld [vmem:[%s846] sm:$0x1]
      %v849 = vsel %vm208, %v847, 0
      %851 = vmatprep.subr.bf16.mxu0 %v544
      %852 = vmatpush1.bf16.msra.mxu0 %v541
      %853 = vmatprep.subr.bf16.mxu0 0
      %854 = vmatpush1.bf16.msra.mxu0 0
      %855 = vmatprep.subr.bf16.mxu0 0
      %856 = vmatpush1.bf16.msra.mxu0 0
      %857 = vmatprep.subr.bf16.mxu0 0
      %858 = vmatpush1.bf16.msra.mxu0 0
      %859 = vmatprep.subr.bf16.mxu0 0
      %860 = vmatpush1.bf16.msra.mxu0 0
      %861 = vmatprep.subr.bf16.mxu0 0
      %862 = vmatpush1.bf16.msra.mxu0 0
      %863 = vmatprep.subr.bf16.mxu0 0
      %864 = vmatpush1.bf16.msra.mxu0 0
      %865 = vmatprep.subr.bf16.mxu0 0
      %866 = vmatpush1.bf16.msra.mxu0 0
      %867 = vmatprep.subr.bf16.mxu0 0
      %868 = vmatpush1.bf16.msra.mxu0 0
      %869 = vmatprep.subr.bf16.mxu0 0
      %870 = vmatpush1.bf16.msra.mxu0 0
      %871 = vmatprep.subr.bf16.mxu0 0
      %872 = vmatpush1.bf16.msra.mxu0 0
      %873 = vmatprep.subr.bf16.mxu0 0
      %874 = vmatpush1.bf16.msra.mxu0 0
      %875 = vmatprep.subr.bf16.mxu0 0
      %876 = vmatpush1.bf16.msra.mxu0 0
      %877 = vmatprep.subr.bf16.mxu0 0
      %878 = vmatpush1.bf16.msra.mxu0 0
      %879 = vmatprep.subr.bf16.mxu0 0
      %880 = vmatpush1.bf16.msra.mxu0 0
      %881 = vmatprep.subr.bf16.mxu0 0
      %882 = vmatpush1.bf16.msra.mxu0 0
      %883 = vmatprep.mubr.bf16.mxu0 0
      %884 = vmatmul.mubr.bf16.gmra.mrb[0].mxu0 %v849
      %v885 = vpop.f32.mrb[0].mxu0
      %v886 = vadd.f32 0.0, %v885
      %v887 = vpop.f32.mrb[0].mxu0
      %v888 = vadd.f32 0.0, %v887
      %v889 = vpop.f32.mrb[0].mxu0
      %v890 = vpop.f32.mrb[0].mxu0
      %891 = vdwg.mxu0
      %892 = vmatprep.subr.bf16.mxu0 0
      %893 = vmatpush1.bf16.msra.mxu0 %v547
      %894 = vmatprep.subr.bf16.mxu0 0
      %895 = vmatpush1.bf16.msra.mxu0 0
      %896 = vmatprep.subr.bf16.mxu0 0
      %897 = vmatpush1.bf16.msra.mxu0 0
      %898 = vmatprep.subr.bf16.mxu0 0
      %899 = vmatpush1.bf16.msra.mxu0 0
      %900 = vmatprep.subr.bf16.mxu0 0
      %901 = vmatpush1.bf16.msra.mxu0 0
      %902 = vmatprep.subr.bf16.mxu0 0
      %903 = vmatpush1.bf16.msra.mxu0 0
      %904 = vmatprep.subr.bf16.mxu0 0
      %905 = vmatpush1.bf16.msra.mxu0 0
      %906 = vmatprep.subr.bf16.mxu0 0
      %907 = vmatpush1.bf16.msra.mxu0 0
      %908 = vmatprep.subr.bf16.mxu0 0
      %909 = vmatpush1.bf16.msra.mxu0 0
      %910 = vmatprep.subr.bf16.mxu0 0
      %911 = vmatpush1.bf16.msra.mxu0 0
      %912 = vmatprep.subr.bf16.mxu0 0
      %913 = vmatpush1.bf16.msra.mxu0 0
      %914 = vmatprep.subr.bf16.mxu0 0
      %915 = vmatpush1.bf16.msra.mxu0 0
      %916 = vmatprep.subr.bf16.mxu0 0
      %917 = vmatpush1.bf16.msra.mxu0 0
      %918 = vmatprep.subr.bf16.mxu0 0
      %919 = vmatpush1.bf16.msra.mxu0 0
      %920 = vmatprep.subr.bf16.mxu0 0
      %921 = vmatpush1.bf16.msra.mxu0 0
      %922 = vmatprep.subr.bf16.mxu0 0
      %923 = vmatpush1.bf16.msra.mxu0 0
      %924 = vmatprep.mubr.bf16.mxu0 0
      %925 = vmatmul.mubr.bf16.gmra.mrb[0].mxu0 %v849
      %v926 = vpop.f32.mrb[0].mxu0
      %v927 = vadd.f32 0.0, %v926
      %v928 = vpop.f32.mrb[0].mxu0
      %v929 = vpop.f32.mrb[0].mxu0
      %v930 = vpop.f32.mrb[0].mxu0
      %931 = vdwg.mxu0
      %v932 = vadd.f32 %v800, %v886
      %v933 = vadd.f32 %v802, %v888
      %v934 = vadd.f32 %v841, %v927
      %s935 = scalar_lea.vmem %s1, 7
      %v936 = vld [vmem:[%s935] sm:$0x1]
      %937 = vrot.lane.b32.xlu0 %v186, 108
      %v938 = vpop.permute.xlu0 %937
      %939 = vrot.lane.b32.xlu0 %v194, 108
      %v940 = vpop.permute.xlu0 %939
      %941 = vrot.lane.b32.xlu0 %v193, 108
      %v942 = vpop.permute.xlu0 %941
      %943 = vrot.lane.b32.xlu0 %v195, 108
      %v944 = vpop.permute.xlu0 %943
      %vm945 = vcmask 883712
      %v946 = vsel %vm945, %v938, %v940
      %v947 = vsel %vm945, %v940, %v942
      %v948 = vsel %vm945, %v942, %v944
      %v950 = vsel %vm208, %v936, 0
      %v953 = vsel %vm212, %v946, 0
      %v956 = vsel %vm212, %v947, 0
      %v959 = vsel %vm212, %v948, 0
      %961 = vmatprep.subr.bf16.mxu0 %v956
      %962 = vmatpush1.bf16.msra.mxu0 %v953
      %963 = vmatprep.subr.bf16.mxu0 0
      %964 = vmatpush1.bf16.msra.mxu0 0
      %965 = vmatprep.subr.bf16.mxu0 0
      %966 = vmatpush1.bf16.msra.mxu0 0
      %967 = vmatprep.subr.bf16.mxu0 0
      %968 = vmatpush1.bf16.msra.mxu0 0
      %969 = vmatprep.subr.bf16.mxu0 0
      %970 = vmatpush1.bf16.msra.mxu0 0
      %971 = vmatprep.subr.bf16.mxu0 0
      %972 = vmatpush1.bf16.msra.mxu0 0
      %973 = vmatprep.subr.bf16.mxu0 0
      %974 = vmatpush1.bf16.msra.mxu0 0
      %975 = vmatprep.subr.bf16.mxu0 0
      %976 = vmatpush1.bf16.msra.mxu0 0
      %977 = vmatprep.subr.bf16.mxu0 0
      %978 = vmatpush1.bf16.msra.mxu0 0
      %979 = vmatprep.subr.bf16.mxu0 0
      %980 = vmatpush1.bf16.msra.mxu0 0
      %981 = vmatprep.subr.bf16.mxu0 0
      %982 = vmatpush1.bf16.msra.mxu0 0
      %983 = vmatprep.subr.bf16.mxu0 0
      %984 = vmatpush1.bf16.msra.mxu0 0
      %985 = vmatprep.subr.bf16.mxu0 0
      %986 = vmatpush1.bf16.msra.mxu0 0
      %987 = vmatprep.subr.bf16.mxu0 0
      %988 = vmatpush1.bf16.msra.mxu0 0
      %989 = vmatprep.subr.bf16.mxu0 0
      %990 = vmatpush1.bf16.msra.mxu0 0
      %991 = vmatprep.subr.bf16.mxu0 0
      %992 = vmatpush1.bf16.msra.mxu0 0
      %993 = vmatprep.mubr.bf16.mxu0 0
      %994 = vmatmul.mubr.bf16.gmra.mrb[0].mxu0 %v950
      %v995 = vpop.f32.mrb[0].mxu0
      %v996 = vadd.f32 0.0, %v995
      %v997 = vpop.f32.mrb[0].mxu0
      %v998 = vadd.f32 0.0, %v997
      %v999 = vpop.f32.mrb[0].mxu0
      %v1000 = vpop.f32.mrb[0].mxu0
      %1001 = vdwg.mxu0
      %1002 = vmatprep.subr.bf16.mxu0 0
      %1003 = vmatpush1.bf16.msra.mxu0 %v959
      %1004 = vmatprep.subr.bf16.mxu0 0
      %1005 = vmatpush1.bf16.msra.mxu0 0
      %1006 = vmatprep.subr.bf16.mxu0 0
      %1007 = vmatpush1.bf16.msra.mxu0 0
      %1008 = vmatprep.subr.bf16.mxu0 0
      %1009 = vmatpush1.bf16.msra.mxu0 0
      %1010 = vmatprep.subr.bf16.mxu0 0
      %1011 = vmatpush1.bf16.msra.mxu0 0
      %1012 = vmatprep.subr.bf16.mxu0 0
      %1013 = vmatpush1.bf16.msra.mxu0 0
      %1014 = vmatprep.subr.bf16.mxu0 0
      %1015 = vmatpush1.bf16.msra.mxu0 0
      %1016 = vmatprep.subr.bf16.mxu0 0
      %1017 = vmatpush1.bf16.msra.mxu0 0
      %1018 = vmatprep.subr.bf16.mxu0 0
      %1019 = vmatpush1.bf16.msra.mxu0 0
      %1020 = vmatprep.subr.bf16.mxu0 0
      %1021 = vmatpush1.bf16.msra.mxu0 0
      %1022 = vmatprep.subr.bf16.mxu0 0
      %1023 = vmatpush1.bf16.msra.mxu0 0
      %1024 = vmatprep.subr.bf16.mxu0 0
      %1025 = vmatpush1.bf16.msra.mxu0 0
      %1026 = vmatprep.subr.bf16.mxu0 0
      %1027 = vmatpush1.bf16.msra.mxu0 0
      %1028 = vmatprep.subr.bf16.mxu0 0
      %1029 = vmatpush1.bf16.msra.mxu0 0
      %1030 = vmatprep.subr.bf16.mxu0 0
      %1031 = vmatpush1.bf16.msra.mxu0 0
      %1032 = vmatprep.subr.bf16.mxu0 0
      %1033 = vmatpush1.bf16.msra.mxu0 0
      %1034 = vmatprep.mubr.bf16.mxu0 0
      %1035 = vmatmul.mubr.bf16.gmra.mrb[0].mxu0 %v950
      %v1036 = vpop.f32.mrb[0].mxu0
      %v1037 = vadd.f32 0.0, %v1036
      %v1038 = vpop.f32.mrb[0].mxu0
      %v1039 = vpop.f32.mrb[0].mxu0
      %v1040 = vpop.f32.mrb[0].mxu0
      %1041 = vdwg.mxu0
      %v1042 = vadd.f32 %v932, %v996
      %v1043 = vadd.f32 %v933, %v998
      %v1044 = vadd.f32 %v934, %v1037
      %v1045 = vadd.f32 %v1042, %v636
      %v1046 = vadd.f32 %v1043, %v636
      %v1047 = vadd.f32 %v1044, %v636
      %vm1048 = vcmp.gt.f32.partialorder %v1045, 0.0
      %vm1049 = vcmp.gt.f32.partialorder %v1046, 0.0
      %vm1050 = vcmp.gt.f32.partialorder %v1047, 0.0
      %v1051 = vmul.f32 %v1045, 0.01
      %v1052 = vmul.f32 %v1046, 0.01
      %v1053 = vmul.f32 %v1047, 0.01
      %v1054 = vsel %vm1048, %v1045, %v1051
      %v1055 = vsel %vm1049, %v1046, %v1052
      %v1056 = vsel %vm1050, %v1047, %v1053
      %v1060 = vrot.slane %v1054, 6
      %v1061 = vrot.slane %v1055, 6
      %v1062 = vrot.slane %v1056, 6
      %1066 = vst [vmem:[%s170] sm:$0xc] %v1060
      %1067 = vst [vmem:[%s170 + $0x8] sm:$0xc] %v1061
      %1068 = vst [vmem:[%s170 + $0x10] sm:$0xc] %v1062
      %s1069 = scalar_lea.vmem %s1, 8
      %v1070 = vld [vmem:[%s1069] sm:$0x1]
      %s1071 = scalar_lea.vmem %s1, 9
      %v1072 = vld [vmem:[%s1071] sm:$0x1]
      %v1074 = vsel %vm208, %v1072, 0
      %1076 = vmatprep.subr.bf16.mxu0 %v544
      %1077 = vmatpush1.bf16.msra.mxu0 %v541
      %1078 = vmatprep.subr.bf16.mxu0 0
      %1079 = vmatpush1.bf16.msra.mxu0 0
      %1080 = vmatprep.subr.bf16.mxu0 0
      %1081 = vmatpush1.bf16.msra.mxu0 0
      %1082 = vmatprep.subr.bf16.mxu0 0
      %1083 = vmatpush1.bf16.msra.mxu0 0
      %1084 = vmatprep.subr.bf16.mxu0 0
      %1085 = vmatpush1.bf16.msra.mxu0 0
      %1086 = vmatprep.subr.bf16.mxu0 0
      %1087 = vmatpush1.bf16.msra.mxu0 0
      %1088 = vmatprep.subr.bf16.mxu0 0
      %1089 = vmatpush1.bf16.msra.mxu0 0
      %1090 = vmatprep.subr.bf16.mxu0 0
      %1091 = vmatpush1.bf16.msra.mxu0 0
      %1092 = vmatprep.subr.bf16.mxu0 0
      %1093 = vmatpush1.bf16.msra.mxu0 0
      %1094 = vmatprep.subr.bf16.mxu0 0
      %1095 = vmatpush1.bf16.msra.mxu0 0
      %1096 = vmatprep.subr.bf16.mxu0 0
      %1097 = vmatpush1.bf16.msra.mxu0 0
      %1098 = vmatprep.subr.bf16.mxu0 0
      %1099 = vmatpush1.bf16.msra.mxu0 0
      %1100 = vmatprep.subr.bf16.mxu0 0
      %1101 = vmatpush1.bf16.msra.mxu0 0
      %1102 = vmatprep.subr.bf16.mxu0 0
      %1103 = vmatpush1.bf16.msra.mxu0 0
      %1104 = vmatprep.subr.bf16.mxu0 0
      %1105 = vmatpush1.bf16.msra.mxu0 0
      %1106 = vmatprep.subr.bf16.mxu0 0
      %1107 = vmatpush1.bf16.msra.mxu0 0
      %1108 = vmatprep.mubr.bf16.mxu0 0
      %1109 = vmatmul.mubr.bf16.gmra.mrb[0].mxu0 %v1074
      %v1110 = vpop.f32.mrb[0].mxu0
      %v1111 = vadd.f32 0.0, %v1110
      %v1112 = vpop.f32.mrb[0].mxu0
      %v1113 = vadd.f32 0.0, %v1112
      %v1114 = vpop.f32.mrb[0].mxu0
      %v1115 = vpop.f32.mrb[0].mxu0
      %1116 = vdwg.mxu0
      %1117 = vmatprep.subr.bf16.mxu0 0
      %1118 = vmatpush1.bf16.msra.mxu0 %v547
      %1119 = vmatprep.subr.bf16.mxu0 0
      %1120 = vmatpush1.bf16.msra.mxu0 0
      %1121 = vmatprep.subr.bf16.mxu0 0
      %1122 = vmatpush1.bf16.msra.mxu0 0
      %1123 = vmatprep.subr.bf16.mxu0 0
      %1124 = vmatpush1.bf16.msra.mxu0 0
      %1125 = vmatprep.subr.bf16.mxu0 0
      %1126 = vmatpush1.bf16.msra.mxu0 0
      %1127 = vmatprep.subr.bf16.mxu0 0
      %1128 = vmatpush1.bf16.msra.mxu0 0
      %1129 = vmatprep.subr.bf16.mxu0 0
      %1130 = vmatpush1.bf16.msra.mxu0 0
      %1131 = vmatprep.subr.bf16.mxu0 0
      %1132 = vmatpush1.bf16.msra.mxu0 0
      %1133 = vmatprep.subr.bf16.mxu0 0
      %1134 = vmatpush1.bf16.msra.mxu0 0
      %1135 = vmatprep.subr.bf16.mxu0 0
      %1136 = vmatpush1.bf16.msra.mxu0 0
      %1137 = vmatprep.subr.bf16.mxu0 0
      %1138 = vmatpush1.bf16.msra.mxu0 0
      %1139 = vmatprep.subr.bf16.mxu0 0
      %1140 = vmatpush1.bf16.msra.mxu0 0
      %1141 = vmatprep.subr.bf16.mxu0 0
      %1142 = vmatpush1.bf16.msra.mxu0 0
      %1143 = vmatprep.subr.bf16.mxu0 0
      %1144 = vmatpush1.bf16.msra.mxu0 0
      %1145 = vmatprep.subr.bf16.mxu0 0
      %1146 = vmatpush1.bf16.msra.mxu0 0
      %1147 = vmatprep.subr.bf16.mxu0 0
      %1148 = vmatpush1.bf16.msra.mxu0 0
      %1149 = vmatprep.mubr.bf16.mxu0 0
      %1150 = vmatmul.mubr.bf16.gmra.mrb[0].mxu0 %v1074
      %v1151 = vpop.f32.mrb[0].mxu0
      %v1152 = vadd.f32 0.0, %v1151
      %v1153 = vpop.f32.mrb[0].mxu0
      %v1154 = vpop.f32.mrb[0].mxu0
      %v1155 = vpop.f32.mrb[0].mxu0
      %1156 = vdwg.mxu0
      %v1158 = vsel %vm208, %v1070, 0
      %1160 = vmatprep.subr.bf16.mxu0 %v434
      %1161 = vmatpush1.bf16.msra.mxu0 %v431
      %1162 = vmatprep.subr.bf16.mxu0 0
      %1163 = vmatpush1.bf16.msra.mxu0 0
      %1164 = vmatprep.subr.bf16.mxu0 0
      %1165 = vmatpush1.bf16.msra.mxu0 0
      %1166 = vmatprep.subr.bf16.mxu0 0
      %1167 = vmatpush1.bf16.msra.mxu0 0
      %1168 = vmatprep.subr.bf16.mxu0 0
      %1169 = vmatpush1.bf16.msra.mxu0 0
      %1170 = vmatprep.subr.bf16.mxu0 0
      %1171 = vmatpush1.bf16.msra.mxu0 0
      %1172 = vmatprep.subr.bf16.mxu0 0
      %1173 = vmatpush1.bf16.msra.mxu0 0
      %1174 = vmatprep.subr.bf16.mxu0 0
      %1175 = vmatpush1.bf16.msra.mxu0 0
      %1176 = vmatprep.subr.bf16.mxu0 0
      %1177 = vmatpush1.bf16.msra.mxu0 0
      %1178 = vmatprep.subr.bf16.mxu0 0
      %1179 = vmatpush1.bf16.msra.mxu0 0
      %1180 = vmatprep.subr.bf16.mxu0 0
      %1181 = vmatpush1.bf16.msra.mxu0 0
      %1182 = vmatprep.subr.bf16.mxu0 0
      %1183 = vmatpush1.bf16.msra.mxu0 0
      %1184 = vmatprep.subr.bf16.mxu0 0
      %1185 = vmatpush1.bf16.msra.mxu0 0
      %1186 = vmatprep.subr.bf16.mxu0 0
      %1187 = vmatpush1.bf16.msra.mxu0 0
      %1188 = vmatprep.subr.bf16.mxu0 0
      %1189 = vmatpush1.bf16.msra.mxu0 0
      %1190 = vmatprep.subr.bf16.mxu0 0
      %1191 = vmatpush1.bf16.msra.mxu0 0
      %1192 = vmatprep.mubr.bf16.mxu0 0
      %1193 = vmatmul.mubr.bf16.gmra.mrb[0].mxu0 %v1158
      %v1194 = vpop.f32.mrb[0].mxu0
      %v1195 = vadd.f32 %v1111, %v1194
      %v1196 = vpop.f32.mrb[0].mxu0
      %v1197 = vadd.f32 %v1113, %v1196
      %v1198 = vpop.f32.mrb[0].mxu0
      %v1199 = vpop.f32.mrb[0].mxu0
      %1200 = vdwg.mxu0
      %1201 = vmatprep.subr.bf16.mxu0 0
      %1202 = vmatpush1.bf16.msra.mxu0 %v437
      %1203 = vmatprep.subr.bf16.mxu0 0
      %1204 = vmatpush1.bf16.msra.mxu0 0
      %1205 = vmatprep.subr.bf16.mxu0 0
      %1206 = vmatpush1.bf16.msra.mxu0 0
      %1207 = vmatprep.subr.bf16.mxu0 0
      %1208 = vmatpush1.bf16.msra.mxu0 0
      %1209 = vmatprep.subr.bf16.mxu0 0
      %1210 = vmatpush1.bf16.msra.mxu0 0
      %1211 = vmatprep.subr.bf16.mxu0 0
      %1212 = vmatpush1.bf16.msra.mxu0 0
      %1213 = vmatprep.subr.bf16.mxu0 0
      %1214 = vmatpush1.bf16.msra.mxu0 0
      %1215 = vmatprep.subr.bf16.mxu0 0
      %1216 = vmatpush1.bf16.msra.mxu0 0
      %1217 = vmatprep.subr.bf16.mxu0 0
      %1218 = vmatpush1.bf16.msra.mxu0 0
      %1219 = vmatprep.subr.bf16.mxu0 0
      %1220 = vmatpush1.bf16.msra.mxu0 0
      %1221 = vmatprep.subr.bf16.mxu0 0
      %1222 = vmatpush1.bf16.msra.mxu0 0
      %1223 = vmatprep.subr.bf16.mxu0 0
      %1224 = vmatpush1.bf16.msra.mxu0 0
      %1225 = vmatprep.subr.bf16.mxu0 0
      %1226 = vmatpush1.bf16.msra.mxu0 0
      %1227 = vmatprep.subr.bf16.mxu0 0
      %1228 = vmatpush1.bf16.msra.mxu0 0
      %1229 = vmatprep.subr.bf16.mxu0 0
      %1230 = vmatpush1.bf16.msra.mxu0 0
      %1231 = vmatprep.subr.bf16.mxu0 0
      %1232 = vmatpush1.bf16.msra.mxu0 0
      %1233 = vmatprep.mubr.bf16.mxu0 0
      %1234 = vmatmul.mubr.bf16.gmra.mrb[0].mxu0 %v1158
      %v1235 = vpop.f32.mrb[0].mxu0
      %v1236 = vadd.f32 %v1152, %v1235
      %v1237 = vpop.f32.mrb[0].mxu0
      %v1238 = vpop.f32.mrb[0].mxu0
      %v1239 = vpop.f32.mrb[0].mxu0
      %1240 = vdwg.mxu0
      %s1241 = scalar_lea.vmem %s1, 10
      %v1242 = vld [vmem:[%s1241] sm:$0x1]
      %1243 = vrot.lane.b32.xlu0 %v186, 92
      %v1244 = vpop.permute.xlu0 %1243
      %1245 = vrot.lane.b32.xlu0 %v194, 92
      %v1246 = vpop.permute.xlu0 %1245
      %1247 = vrot.lane.b32.xlu0 %v193, 92
      %v1248 = vpop.permute.xlu0 %1247
      %1249 = vrot.lane.b32.xlu0 %v195, 92
      %v1250 = vpop.permute.xlu0 %1249
      %vm1251 = vcmask 752640
      %v1252 = vsel %vm1251, %v1244, %v1246
      %v1253 = vsel %vm1251, %v1246, %v1248
      %v1254 = vsel %vm1251, %v1248, %v1250
      %v1256 = vsel %vm208, %v1242, 0
      %v1259 = vsel %vm212, %v1252, 0
      %v1262 = vsel %vm212, %v1253, 0
      %v1265 = vsel %vm212, %v1254, 0
      %1267 = vmatprep.subr.bf16.mxu0 %v1262
      %1268 = vmatpush1.bf16.msra.mxu0 %v1259
      %1269 = vmatprep.subr.bf16.mxu0 0
      %1270 = vmatpush1.bf16.msra.mxu0 0
      %1271 = vmatprep.subr.bf16.mxu0 0
      %1272 = vmatpush1.bf16.msra.mxu0 0
      %1273 = vmatprep.subr.bf16.mxu0 0
      %1274 = vmatpush1.bf16.msra.mxu0 0
      %1275 = vmatprep.subr.bf16.mxu0 0
      %1276 = vmatpush1.bf16.msra.mxu0 0
      %1277 = vmatprep.subr.bf16.mxu0 0
      %1278 = vmatpush1.bf16.msra.mxu0 0
      %1279 = vmatprep.subr.bf16.mxu0 0
      %1280 = vmatpush1.bf16.msra.mxu0 0
      %1281 = vmatprep.subr.bf16.mxu0 0
      %1282 = vmatpush1.bf16.msra.mxu0 0
      %1283 = vmatprep.subr.bf16.mxu0 0
      %1284 = vmatpush1.bf16.msra.mxu0 0
      %1285 = vmatprep.subr.bf16.mxu0 0
      %1286 = vmatpush1.bf16.msra.mxu0 0
      %1287 = vmatprep.subr.bf16.mxu0 0
      %1288 = vmatpush1.bf16.msra.mxu0 0
      %1289 = vmatprep.subr.bf16.mxu0 0
      %1290 = vmatpush1.bf16.msra.mxu0 0
      %1291 = vmatprep.subr.bf16.mxu0 0
      %1292 = vmatpush1.bf16.msra.mxu0 0
      %1293 = vmatprep.subr.bf16.mxu0 0
      %1294 = vmatpush1.bf16.msra.mxu0 0
      %1295 = vmatprep.subr.bf16.mxu0 0
      %1296 = vmatpush1.bf16.msra.mxu0 0
      %1297 = vmatprep.subr.bf16.mxu0 0
      %1298 = vmatpush1.bf16.msra.mxu0 0
      %1299 = vmatprep.mubr.bf16.mxu0 0
      %1300 = vmatmul.mubr.bf16.gmra.mrb[0].mxu0 %v1256
      %v1301 = vpop.f32.mrb[0].mxu0
      %v1302 = vadd.f32 0.0, %v1301
      %v1303 = vpop.f32.mrb[0].mxu0
      %v1304 = vadd.f32 0.0, %v1303
      %v1305 = vpop.f32.mrb[0].mxu0
      %v1306 = vpop.f32.mrb[0].mxu0
      %1307 = vdwg.mxu0
      %1308 = vmatprep.subr.bf16.mxu0 0
      %1309 = vmatpush1.bf16.msra.mxu0 %v1265
      %1310 = vmatprep.subr.bf16.mxu0 0
      %1311 = vmatpush1.bf16.msra.mxu0 0
      %1312 = vmatprep.subr.bf16.mxu0 0
      %1313 = vmatpush1.bf16.msra.mxu0 0
      %1314 = vmatprep.subr.bf16.mxu0 0
      %1315 = vmatpush1.bf16.msra.mxu0 0
      %1316 = vmatprep.subr.bf16.mxu0 0
      %1317 = vmatpush1.bf16.msra.mxu0 0
      %1318 = vmatprep.subr.bf16.mxu0 0
      %1319 = vmatpush1.bf16.msra.mxu0 0
      %1320 = vmatprep.subr.bf16.mxu0 0
      %1321 = vmatpush1.bf16.msra.mxu0 0
      %1322 = vmatprep.subr.bf16.mxu0 0
      %1323 = vmatpush1.bf16.msra.mxu0 0
      %1324 = vmatprep.subr.bf16.mxu0 0
      %1325 = vmatpush1.bf16.msra.mxu0 0
      %1326 = vmatprep.subr.bf16.mxu0 0
      %1327 = vmatpush1.bf16.msra.mxu0 0
      %1328 = vmatprep.subr.bf16.mxu0 0
      %1329 = vmatpush1.bf16.msra.mxu0 0
      %1330 = vmatprep.subr.bf16.mxu0 0
      %1331 = vmatpush1.bf16.msra.mxu0 0
      %1332 = vmatprep.subr.bf16.mxu0 0
      %1333 = vmatpush1.bf16.msra.mxu0 0
      %1334 = vmatprep.subr.bf16.mxu0 0
      %1335 = vmatpush1.bf16.msra.mxu0 0
      %1336 = vmatprep.subr.bf16.mxu0 0
      %1337 = vmatpush1.bf16.msra.mxu0 0
      %1338 = vmatprep.subr.bf16.mxu0 0
      %1339 = vmatpush1.bf16.msra.mxu0 0
      %1340 = vmatprep.mubr.bf16.mxu0 0
      %1341 = vmatmul.mubr.bf16.gmra.mrb[0].mxu0 %v1256
      %v1342 = vpop.f32.mrb[0].mxu0
      %v1343 = vadd.f32 0.0, %v1342
      %v1344 = vpop.f32.mrb[0].mxu0
      %v1345 = vpop.f32.mrb[0].mxu0
      %v1346 = vpop.f32.mrb[0].mxu0
      %1347 = vdwg.mxu0
      %v1348 = vadd.f32 %v1195, %v1302
      %v1349 = vadd.f32 %v1197, %v1304
      %v1350 = vadd.f32 %v1236, %v1343
      %s1351 = scalar_lea.vmem %s1, 11
      %v1352 = vld [vmem:[%s1351] sm:$0x1]
      %1353 = vrot.lane.b32.xlu0 %v186, 91
      %v1354 = vpop.permute.xlu0 %1353
      %1355 = vrot.lane.b32.xlu0 %v194, 91
      %v1356 = vpop.permute.xlu0 %1355
      %1357 = vrot.lane.b32.xlu0 %v193, 91
      %v1358 = vpop.permute.xlu0 %1357
      %1359 = vrot.lane.b32.xlu0 %v195, 91
      %v1360 = vpop.permute.xlu0 %1359
      %vm1361 = vcmask 744448
      %v1362 = vsel %vm1361, %v1354, %v1356
      %v1363 = vsel %vm1361, %v1356, %v1358
      %v1364 = vsel %vm1361, %v1358, %v1360
      %v1366 = vsel %vm208, %v1352, 0
      %v1369 = vsel %vm212, %v1362, 0
      %v1372 = vsel %vm212, %v1363, 0
      %v1375 = vsel %vm212, %v1364, 0
      %1377 = vmatprep.subr.bf16.mxu0 %v1372
      %1378 = vmatpush1.bf16.msra.mxu0 %v1369
      %1379 = vmatprep.subr.bf16.mxu0 0
      %1380 = vmatpush1.bf16.msra.mxu0 0
      %1381 = vmatprep.subr.bf16.mxu0 0
      %1382 = vmatpush1.bf16.msra.mxu0 0
      %1383 = vmatprep.subr.bf16.mxu0 0
      %1384 = vmatpush1.bf16.msra.mxu0 0
      %1385 = vmatprep.subr.bf16.mxu0 0
      %1386 = vmatpush1.bf16.msra.mxu0 0
      %1387 = vmatprep.subr.bf16.mxu0 0
      %1388 = vmatpush1.bf16.msra.mxu0 0
      %1389 = vmatprep.subr.bf16.mxu0 0
      %1390 = vmatpush1.bf16.msra.mxu0 0
      %1391 = vmatprep.subr.bf16.mxu0 0
      %1392 = vmatpush1.bf16.msra.mxu0 0
      %1393 = vmatprep.subr.bf16.mxu0 0
      %1394 = vmatpush1.bf16.msra.mxu0 0
      %1395 = vmatprep.subr.bf16.mxu0 0
      %1396 = vmatpush1.bf16.msra.mxu0 0
      %1397 = vmatprep.subr.bf16.mxu0 0
      %1398 = vmatpush1.bf16.msra.mxu0 0
      %1399 = vmatprep.subr.bf16.mxu0 0
      %1400 = vmatpush1.bf16.msra.mxu0 0
      %1401 = vmatprep.subr.bf16.mxu0 0
      %1402 = vmatpush1.bf16.msra.mxu0 0
      %1403 = vmatprep.subr.bf16.mxu0 0
      %1404 = vmatpush1.bf16.msra.mxu0 0
      %1405 = vmatprep.subr.bf16.mxu0 0
      %1406 = vmatpush1.bf16.msra.mxu0 0
      %1407 = vmatprep.subr.bf16.mxu0 0
      %1408 = vmatpush1.bf16.msra.mxu0 0
      %1409 = vmatprep.mubr.bf16.mxu0 0
      %1410 = vmatmul.mubr.bf16.gmra.mrb[0].mxu0 %v1366
      %v1411 = vpop.f32.mrb[0].mxu0
      %v1412 = vadd.f32 0.0, %v1411
      %v1413 = vpop.f32.mrb[0].mxu0
      %v1414 = vadd.f32 0.0, %v1413
      %v1415 = vpop.f32.mrb[0].mxu0
      %v1416 = vpop.f32.mrb[0].mxu0
      %1417 = vdwg.mxu0
      %1418 = vmatprep.subr.bf16.mxu0 0
      %1419 = vmatpush1.bf16.msra.mxu0 %v1375
      %1420 = vmatprep.subr.bf16.mxu0 0
      %1421 = vmatpush1.bf16.msra.mxu0 0
      %1422 = vmatprep.subr.bf16.mxu0 0
      %1423 = vmatpush1.bf16.msra.mxu0 0
      %1424 = vmatprep.subr.bf16.mxu0 0
      %1425 = vmatpush1.bf16.msra.mxu0 0
      %1426 = vmatprep.subr.bf16.mxu0 0
      %1427 = vmatpush1.bf16.msra.mxu0 0
      %1428 = vmatprep.subr.bf16.mxu0 0
      %1429 = vmatpush1.bf16.msra.mxu0 0
      %1430 = vmatprep.subr.bf16.mxu0 0
      %1431 = vmatpush1.bf16.msra.mxu0 0
      %1432 = vmatprep.subr.bf16.mxu0 0
      %1433 = vmatpush1.bf16.msra.mxu0 0
      %1434 = vmatprep.subr.bf16.mxu0 0
      %1435 = vmatpush1.bf16.msra.mxu0 0
      %1436 = vmatprep.subr.bf16.mxu0 0
      %1437 = vmatpush1.bf16.msra.mxu0 0
      %1438 = vmatprep.subr.bf16.mxu0 0
      %1439 = vmatpush1.bf16.msra.mxu0 0
      %1440 = vmatprep.subr.bf16.mxu0 0
      %1441 = vmatpush1.bf16.msra.mxu0 0
      %1442 = vmatprep.subr.bf16.mxu0 0
      %1443 = vmatpush1.bf16.msra.mxu0 0
      %1444 = vmatprep.subr.bf16.mxu0 0
      %1445 = vmatpush1.bf16.msra.mxu0 0
      %1446 = vmatprep.subr.bf16.mxu0 0
      %1447 = vmatpush1.bf16.msra.mxu0 0
      %1448 = vmatprep.subr.bf16.mxu0 0
      %1449 = vmatpush1.bf16.msra.mxu0 0
      %1450 = vmatprep.mubr.bf16.mxu0 0
      %1451 = vmatmul.mubr.bf16.gmra.mrb[0].mxu0 %v1366
      %v1452 = vpop.f32.mrb[0].mxu0
      %v1453 = vadd.f32 0.0, %v1452
      %v1454 = vpop.f32.mrb[0].mxu0
      %v1455 = vpop.f32.mrb[0].mxu0
      %v1456 = vpop.f32.mrb[0].mxu0
      %1457 = vdwg.mxu0
      %v1458 = vadd.f32 %v1348, %v1412
      %v1459 = vadd.f32 %v1349, %v1414
      %v1460 = vadd.f32 %v1350, %v1453
      %v1461 = vadd.f32 %v1458, %v636
      %v1462 = vadd.f32 %v1459, %v636
      %v1463 = vadd.f32 %v1460, %v636
      %vm1464 = vcmp.gt.f32.partialorder %v1461, 0.0
      %vm1465 = vcmp.gt.f32.partialorder %v1462, 0.0
      %vm1466 = vcmp.gt.f32.partialorder %v1463, 0.0
      %v1467 = vmul.f32 %v1461, 0.01
      %v1468 = vmul.f32 %v1462, 0.01
      %v1469 = vmul.f32 %v1463, 0.01
      %v1470 = vsel %vm1464, %v1461, %v1467
      %v1471 = vsel %vm1465, %v1462, %v1468
      %v1472 = vsel %vm1466, %v1463, %v1469
      %v1476 = vrot.slane %v1470, 4
      %v1477 = vrot.slane %v1471, 4
      %v1478 = vrot.slane %v1472, 4
      %1482 = vst [vmem:[%s170] sm:$0x30] %v1476
      %1483 = vst [vmem:[%s170 + $0x8] sm:$0x30] %v1477
      %1484 = vst [vmem:[%s170 + $0x10] sm:$0x30] %v1478
      %s1485 = scalar_lea.vmem %s1, 12
      %v1486 = vld [vmem:[%s1485] sm:$0x1]
      %s1487 = scalar_lea.vmem %s1, 13
      %v1488 = vld [vmem:[%s1487] sm:$0x1]
      %v1490 = vsel %vm208, %v1488, 0
      %1492 = vmatprep.subr.bf16.mxu0 %v956
      %1493 = vmatpush1.bf16.msra.mxu0 %v953
      %1494 = vmatprep.subr.bf16.mxu0 0
      %1495 = vmatpush1.bf16.msra.mxu0 0
      %1496 = vmatprep.subr.bf16.mxu0 0
      %1497 = vmatpush1.bf16.msra.mxu0 0
      %1498 = vmatprep.subr.bf16.mxu0 0
      %1499 = vmatpush1.bf16.msra.mxu0 0
      %1500 = vmatprep.subr.bf16.mxu0 0
      %1501 = vmatpush1.bf16.msra.mxu0 0
      %1502 = vmatprep.subr.bf16.mxu0 0
      %1503 = vmatpush1.bf16.msra.mxu0 0
      %1504 = vmatprep.subr.bf16.mxu0 0
      %1505 = vmatpush1.bf16.msra.mxu0 0
      %1506 = vmatprep.subr.bf16.mxu0 0
      %1507 = vmatpush1.bf16.msra.mxu0 0
      %1508 = vmatprep.subr.bf16.mxu0 0
      %1509 = vmatpush1.bf16.msra.mxu0 0
      %1510 = vmatprep.subr.bf16.mxu0 0
      %1511 = vmatpush1.bf16.msra.mxu0 0
      %1512 = vmatprep.subr.bf16.mxu0 0
      %1513 = vmatpush1.bf16.msra.mxu0 0
      %1514 = vmatprep.subr.bf16.mxu0 0
      %1515 = vmatpush1.bf16.msra.mxu0 0
      %1516 = vmatprep.subr.bf16.mxu0 0
      %1517 = vmatpush1.bf16.msra.mxu0 0
      %1518 = vmatprep.subr.bf16.mxu0 0
      %1519 = vmatpush1.bf16.msra.mxu0 0
      %1520 = vmatprep.subr.bf16.mxu0 0
      %1521 = vmatpush1.bf16.msra.mxu0 0
      %1522 = vmatprep.subr.bf16.mxu0 0
      %1523 = vmatpush1.bf16.msra.mxu0 0
      %1524 = vmatprep.mubr.bf16.mxu0 0
      %1525 = vmatmul.mubr.bf16.gmra.mrb[0].mxu0 %v1490
      %v1526 = vpop.f32.mrb[0].mxu0
      %v1527 = vadd.f32 0.0, %v1526
      %v1528 = vpop.f32.mrb[0].mxu0
      %v1529 = vadd.f32 0.0, %v1528
      %v1530 = vpop.f32.mrb[0].mxu0
      %v1531 = vpop.f32.mrb[0].mxu0
      %1532 = vdwg.mxu0
      %1533 = vmatprep.subr.bf16.mxu0 0
      %1534 = vmatpush1.bf16.msra.mxu0 %v959
      %1535 = vmatprep.subr.bf16.mxu0 0
      %1536 = vmatpush1.bf16.msra.mxu0 0
      %1537 = vmatprep.subr.bf16.mxu0 0
      %1538 = vmatpush1.bf16.msra.mxu0 0
      %1539 = vmatprep.subr.bf16.mxu0 0
      %1540 = vmatpush1.bf16.msra.mxu0 0
      %1541 = vmatprep.subr.bf16.mxu0 0
      %1542 = vmatpush1.bf16.msra.mxu0 0
      %1543 = vmatprep.subr.bf16.mxu0 0
      %1544 = vmatpush1.bf16.msra.mxu0 0
      %1545 = vmatprep.subr.bf16.mxu0 0
      %1546 = vmatpush1.bf16.msra.mxu0 0
      %1547 = vmatprep.subr.bf16.mxu0 0
      %1548 = vmatpush1.bf16.msra.mxu0 0
      %1549 = vmatprep.subr.bf16.mxu0 0
      %1550 = vmatpush1.bf16.msra.mxu0 0
      %1551 = vmatprep.subr.bf16.mxu0 0
      %1552 = vmatpush1.bf16.msra.mxu0 0
      %1553 = vmatprep.subr.bf16.mxu0 0
      %1554 = vmatpush1.bf16.msra.mxu0 0
      %1555 = vmatprep.subr.bf16.mxu0 0
      %1556 = vmatpush1.bf16.msra.mxu0 0
      %1557 = vmatprep.subr.bf16.mxu0 0
      %1558 = vmatpush1.bf16.msra.mxu0 0
      %1559 = vmatprep.subr.bf16.mxu0 0
      %1560 = vmatpush1.bf16.msra.mxu0 0
      %1561 = vmatprep.subr.bf16.mxu0 0
      %1562 = vmatpush1.bf16.msra.mxu0 0
      %1563 = vmatprep.subr.bf16.mxu0 0
      %1564 = vmatpush1.bf16.msra.mxu0 0
      %1565 = vmatprep.mubr.bf16.mxu0 0
      %1566 = vmatmul.mubr.bf16.gmra.mrb[0].mxu0 %v1490
      %v1567 = vpop.f32.mrb[0].mxu0
      %v1568 = vadd.f32 0.0, %v1567
      %v1569 = vpop.f32.mrb[0].mxu0
      %v1570 = vpop.f32.mrb[0].mxu0
      %v1571 = vpop.f32.mrb[0].mxu0
      %1572 = vdwg.mxu0
      %v1574 = vsel %vm208, %v1486, 0
      %1576 = vmatprep.subr.bf16.mxu0 %v544
      %1577 = vmatpush1.bf16.msra.mxu0 %v541
      %1578 = vmatprep.subr.bf16.mxu0 0
      %1579 = vmatpush1.bf16.msra.mxu0 0
      %1580 = vmatprep.subr.bf16.mxu0 0
      %1581 = vmatpush1.bf16.msra.mxu0 0
      %1582 = vmatprep.subr.bf16.mxu0 0
      %1583 = vmatpush1.bf16.msra.mxu0 0
      %1584 = vmatprep.subr.bf16.mxu0 0
      %1585 = vmatpush1.bf16.msra.mxu0 0
      %1586 = vmatprep.subr.bf16.mxu0 0
      %1587 = vmatpush1.bf16.msra.mxu0 0
      %1588 = vmatprep.subr.bf16.mxu0 0
      %1589 = vmatpush1.bf16.msra.mxu0 0
      %1590 = vmatprep.subr.bf16.mxu0 0
      %1591 = vmatpush1.bf16.msra.mxu0 0
      %1592 = vmatprep.subr.bf16.mxu0 0
      %1593 = vmatpush1.bf16.msra.mxu0 0
      %1594 = vmatprep.subr.bf16.mxu0 0
      %1595 = vmatpush1.bf16.msra.mxu0 0
      %1596 = vmatprep.subr.bf16.mxu0 0
      %1597 = vmatpush1.bf16.msra.mxu0 0
      %1598 = vmatprep.subr.bf16.mxu0 0
      %1599 = vmatpush1.bf16.msra.mxu0 0
      %1600 = vmatprep.subr.bf16.mxu0 0
      %1601 = vmatpush1.bf16.msra.mxu0 0
      %1602 = vmatprep.subr.bf16.mxu0 0
      %1603 = vmatpush1.bf16.msra.mxu0 0
      %1604 = vmatprep.subr.bf16.mxu0 0
      %1605 = vmatpush1.bf16.msra.mxu0 0
      %1606 = vmatprep.subr.bf16.mxu0 0
      %1607 = vmatpush1.bf16.msra.mxu0 0
      %1608 = vmatprep.mubr.bf16.mxu0 0
      %1609 = vmatmul.mubr.bf16.gmra.mrb[0].mxu0 %v1574
      %v1610 = vpop.f32.mrb[0].mxu0
      %v1611 = vadd.f32 %v1527, %v1610
      %v1612 = vpop.f32.mrb[0].mxu0
      %v1613 = vadd.f32 %v1529, %v1612
      %v1614 = vpop.f32.mrb[0].mxu0
      %v1615 = vpop.f32.mrb[0].mxu0
      %1616 = vdwg.mxu0
      %1617 = vmatprep.subr.bf16.mxu0 0
      %1618 = vmatpush1.bf16.msra.mxu0 %v547
      %1619 = vmatprep.subr.bf16.mxu0 0
      %1620 = vmatpush1.bf16.msra.mxu0 0
      %1621 = vmatprep.subr.bf16.mxu0 0
      %1622 = vmatpush1.bf16.msra.mxu0 0
      %1623 = vmatprep.subr.bf16.mxu0 0
      %1624 = vmatpush1.bf16.msra.mxu0 0
      %1625 = vmatprep.subr.bf16.mxu0 0
      %1626 = vmatpush1.bf16.msra.mxu0 0
      %1627 = vmatprep.subr.bf16.mxu0 0
      %1628 = vmatpush1.bf16.msra.mxu0 0
      %1629 = vmatprep.subr.bf16.mxu0 0
      %1630 = vmatpush1.bf16.msra.mxu0 0
      %1631 = vmatprep.subr.bf16.mxu0 0
      %1632 = vmatpush1.bf16.msra.mxu0 0
      %1633 = vmatprep.subr.bf16.mxu0 0
      %1634 = vmatpush1.bf16.msra.mxu0 0
      %1635 = vmatprep.subr.bf16.mxu0 0
      %1636 = vmatpush1.bf16.msra.mxu0 0
      %1637 = vmatprep.subr.bf16.mxu0 0
      %1638 = vmatpush1.bf16.msra.mxu0 0
      %1639 = vmatprep.subr.bf16.mxu0 0
      %1640 = vmatpush1.bf16.msra.mxu0 0
      %1641 = vmatprep.subr.bf16.mxu0 0
      %1642 = vmatpush1.bf16.msra.mxu0 0
      %1643 = vmatprep.subr.bf16.mxu0 0
      %1644 = vmatpush1.bf16.msra.mxu0 0
      %1645 = vmatprep.subr.bf16.mxu0 0
      %1646 = vmatpush1.bf16.msra.mxu0 0
      %1647 = vmatprep.subr.bf16.mxu0 0
      %1648 = vmatpush1.bf16.msra.mxu0 0
      %1649 = vmatprep.mubr.bf16.mxu0 0
      %1650 = vmatmul.mubr.bf16.gmra.mrb[0].mxu0 %v1574
      %v1651 = vpop.f32.mrb[0].mxu0
      %v1652 = vadd.f32 %v1568, %v1651
      %v1653 = vpop.f32.mrb[0].mxu0
      %v1654 = vpop.f32.mrb[0].mxu0
      %v1655 = vpop.f32.mrb[0].mxu0
      %1656 = vdwg.mxu0
      %s1657 = scalar_lea.vmem %s1, 14
      %v1658 = vld [vmem:[%s1657] sm:$0x1]
      %v1660 = vsel %vm208, %v1658, 0
      %1662 = vmatprep.subr.bf16.mxu0 %v1372
      %1663 = vmatpush1.bf16.msra.mxu0 %v1369
      %1664 = vmatprep.subr.bf16.mxu0 0
      %1665 = vmatpush1.bf16.msra.mxu0 0
      %1666 = vmatprep.subr.bf16.mxu0 0
      %1667 = vmatpush1.bf16.msra.mxu0 0
      %1668 = vmatprep.subr.bf16.mxu0 0
      %1669 = vmatpush1.bf16.msra.mxu0 0
      %1670 = vmatprep.subr.bf16.mxu0 0
      %1671 = vmatpush1.bf16.msra.mxu0 0
      %1672 = vmatprep.subr.bf16.mxu0 0
      %1673 = vmatpush1.bf16.msra.mxu0 0
      %1674 = vmatprep.subr.bf16.mxu0 0
      %1675 = vmatpush1.bf16.msra.mxu0 0
      %1676 = vmatprep.subr.bf16.mxu0 0
      %1677 = vmatpush1.bf16.msra.mxu0 0
      %1678 = vmatprep.subr.bf16.mxu0 0
      %1679 = vmatpush1.bf16.msra.mxu0 0
      %1680 = vmatprep.subr.bf16.mxu0 0
      %1681 = vmatpush1.bf16.msra.mxu0 0
      %1682 = vmatprep.subr.bf16.mxu0 0
      %1683 = vmatpush1.bf16.msra.mxu0 0
      %1684 = vmatprep.subr.bf16.mxu0 0
      %1685 = vmatpush1.bf16.msra.mxu0 0
      %1686 = vmatprep.subr.bf16.mxu0 0
      %1687 = vmatpush1.bf16.msra.mxu0 0
      %1688 = vmatprep.subr.bf16.mxu0 0
      %1689 = vmatpush1.bf16.msra.mxu0 0
      %1690 = vmatprep.subr.bf16.mxu0 0
      %1691 = vmatpush1.bf16.msra.mxu0 0
      %1692 = vmatprep.subr.bf16.mxu0 0
      %1693 = vmatpush1.bf16.msra.mxu0 0
      %1694 = vmatprep.mubr.bf16.mxu0 0
      %1695 = vmatmul.mubr.bf16.gmra.mrb[0].mxu0 %v1660
      %v1696 = vpop.f32.mrb[0].mxu0
      %v1697 = vadd.f32 0.0, %v1696
      %v1698 = vpop.f32.mrb[0].mxu0
      %v1699 = vadd.f32 0.0, %v1698
      %v1700 = vpop.f32.mrb[0].mxu0
      %v1701 = vpop.f32.mrb[0].mxu0
      %1702 = vdwg.mxu0
      %1703 = vmatprep.subr.bf16.mxu0 0
      %1704 = vmatpush1.bf16.msra.mxu0 %v1375
      %1705 = vmatprep.subr.bf16.mxu0 0
      %1706 = vmatpush1.bf16.msra.mxu0 0
      %1707 = vmatprep.subr.bf16.mxu0 0
      %1708 = vmatpush1.bf16.msra.mxu0 0
      %1709 = vmatprep.subr.bf16.mxu0 0
      %1710 = vmatpush1.bf16.msra.mxu0 0
      %1711 = vmatprep.subr.bf16.mxu0 0
      %1712 = vmatpush1.bf16.msra.mxu0 0
      %1713 = vmatprep.subr.bf16.mxu0 0
      %1714 = vmatpush1.bf16.msra.mxu0 0
      %1715 = vmatprep.subr.bf16.mxu0 0
      %1716 = vmatpush1.bf16.msra.mxu0 0
      %1717 = vmatprep.subr.bf16.mxu0 0
      %1718 = vmatpush1.bf16.msra.mxu0 0
      %1719 = vmatprep.subr.bf16.mxu0 0
      %1720 = vmatpush1.bf16.msra.mxu0 0
      %1721 = vmatprep.subr.bf16.mxu0 0
      %1722 = vmatpush1.bf16.msra.mxu0 0
      %1723 = vmatprep.subr.bf16.mxu0 0
      %1724 = vmatpush1.bf16.msra.mxu0 0
      %1725 = vmatprep.subr.bf16.mxu0 0
      %1726 = vmatpush1.bf16.msra.mxu0 0
      %1727 = vmatprep.subr.bf16.mxu0 0
      %1728 = vmatpush1.bf16.msra.mxu0 0
      %1729 = vmatprep.subr.bf16.mxu0 0
      %1730 = vmatpush1.bf16.msra.mxu0 0
      %1731 = vmatprep.subr.bf16.mxu0 0
      %1732 = vmatpush1.bf16.msra.mxu0 0
      %1733 = vmatprep.subr.bf16.mxu0 0
      %1734 = vmatpush1.bf16.msra.mxu0 0
      %1735 = vmatprep.mubr.bf16.mxu0 0
      %1736 = vmatmul.mubr.bf16.gmra.mrb[0].mxu0 %v1660
      %v1737 = vpop.f32.mrb[0].mxu0
      %v1738 = vadd.f32 0.0, %v1737
      %v1739 = vpop.f32.mrb[0].mxu0
      %v1740 = vpop.f32.mrb[0].mxu0
      %v1741 = vpop.f32.mrb[0].mxu0
      %1742 = vdwg.mxu0
      %v1743 = vadd.f32 %v1611, %v1697
      %v1744 = vadd.f32 %v1613, %v1699
      %v1745 = vadd.f32 %v1652, %v1738
      %s1746 = scalar_lea.vmem %s1, 15
      %v1747 = vld [vmem:[%s1746] sm:$0x1]
      %1748 = vrot.lane.b32.xlu0 %v186, 90
      %v1749 = vpop.permute.xlu0 %1748
      %1750 = vrot.lane.b32.xlu0 %v194, 90
      %v1751 = vpop.permute.xlu0 %1750
      %1752 = vrot.lane.b32.xlu0 %v193, 90
      %v1753 = vpop.permute.xlu0 %1752
      %1754 = vrot.lane.b32.xlu0 %v195, 90
      %v1755 = vpop.permute.xlu0 %1754
      %vm1756 = vcmask 736256
      %v1757 = vsel %vm1756, %v1749, %v1751
      %v1758 = vsel %vm1756, %v1751, %v1753
      %v1759 = vsel %vm1756, %v1753, %v1755
      %v1761 = vsel %vm208, %v1747, 0
      %v1764 = vsel %vm212, %v1757, 0
      %v1767 = vsel %vm212, %v1758, 0
      %v1770 = vsel %vm212, %v1759, 0
      %1772 = vmatprep.subr.bf16.mxu0 %v1767
      %1773 = vmatpush1.bf16.msra.mxu0 %v1764
      %1774 = vmatprep.subr.bf16.mxu0 0
      %1775 = vmatpush1.bf16.msra.mxu0 0
      %1776 = vmatprep.subr.bf16.mxu0 0
      %1777 = vmatpush1.bf16.msra.mxu0 0
      %1778 = vmatprep.subr.bf16.mxu0 0
      %1779 = vmatpush1.bf16.msra.mxu0 0
      %1780 = vmatprep.subr.bf16.mxu0 0
      %1781 = vmatpush1.bf16.msra.mxu0 0
      %1782 = vmatprep.subr.bf16.mxu0 0
      %1783 = vmatpush1.bf16.msra.mxu0 0
      %1784 = vmatprep.subr.bf16.mxu0 0
      %1785 = vmatpush1.bf16.msra.mxu0 0
      %1786 = vmatprep.subr.bf16.mxu0 0
      %1787 = vmatpush1.bf16.msra.mxu0 0
      %1788 = vmatprep.subr.bf16.mxu0 0
      %1789 = vmatpush1.bf16.msra.mxu0 0
      %1790 = vmatprep.subr.bf16.mxu0 0
      %1791 = vmatpush1.bf16.msra.mxu0 0
      %1792 = vmatprep.subr.bf16.mxu0 0
      %1793 = vmatpush1.bf16.msra.mxu0 0
      %1794 = vmatprep.subr.bf16.mxu0 0
      %1795 = vmatpush1.bf16.msra.mxu0 0
      %1796 = vmatprep.subr.bf16.mxu0 0
      %1797 = vmatpush1.bf16.msra.mxu0 0
      %1798 = vmatprep.subr.bf16.mxu0 0
      %1799 = vmatpush1.bf16.msra.mxu0 0
      %1800 = vmatprep.subr.bf16.mxu0 0
      %1801 = vmatpush1.bf16.msra.mxu0 0
      %1802 = vmatprep.subr.bf16.mxu0 0
      %1803 = vmatpush1.bf16.msra.mxu0 0
      %1804 = vmatprep.mubr.bf16.mxu0 0
      %1805 = vmatmul.mubr.bf16.gmra.mrb[0].mxu0 %v1761
      %v1806 = vpop.f32.mrb[0].mxu0
      %v1807 = vadd.f32 0.0, %v1806
      %v1808 = vpop.f32.mrb[0].mxu0
      %v1809 = vadd.f32 0.0, %v1808
      %v1810 = vpop.f32.mrb[0].mxu0
      %v1811 = vpop.f32.mrb[0].mxu0
      %1812 = vdwg.mxu0
      %1813 = vmatprep.subr.bf16.mxu0 0
      %1814 = vmatpush1.bf16.msra.mxu0 %v1770
      %1815 = vmatprep.subr.bf16.mxu0 0
      %1816 = vmatpush1.bf16.msra.mxu0 0
      %1817 = vmatprep.subr.bf16.mxu0 0
      %1818 = vmatpush1.bf16.msra.mxu0 0
      %1819 = vmatprep.subr.bf16.mxu0 0
      %1820 = vmatpush1.bf16.msra.mxu0 0
      %1821 = vmatprep.subr.bf16.mxu0 0
      %1822 = vmatpush1.bf16.msra.mxu0 0
      %1823 = vmatprep.subr.bf16.mxu0 0
      %1824 = vmatpush1.bf16.msra.mxu0 0
      %1825 = vmatprep.subr.bf16.mxu0 0
      %1826 = vmatpush1.bf16.msra.mxu0 0
      %1827 = vmatprep.subr.bf16.mxu0 0
      %1828 = vmatpush1.bf16.msra.mxu0 0
      %1829 = vmatprep.subr.bf16.mxu0 0
      %1830 = vmatpush1.bf16.msra.mxu0 0
      %1831 = vmatprep.subr.bf16.mxu0 0
      %1832 = vmatpush1.bf16.msra.mxu0 0
      %1833 = vmatprep.subr.bf16.mxu0 0
      %1834 = vmatpush1.bf16.msra.mxu0 0
      %1835 = vmatprep.subr.bf16.mxu0 0
      %1836 = vmatpush1.bf16.msra.mxu0 0
      %1837 = vmatprep.subr.bf16.mxu0 0
      %1838 = vmatpush1.bf16.msra.mxu0 0
      %1839 = vmatprep.subr.bf16.mxu0 0
      %1840 = vmatpush1.bf16.msra.mxu0 0
      %1841 = vmatprep.subr.bf16.mxu0 0
      %1842 = vmatpush1.bf16.msra.mxu0 0
      %1843 = vmatprep.subr.bf16.mxu0 0
      %1844 = vmatpush1.bf16.msra.mxu0 0
      %1845 = vmatprep.mubr.bf16.mxu0 0
      %1846 = vmatmul.mubr.bf16.gmra.mrb[0].mxu0 %v1761
      %v1847 = vpop.f32.mrb[0].mxu0
      %v1848 = vadd.f32 0.0, %v1847
      %v1849 = vpop.f32.mrb[0].mxu0
      %v1850 = vpop.f32.mrb[0].mxu0
      %v1851 = vpop.f32.mrb[0].mxu0
      %1852 = vdwg.mxu0
      %v1853 = vadd.f32 %v1743, %v1807
      %v1854 = vadd.f32 %v1744, %v1809
      %v1855 = vadd.f32 %v1745, %v1848
      %v1856 = vadd.f32 %v1853, %v636
      %v1857 = vadd.f32 %v1854, %v636
      %v1858 = vadd.f32 %v1855, %v636
      %vm1859 = vcmp.gt.f32.partialorder %v1856, 0.0
      %vm1860 = vcmp.gt.f32.partialorder %v1857, 0.0
      %vm1861 = vcmp.gt.f32.partialorder %v1858, 0.0
      %v1862 = vmul.f32 %v1856, 0.01
      %v1863 = vmul.f32 %v1857, 0.01
      %v1864 = vmul.f32 %v1858, 0.01
      %v1865 = vsel %vm1859, %v1856, %v1862
      %v1866 = vsel %vm1860, %v1857, %v1863
      %v1867 = vsel %vm1861, %v1858, %v1864
      %v1871 = vrot.slane %v1865, 2
      %v1872 = vrot.slane %v1866, 2
      %v1873 = vrot.slane %v1867, 2
      %1877 = vst [vmem:[%s170] sm:$0xc0] %v1871
      %1878 = vst [vmem:[%s170 + $0x8] sm:$0xc0] %v1872
      %1879 = vst [vmem:[%s170 + $0x10] sm:$0xc0] %v1873
      %p1880 = scmp.lt.s32.totalorder %s14, 1
      %s1881 = scalar_select %p1880, %s14, 1
      %s1882 = smul.addr %s1881, 3
      %s1883 = smul.addr %s1882, 8
      %s1884 = scalar_lea.vmem %s3, %s1883
      // Predicated region
      $region33: #{decoder_block_forward.3} parent=31 // pred_check
        %p1885 = pneg %p100
      $region34: #{decoder_block_forward.3} parent=31 // pred_check_branch
        %1887 = sbr.rel (%p1885) target = $region36
      $region35: #{decoder_block_forward.3} parent=31 // pred_region
        _
      $region36: #{decoder_block_forward.3} parent=31 // pred_fallthru
        _
    $region32: #{decoder_block_forward.3} parent=5 // pred_fallthru
      _
    %p1888 = scmp.le.s32.totalorder 2, %s9
    // Predicated region
    $region37: #{decoder_block_forward.3} parent=5 // pred_check
      %p1889 = pneg %p1888
    $region38: #{decoder_block_forward.3} parent=5 // pred_check_branch
      %1891 = sbr.rel (%p1889) target = $region40
    $region39: #{decoder_block_forward.3} parent=5 // pred_region
      %s1892 = ssub.s32 %s9, 2
      // Predicated region
      $region41: #{decoder_block_forward.3} parent=39 // pred_check
        %p1893 = pneg %p106
      $region42: #{decoder_block_forward.3} parent=39 // pred_check_branch
        %1895 = sbr.rel (%p1893) target = $region44
      $region43: #{decoder_block_forward.3} parent=39 // pred_region
        %p1896 = scmp.lt.s32.totalorder %s15, 1
        %s1897 = scalar_select %p1896, %s15, 1
        %s1898 = smul.addr %s1897, 3
        %s1899 = smul.addr %s1898, 8
        %s1900 = scalar_lea.vmem %s3, %s1899
      $region44: #{decoder_block_forward.3} parent=39 // pred_fallthru
        _
    $region40: #{decoder_block_forward.3} parent=5 // pred_fallthru
      _
  $region6: #{decoder_block_forward.3} parent=0 // loop_footer
    %s13 = sadd.s32 1, %s9
  $region7: #{decoder_block_forward.3} parent=0 // loop_footer_branch
    %8 = sbr.rel target = $region3
  $region8: #{decoder_block_forward.3} parent=0 // loop_exit
    _

</llo_original>
